<compile_context>
chip_gen: v7x
topology: tpu7x:2x2x1
jax: 0.10.0
libtpu: 0.0.40
codegen_flags: <defaults>
</compile_context>

<pallas_src>
import functools
import math

import jax
import jax.numpy as jnp
from jax.experimental import pallas as pl
from jax.experimental.pallas import tpu as pltpu


def _round_up(x, m):
    return (x + m - 1) // m * m


def _vmem_ceiling_bytes():
    """Physical per-core VMEM minus headroom (v5e/v6e: 128 MiB, v7x: 64 MiB)."""
    try:
        cap = int(pltpu.get_tpu_info().vmem_capacity_bytes)
    except Exception:
        cap = 64 << 20  # conservative fallback, sized for v7x
    return max(cap - (12 << 20), 16 << 20)


def _pick_tile_rows(b_in, b_aux, d, h, c_pad, vmem_budget):
    """Largest batch tile whose footprint (single-buffered resident weights +
    double-buffered batch tiles + in-flight f32 intermediates) fits the budget."""
    resident = d * h * 2 + h * c_pad * 2 + (h + c_pad) * 4 + 2 * 8 * 128 * 4
    per_row = (2 * d * 2            # x tile, bf16, double-buffered
               + 2 * c_pad * 4      # logits output tile, f32, double-buffered
               + h * 4 + c_pad * 4  # in-flight f32 intermediates (hidden + logits)
               + 2 * 4)             # int32 labels tile, double-buffered
    cap = (vmem_budget - resident) // max(per_row, 1)
    cap = max(16, min(1024, cap))
    cap = cap // 128 * 128 if cap >= 128 else cap // 16 * 16   # MXU-friendly multiples
    need = max(b_in, b_aux, 1)
    need = _round_up(need, 128) if need >= 128 else _round_up(need, 16)
    return min(cap, need)
    # TODO(synk): for very large flattened D (e.g. 150528) the resident bf16 w1 alone can
    # exceed v7x's 64 MiB; add a trailing "arbitrary" K grid axis tiling w1 as (tk, H)
    # blocks with an f32 accumulator for the hidden activations.


def _msp_trainer_kernel(y_ref, x_ref, w1_ref, b1_ref, w2_ref, b2_ref,
                        logits_ref, part_ref, *,
                        n_in_tiles, tile_rows, b_in, b_aux, num_classes):
    i = pl.program_id(0)
    is_in = i < n_in_tiles

    # ---- model: Flatten -> Linear(D, H) -> ReLU (bf16 operands, f32 MXU accumulate).
    # Result stays in registers: no VMEM scratch round-trip, no duplicated matmul paths.
    hid = jnp.maximum(
        jnp.dot(x_ref[...], w1_ref[...], preferred_element_type=jnp.float32)
        + b1_ref[...], 0.0)

    # ---- classifier: Linear(H, C_pad) ------------------------------------------------
    logits = jnp.dot(hid.astype(jnp.bfloat16), w2_ref[...],
                     preferred_element_type=jnp.float32) + b2_ref[...]   # (TM, C_pad) f32

    c_pad = logits.shape[-1]
    cls_iota = jax.lax.broadcasted_iota(jnp.int32, (tile_rows, c_pad), 1)
    cls_valid = cls_iota < num_classes
    logits_m = jnp.where(cls_valid, logits, jnp.float32(-1e30))          # mask padded classes
    m = jnp.max(logits_m, axis=-1, keepdims=True)
    lse = m + jnp.log(jnp.sum(jnp.exp(logits_m - m), axis=-1, keepdims=True))

    # ---- valid-row mask (padded tail rows of either segment excluded from all sums) --
    row_start = jnp.where(is_in, i, i - n_in_tiles) * tile_rows
    seg_rows = jnp.where(is_in, b_in, b_aux)
    row_iota = jax.lax.broadcasted_iota(jnp.int32, (tile_rows, 1), 0)
    row_mask = (row_iota < (seg_rows - row_start)).astype(jnp.float32)

    # ---- in-distribution partials: cross-entropy + accuracy ---------------------------
    y_tile = y_ref[...]                                                  # (TM, 1) int32
    tgt = jnp.sum(jnp.where(cls_iota == y_tile, logits, 0.0), axis=-1, keepdims=True)
    ce_rows = lse - tgt
    pred = jnp.min(jnp.where(logits_m == m, cls_iota, c_pad),            # first-index argmax
                   axis=-1, keepdims=True)
    correct = (pred == y_tile).astype(jnp.float32)

    # ---- auxiliary (OOD) partial: MSP term per row = lse - mean(logits) ---------------
    mean_row = jnp.sum(jnp.where(cls_valid, logits, 0.0), axis=-1,
                       keepdims=True) * jnp.float32(1.0 / num_classes)
    ood_rows = lse - mean_row

    in_f = is_in.astype(jnp.float32)
    ce_sum = jnp.sum(row_mask * ce_rows) * in_f
    corr_sum = jnp.sum(row_mask * correct) * in_f
    ood_sum = jnp.sum(row_mask * ood_rows) * (1.0 - in_f)

    # ---- stores: every grid step owns its own output blocks (no cross-step deps), so
    # the batch-tile axis can be megacore-parallel. Both stores are lane-dense.
    logits_ref[...] = logits
    sub = jax.lax.broadcasted_iota(jnp.int32, (8, 128), 0)
    lane = jax.lax.broadcasted_iota(jnp.int32, (8, 128), 1)
    part_ref[...] = jnp.where((sub == 0) & (lane == 0), ce_sum,
                    jnp.where((sub == 0) & (lane == 1), corr_sum,
                    jnp.where((sub == 0) & (lane == 2), ood_sum,
                              jnp.float32(0.0))))


def msp_trainer_forward(x, y, x_aux, params, *, num_classes, ood_weight=0.5):
    """Returns (loss, info_dict) matching MSPTrainer.forward semantics (use_ood=True)."""
    w1, b1, w2, b2 = params
    b_in = int(x.shape[0])
    b_aux = int(x_aux.shape[0])
    assert b_aux > 0, "use_ood=True requires a non-empty x_aux"
    d = math.prod(int(s) for s in x.shape[1:])
    hdim = int(w1.shape[1])
    c_pad = _round_up(num_classes, 128)

    vmem_ceiling = _vmem_ceiling_bytes()
    tile_rows = _pick_tile_rows(b_in, b_aux, d, hdim, c_pad,
                                vmem_budget=int(vmem_ceiling * 0.7))
    n_in_tiles = -(-b_in // tile_rows)
    n_aux_tiles = -(-b_aux // tile_rows)
    num_tiles = n_in_tiles + n_aux_tiles
    rows_in = n_in_tiles * tile_rows
    rows_aux = n_aux_tiles * tile_rows

    # One concatenated, tile-padded bf16 activation array: every row is DMA'd exactly
    # once and only one activation tile is resident per grid step.
    # TODO(synk): feed f32 x and cast after the tile DMA (or use allow_input_fusion) to
    # avoid this wrapper-side HBM round trip in bandwidth-bound configurations.
    x_in = jnp.pad(x.reshape(b_in, d).astype(jnp.bfloat16),
                   ((0, rows_in - b_in), (0, 0)))
    x_out = jnp.pad(x_aux.reshape(b_aux, d).astype(jnp.bfloat16),
                    ((0, rows_aux - b_aux), (0, 0)))
    x_all = jnp.concatenate([x_in, x_out], axis=0)
    y_pad = jnp.pad(y.astype(jnp.int32),
                    (0, num_tiles * tile_rows - b_in)).reshape(-1, 1)

    w1b = w1.astype(jnp.bfloat16)
    b1f = b1.reshape(1, hdim).astype(jnp.float32)
    w2b = jnp.pad(w2.astype(jnp.bfloat16), ((0, 0), (0, c_pad - num_classes)))
    b2f = jnp.pad(b2.reshape(1, num_classes).astype(jnp.float32),
                  ((0, 0), (0, c_pad - num_classes)))

    kernel = functools.partial(
        _msp_trainer_kernel,
        n_in_tiles=n_in_tiles, tile_rows=tile_rows,
        b_in=b_in, b_aux=b_aux, num_classes=num_classes)

    # Per-chip VMEM limit (estimate + headroom, clamped to physical capacity).
    resident = d * hdim * 2 + hdim * c_pad * 2 + (hdim + c_pad) * 4 + 2 * 8 * 128 * 4
    per_step = tile_rows * (2 * d * 2 + 2 * c_pad * 4 + hdim * 4 + c_pad * 4 + 2 * 4)
    vmem_limit = int(min(max(2 * (resident + per_step), 16 << 20), vmem_ceiling))

    def call(single_buffer_weights):
        def wspec(shape):
            idx = lambda i: tuple(0 for _ in shape)
            if single_buffer_weights:
                # Constant index_map -> fetched once; don't waste VMEM on 2 buffers.
                return pl.BlockSpec(shape, idx, pipeline_mode=pl.Buffered(1))
            return pl.BlockSpec(shape, idx)

        grid_spec = pltpu.PrefetchScalarGridSpec(
            num_scalar_prefetch=0,
            grid=(num_tiles,),
            in_specs=[
                pl.BlockSpec((tile_rows, 1), lambda i: (i, 0)),      # int32 labels
                pl.BlockSpec((tile_rows, d), lambda i: (i, 0)),      # x (in ++ aux) tiles
                wspec((d, hdim)),                                    # w1 (resident)
                wspec((1, hdim)),                                    # b1
                wspec((hdim, c_pad)),                                # w2 (resident)
                wspec((1, c_pad)),                                   # b2
            ],
            out_specs=(
                pl.BlockSpec((tile_rows, c_pad), lambda i: (i, 0)),  # lane-dense logits
                pl.BlockSpec((8, 128), lambda i: (i, 0)),            # per-tile partial sums
            ),
        )
        return pl.pallas_call(
            kernel,
            out_shape=(
                jax.ShapeDtypeStruct((num_tiles * tile_rows, c_pad), jnp.float32),
                jax.ShapeDtypeStruct((num_tiles * 8, 128), jnp.float32),
            ),
            grid_spec=grid_spec,
            compiler_params=pltpu.CompilerParams(
                # All grid steps are independent (per-tile partial outputs), so the
                # batch-tile axis is parallel -> uses both TCs on v7x megacore.
                dimension_semantics=("parallel",),
                vmem_limit_bytes=vmem_limit,
            ),
        )(y_pad, x_all, w1b, b1f, w2b, b2f)

    try:
        logits_pad, partials = call(single_buffer_weights=True)
    except Exception:
        # Fallback for JAX builds without BlockSpec(pipeline_mode=...) support.
        logits_pad, partials = call(single_buffer_weights=False)

    # Tiny final reduction / normalization in the wrapper (one XLA reduce over num_tiles).
    p = partials.reshape(num_tiles, 8, 128)
    in_loss = jnp.sum(p[:, 0, 0]) / jnp.float32(b_in)
    acc = jnp.sum(p[:, 0, 1]) / jnp.float32(b_in)
    ood_loss = jnp.sum(p[:, 0, 2]) / jnp.float32(b_aux)
    loss = in_loss + jnp.float32(ood_weight) * ood_loss
    logits_in = logits_pad[:b_in, :num_classes]

    info_dict = {
        "classifier/acc": acc,
        "classifier/in_loss": in_loss,
        "classifier/in_logits": logits_in,
        "general/loss": loss,
        "out/ood_loss": ood_loss,
        # ood_dict from MSPTrainer.ood_loss is empty -> no 'energies/*' entries
    }
    return loss, info_dict
    # TODO(synk): optimizer step / backward (Trainer.step) is training glue, not part of forward.


def _reference_forward(x, y, x_aux, params, *, num_classes, ood_weight=0.5):
    """Pure-JAX reference with the same bf16-operand / f32-accumulate matmuls."""
    w1, b1, w2, b2 = params
    xs = jnp.concatenate([x, x_aux], axis=0).reshape(x.shape[0] + x_aux.shape[0], -1)
    h = jnp.maximum(
        jnp.dot(xs.astype(jnp.bfloat16), w1.astype(jnp.bfloat16),
                preferred_element_type=jnp.float32) + b1, 0.0)
    logits = jnp.dot(h.astype(jnp.bfloat16), w2.astype(jnp.bfloat16),
                     preferred_element_type=jnp.float32) + b2
    b_in = x.shape[0]
    li, lo = logits[:b_in], logits[b_in:]
    lse_in = jax.nn.logsumexp(li, axis=-1)
    in_loss = jnp.mean(lse_in - li[jnp.arange(b_in), y])
    acc = jnp.mean((jnp.argmax(li, axis=-1) == y).astype(jnp.float32))
    ood_loss = -jnp.mean(jnp.mean(lo, axis=-1) - jax.nn.logsumexp(lo, axis=-1))
    return in_loss + ood_weight * ood_loss, in_loss, ood_loss, acc, li


if __name__ == "__main__":
    # Small shapes consistent with the module's forward.
    B_IN, B_AUX = 2, 2
    C_IN, HGT, WID = 4, 16, 16
    D = C_IN * HGT * WID          # 1024
    HID = 128
    NUM_CLASSES = 8
    OOD_WEIGHT = 0.5

    key = jax.random.PRNGKey(0)
    kx, kaux, ky, kw1, kw2 = jax.random.split(key, 5)

    x = jax.random.normal(kx, (B_IN, C_IN, HGT, WID), jnp.float32)
    x_aux = jax.random.normal(kaux, (B_AUX, C_IN, HGT, WID), jnp.float32)
    y = jax.random.randint(ky, (B_IN,), 0, NUM_CLASSES)

    # Deterministic parameter init (scaled Gaussians, zero biases).
    w1 = jax.random.normal(kw1, (D, HID), jnp.float32) / jnp.sqrt(jnp.float32(D))
    b1 = jnp.zeros((1, HID), jnp.float32)
    w2 = jax.random.normal(kw2, (HID, NUM_CLASSES), jnp.float32) / jnp.sqrt(jnp.float32(HID))
    b2 = jnp.zeros((1, NUM_CLASSES), jnp.float32)
    params = (w1, b1, w2, b2)

    loss, info = msp_trainer_forward(
        x, y, x_aux, params, num_classes=NUM_CLASSES, ood_weight=OOD_WEIGHT)
    jax.block_until_ready((loss, info))

    # Correctness check against a pure-JAX reference (same bf16-operand matmuls).
    rloss, rin, rood, racc, rlogits_in = _reference_forward(
        x, y, x_aux, params, num_classes=NUM_CLASSES, ood_weight=OOD_WEIGHT)
    assert jnp.allclose(loss, rloss, rtol=2e-3, atol=2e-3)
    assert jnp.allclose(info["classifier/in_loss"], rin, rtol=2e-3, atol=2e-3)
    assert jnp.allclose(info["out/ood_loss"], rood, rtol=2e-3, atol=2e-3)
    assert jnp.allclose(info["classifier/acc"], racc, rtol=2e-3, atol=2e-3)
    assert jnp.allclose(info["classifier/in_logits"], rlogits_in, rtol=2e-3, atol=2e-3)

    print("KERNEL_OK")
</pallas_src>

<mosaic_0001>
module attributes {stable_mosaic.version = 11 : i64} {
  func.func @_msp_trainer_kernel(%arg0: i32, %arg1: memref<16x1xi32, #tpu.memory_space<vmem>>, %arg2: memref<16x1024xbf16, #tpu.memory_space<vmem>>, %arg3: memref<1024x128xbf16, #tpu.memory_space<vmem>>, %arg4: memref<1x128xf32, #tpu.memory_space<vmem>>, %arg5: memref<128x128xbf16, #tpu.memory_space<vmem>>, %arg6: memref<1x128xf32, #tpu.memory_space<vmem>>, %arg7: memref<16x128xf32, #tpu.memory_space<vmem>>, %arg8: memref<8x128xf32, #tpu.memory_space<vmem>>) attributes {dimension_semantics = [#tpu.dimension_semantics<parallel>], iteration_bounds = array<i64: 2>, scalar_prefetch = 0 : i64, scratch_operands = 0 : i64, tpu.core_type = #tpu.core_type<tc>, window_params = [{transform_indices = @transform_0, window_bounds = array<i64: 16, 1>}, {transform_indices = @transform_1, window_bounds = array<i64: 16, 1024>}, {pipeline_mode = #tpu.pipeline_mode<synchronous>, transform_indices = @transform_2, window_bounds = array<i64: 1024, 128>}, {pipeline_mode = #tpu.pipeline_mode<synchronous>, transform_indices = @transform_3, window_bounds = array<i64: 1, 128>}, {pipeline_mode = #tpu.pipeline_mode<synchronous>, transform_indices = @transform_4, window_bounds = array<i64: 128, 128>}, {pipeline_mode = #tpu.pipeline_mode<synchronous>, transform_indices = @transform_5, window_bounds = array<i64: 1, 128>}, {transform_indices = @transform_6, window_bounds = array<i64: 16, 128>}, {transform_indices = @transform_7, window_bounds = array<i64: 8, 128>}]} {
    %c1_i32 = arith.constant 1 : i32
    %0 = arith.cmpi slt, %arg0, %c1_i32 : i32
    %c0 = arith.constant 0 : index
    %c0_0 = arith.constant 0 : index
    %1 = vector.load %arg2[%c0, %c0_0] : memref<16x1024xbf16, #tpu.memory_space<vmem>>, vector<16x1024xbf16>
    %c0_1 = arith.constant 0 : index
    %c0_2 = arith.constant 0 : index
    %2 = vector.load %arg3[%c0_1, %c0_2] : memref<1024x128xbf16, #tpu.memory_space<vmem>>, vector<1024x128xbf16>
    %cst = arith.constant dense<0.000000e+00> : vector<16x128xf32>
    %3 = tpu.matmul %1, %2, %cst {dimension_numbers = #tpu.dot_dimension_numbers<[1], [0], [0], [1], [0, 0, 1, 1], [], []>} : vector<16x1024xbf16>, vector<1024x128xbf16>, vector<16x128xf32> -> vector<16x128xf32>
    %c0_3 = arith.constant 0 : index
    %c0_4 = arith.constant 0 : index
    %4 = vector.load %arg4[%c0_3, %c0_4] : memref<1x128xf32, #tpu.memory_space<vmem>>, vector<1x128xf32>
    %5 = vector.broadcast %4 : vector<1x128xf32> to vector<16x128xf32>
    %6 = arith.addf %3, %5 : vector<16x128xf32>
    %cst_5 = arith.constant 0.000000e+00 : f32
    %7 = vector.broadcast %cst_5 : f32 to vector<16x128xf32>
    %8 = arith.maximumf %6, %7 : vector<16x128xf32>
    %9 = arith.truncf %8 : vector<16x128xf32> to vector<16x128xbf16>
    %c0_6 = arith.constant 0 : index
    %c0_7 = arith.constant 0 : index
    %10 = vector.load %arg5[%c0_6, %c0_7] : memref<128x128xbf16, #tpu.memory_space<vmem>>, vector<128x128xbf16>
    %cst_8 = arith.constant dense<0.000000e+00> : vector<16x128xf32>
    %11 = tpu.matmul %9, %10, %cst_8 {dimension_numbers = #tpu.dot_dimension_numbers<[1], [0], [0], [1], [0, 0, 1, 1], [], []>} : vector<16x128xbf16>, vector<128x128xbf16>, vector<16x128xf32> -> vector<16x128xf32>
    %c0_9 = arith.constant 0 : index
    %c0_10 = arith.constant 0 : index
    %12 = vector.load %arg6[%c0_9, %c0_10] : memref<1x128xf32, #tpu.memory_space<vmem>>, vector<1x128xf32>
    %13 = vector.broadcast %12 : vector<1x128xf32> to vector<16x128xf32>
    %14 = arith.addf %11, %13 : vector<16x128xf32>
    %15 = tpu.iota {dimensions = array<i32: 1>} : vector<16x128xi32>
    %c8_i32 = arith.constant 8 : i32
    %16 = vector.broadcast %c8_i32 : i32 to vector<16x128xi32>
    %17 = arith.cmpi slt, %15, %16 : vector<16x128xi32>
    %cst_11 = arith.constant -1.000000e+30 : f32
    %18 = vector.broadcast %cst_11 : f32 to vector<16x128xf32>
    %19 = arith.select %17, %14, %18 : vector<16x128xi1>, vector<16x128xf32>
    %cst_12 = arith.constant dense<0xFF800000> : vector<16xf32>
    %20 = vector.multi_reduction <maximumf>, %19, %cst_12 [1] : vector<16x128xf32> to vector<16xf32>
    %21 = vector.shape_cast %20 : vector<16xf32> to vector<16x1xf32>
    %22 = vector.broadcast %21 : vector<16x1xf32> to vector<16x128xf32>
    %23 = arith.subf %19, %22 : vector<16x128xf32>
    %24 = math.exp %23 : vector<16x128xf32>
    %cst_13 = arith.constant dense<0.000000e+00> : vector<16xf32>
    %25 = vector.multi_reduction <add>, %24, %cst_13 [1] : vector<16x128xf32> to vector<16xf32>
    %26 = vector.shape_cast %25 : vector<16xf32> to vector<16x1xf32>
    %27 = math.log %26 : vector<16x1xf32>
    %28 = arith.addf %21, %27 : vector<16x1xf32>
    %c1_i32_14 = arith.constant 1 : i32
    %29 = arith.subi %arg0, %c1_i32_14 : i32
    %30 = arith.select %0, %arg0, %29 : i32
    %c16_i32 = arith.constant 16 : i32
    %31 = arith.muli %30, %c16_i32 : i32
    %c2_i32 = arith.constant 2 : i32
    %c2_i32_15 = arith.constant 2 : i32
    %32 = arith.select %0, %c2_i32, %c2_i32_15 : i32
    %33 = tpu.iota {dimensions = array<i32: 0>} : vector<16x1xi32>
    %34 = arith.subi %32, %31 : i32
    %35 = vector.broadcast %34 : i32 to vector<16x1xi32>
    %36 = arith.cmpi slt, %33, %35 : vector<16x1xi32>
    %37 = arith.extui %36 : vector<16x1xi1> to vector<16x1xi32>
    %38 = arith.sitofp %37 : vector<16x1xi32> to vector<16x1xf32>
    %c0_16 = arith.constant 0 : index
    %c0_17 = arith.constant 0 : index
    %39 = vector.load %arg1[%c0_16, %c0_17] : memref<16x1xi32, #tpu.memory_space<vmem>>, vector<16x1xi32>
    %40 = vector.broadcast %39 : vector<16x1xi32> to vector<16x128xi32>
    %41 = arith.cmpi eq, %15, %40 : vector<16x128xi32>
    %cst_18 = arith.constant 0.000000e+00 : f32
    %42 = vector.broadcast %cst_18 : f32 to vector<16x128xf32>
    %43 = arith.select %41, %14, %42 : vector<16x128xi1>, vector<16x128xf32>
    %cst_19 = arith.constant dense<0.000000e+00> : vector<16xf32>
    %44 = vector.multi_reduction <add>, %43, %cst_19 [1] : vector<16x128xf32> to vector<16xf32>
    %45 = vector.shape_cast %44 : vector<16xf32> to vector<16x1xf32>
    %46 = arith.subf %28, %45 : vector<16x1xf32>
    %47 = vector.broadcast %21 : vector<16x1xf32> to vector<16x128xf32>
    %48 = arith.cmpf oeq, %19, %47 : vector<16x128xf32>
    %c128_i32 = arith.constant 128 : i32
    %49 = vector.broadcast %c128_i32 : i32 to vector<16x128xi32>
    %50 = arith.select %48, %15, %49 : vector<16x128xi1>, vector<16x128xi32>
    %cst_20 = arith.constant dense<2147483647> : vector<16xi32>
    %51 = vector.multi_reduction <minsi>, %50, %cst_20 [1] : vector<16x128xi32> to vector<16xi32>
    %52 = vector.shape_cast %51 : vector<16xi32> to vector<16x1xi32>
    %53 = arith.cmpi eq, %52, %39 : vector<16x1xi32>
    %54 = arith.extui %53 : vector<16x1xi1> to vector<16x1xi32>
    %55 = arith.sitofp %54 : vector<16x1xi32> to vector<16x1xf32>
    %cst_21 = arith.constant 0.000000e+00 : f32
    %56 = vector.broadcast %cst_21 : f32 to vector<16x128xf32>
    %57 = arith.select %17, %14, %56 : vector<16x128xi1>, vector<16x128xf32>
    %cst_22 = arith.constant dense<0.000000e+00> : vector<16xf32>
    %58 = vector.multi_reduction <add>, %57, %cst_22 [1] : vector<16x128xf32> to vector<16xf32>
    %59 = vector.shape_cast %58 : vector<16xf32> to vector<16x1xf32>
    %cst_23 = arith.constant 1.250000e-01 : f32
    %60 = vector.broadcast %cst_23 : f32 to vector<16x1xf32>
    %61 = arith.mulf %59, %60 : vector<16x1xf32>
    %62 = arith.subf %28, %61 : vector<16x1xf32>
    %63 = arith.extui %0 : i1 to i32
    %64 = arith.sitofp %63 : i32 to f32
    %65 = arith.mulf %38, %46 : vector<16x1xf32>
    %66 = vector.shape_cast %65 : vector<16x1xf32> to vector<1x16x1xf32>
    %cst_24 = arith.constant dense<0.000000e+00> : vector<1xf32>
    %67 = vector.multi_reduction <add>, %66, %cst_24 [1, 2] : vector<1x16x1xf32> to vector<1xf32>
    %68 = vector.shape_cast %67 : vector<1xf32> to vector<1x1x1xf32>
    %69 = vector.extract %68[0, 0, 0] : f32 from vector<1x1x1xf32>
    %70 = arith.mulf %69, %64 : f32
    %71 = arith.mulf %38, %55 : vector<16x1xf32>
    %72 = vector.shape_cast %71 : vector<16x1xf32> to vector<1x16x1xf32>
    %cst_25 = arith.constant dense<0.000000e+00> : vector<1xf32>
    %73 = vector.multi_reduction <add>, %72, %cst_25 [1, 2] : vector<1x16x1xf32> to vector<1xf32>
    %74 = vector.shape_cast %73 : vector<1xf32> to vector<1x1x1xf32>
    %75 = vector.extract %74[0, 0, 0] : f32 from vector<1x1x1xf32>
    %76 = arith.mulf %75, %64 : f32
    %77 = arith.mulf %38, %62 : vector<16x1xf32>
    %78 = vector.shape_cast %77 : vector<16x1xf32> to vector<1x16x1xf32>
    %cst_26 = arith.constant dense<0.000000e+00> : vector<1xf32>
    %79 = vector.multi_reduction <add>, %78, %cst_26 [1, 2] : vector<1x16x1xf32> to vector<1xf32>
    %80 = vector.shape_cast %79 : vector<1xf32> to vector<1x1x1xf32>
    %81 = vector.extract %80[0, 0, 0] : f32 from vector<1x1x1xf32>
    %cst_27 = arith.constant 1.000000e+00 : f32
    %82 = arith.subf %cst_27, %64 : f32
    %83 = arith.mulf %81, %82 : f32
    %c0_28 = arith.constant 0 : index
    %c0_29 = arith.constant 0 : index
    %84 = vector.load %arg7[%c0_28, %c0_29] : memref<16x128xf32, #tpu.memory_space<vmem>>, vector<16x128xf32>
    tpu.vector_store %arg7[%c0_28, %c0_29], %14 {strides = array<i32>} : memref<16x128xf32, #tpu.memory_space<vmem>>, vector<16x128xf32>,
    %85 = tpu.iota {dimensions = array<i32: 0>} : vector<8x128xi32>
    %86 = tpu.iota {dimensions = array<i32: 1>} : vector<8x128xi32>
    %c0_i32 = arith.constant 0 : i32
    %87 = vector.broadcast %c0_i32 : i32 to vector<8x128xi32>
    %88 = arith.cmpi eq, %85, %87 : vector<8x128xi32>
    %c0_i32_30 = arith.constant 0 : i32
    %89 = vector.broadcast %c0_i32_30 : i32 to vector<8x128xi32>
    %90 = arith.cmpi eq, %86, %89 : vector<8x128xi32>
    %91 = arith.andi %88, %90 : vector<8x128xi1>
    %c0_i32_31 = arith.constant 0 : i32
    %92 = vector.broadcast %c0_i32_31 : i32 to vector<8x128xi32>
    %93 = arith.cmpi eq, %85, %92 : vector<8x128xi32>
    %c1_i32_32 = arith.constant 1 : i32
    %94 = vector.broadcast %c1_i32_32 : i32 to vector<8x128xi32>
    %95 = arith.cmpi eq, %86, %94 : vector<8x128xi32>
    %96 = arith.andi %93, %95 : vector<8x128xi1>
    %c0_i32_33 = arith.constant 0 : i32
    %97 = vector.broadcast %c0_i32_33 : i32 to vector<8x128xi32>
    %98 = arith.cmpi eq, %85, %97 : vector<8x128xi32>
    %c2_i32_34 = arith.constant 2 : i32
    %99 = vector.broadcast %c2_i32_34 : i32 to vector<8x128xi32>
    %100 = arith.cmpi eq, %86, %99 : vector<8x128xi32>
    %101 = arith.andi %98, %100 : vector<8x128xi1>
    %cst_35 = arith.constant 0.000000e+00 : f32
    %102 = vector.broadcast %83 : f32 to vector<8x128xf32>
    %103 = vector.broadcast %cst_35 : f32 to vector<8x128xf32>
    %104 = arith.select %101, %102, %103 : vector<8x128xi1>, vector<8x128xf32>
    %105 = vector.broadcast %76 : f32 to vector<8x128xf32>
    %106 = arith.select %96, %105, %104 : vector<8x128xi1>, vector<8x128xf32>
    %107 = vector.broadcast %70 : f32 to vector<8x128xf32>
    %108 = arith.select %91, %107, %106 : vector<8x128xi1>, vector<8x128xf32>
    %c0_36 = arith.constant 0 : index
    %c0_37 = arith.constant 0 : index
    %109 = vector.load %arg8[%c0_36, %c0_37] : memref<8x128xf32, #tpu.memory_space<vmem>>, vector<8x128xf32>
    tpu.vector_store %arg8[%c0_36, %c0_37], %108 {strides = array<i32>} : memref<8x128xf32, #tpu.memory_space<vmem>>, vector<8x128xf32>,
    return
  }
  func.func @transform_0(%arg0: i32) -> (i32, i32) {
    %c0_i32 = arith.constant 0 : i32
    %c0_i32_0 = arith.constant 0 : i32
    return %arg0, %c0_i32 : i32, i32
  }
  func.func @transform_1(%arg0: i32) -> (i32, i32) {
    %c0_i32 = arith.constant 0 : i32
    %c0_i32_0 = arith.constant 0 : i32
    return %arg0, %c0_i32 : i32, i32
  }
  func.func @transform_2(%arg0: i32) -> (i32, i32) {
    %c0_i32 = arith.constant 0 : i32
    %c0_i32_0 = arith.constant 0 : i32
    %c0_i32_1 = arith.constant 0 : i32
    return %c0_i32, %c0_i32_0 : i32, i32
  }
  func.func @transform_3(%arg0: i32) -> (i32, i32) {
    %c0_i32 = arith.constant 0 : i32
    %c0_i32_0 = arith.constant 0 : i32
    %c0_i32_1 = arith.constant 0 : i32
    return %c0_i32, %c0_i32_0 : i32, i32
  }
  func.func @transform_4(%arg0: i32) -> (i32, i32) {
    %c0_i32 = arith.constant 0 : i32
    %c0_i32_0 = arith.constant 0 : i32
    %c0_i32_1 = arith.constant 0 : i32
    return %c0_i32, %c0_i32_0 : i32, i32
  }
  func.func @transform_5(%arg0: i32) -> (i32, i32) {
    %c0_i32 = arith.constant 0 : i32
    %c0_i32_0 = arith.constant 0 : i32
    %c0_i32_1 = arith.constant 0 : i32
    return %c0_i32, %c0_i32_0 : i32, i32
  }
  func.func @transform_6(%arg0: i32) -> (i32, i32) {
    %c0_i32 = arith.constant 0 : i32
    %c0_i32_0 = arith.constant 0 : i32
    return %arg0, %c0_i32 : i32, i32
  }
  func.func @transform_7(%arg0: i32) -> (i32, i32) {
    %c0_i32 = arith.constant 0 : i32
    %c0_i32_0 = arith.constant 0 : i32
    return %arg0, %c0_i32 : i32, i32
  }
}

module attributes {stable_mosaic.version = 11 : i64} {
  func.func @_msp_trainer_kernel(%arg0: i32, %arg1: memref<16x1xi32, #tpu.memory_space<vmem>>, %arg2: memref<16x1024xbf16, #tpu.memory_space<vmem>>, %arg3: memref<1024x128xbf16, #tpu.memory_space<vmem>>, %arg4: memref<1x128xf32, #tpu.memory_space<vmem>>, %arg5: memref<128x128xbf16, #tpu.memory_space<vmem>>, %arg6: memref<1x128xf32, #tpu.memory_space<vmem>>, %arg7: memref<16x128xf32, #tpu.memory_space<vmem>>, %arg8: memref<8x128xf32, #tpu.memory_space<vmem>>) attributes {dimension_semantics = [#tpu.dimension_semantics<parallel>], iteration_bounds = array<i64: 2>, scalar_prefetch = 0 : i64, scratch_operands = 0 : i64, tpu.core_type = #tpu.core_type<tc>, window_params = [{transform_indices = @transform_0, window_bounds = array<i64: 16, 1>}, {transform_indices = @transform_1, window_bounds = array<i64: 16, 1024>}, {pipeline_mode = #tpu.pipeline_mode<synchronous>, transform_indices = @transform_2, window_bounds = array<i64: 1024, 128>}, {pipeline_mode = #tpu.pipeline_mode<synchronous>, transform_indices = @transform_3, window_bounds = array<i64: 1, 128>}, {pipeline_mode = #tpu.pipeline_mode<synchronous>, transform_indices = @transform_4, window_bounds = array<i64: 128, 128>}, {pipeline_mode = #tpu.pipeline_mode<synchronous>, transform_indices = @transform_5, window_bounds = array<i64: 1, 128>}, {transform_indices = @transform_6, window_bounds = array<i64: 16, 128>}, {transform_indices = @transform_7, window_bounds = array<i64: 8, 128>}]} {
    %c1_i32 = arith.constant 1 : i32
    %0 = arith.cmpi slt, %arg0, %c1_i32 : i32
    %c0 = arith.constant 0 : index
    %c0_0 = arith.constant 0 : index
    %1 = vector.load %arg2[%c0, %c0_0] : memref<16x1024xbf16, #tpu.memory_space<vmem>>, vector<16x1024xbf16>
    %c0_1 = arith.constant 0 : index
    %c0_2 = arith.constant 0 : index
    %2 = vector.load %arg3[%c0_1, %c0_2] : memref<1024x128xbf16, #tpu.memory_space<vmem>>, vector<1024x128xbf16>
    %cst = arith.constant dense<0.000000e+00> : vector<16x128xf32>
    %3 = tpu.matmul %1, %2, %cst {dimension_numbers = #tpu.dot_dimension_numbers<[1], [0], [0], [1], [0, 0, 1, 1], [], []>} : vector<16x1024xbf16>, vector<1024x128xbf16>, vector<16x128xf32> -> vector<16x128xf32>
    %c0_3 = arith.constant 0 : index
    %c0_4 = arith.constant 0 : index
    %4 = vector.load %arg4[%c0_3, %c0_4] : memref<1x128xf32, #tpu.memory_space<vmem>>, vector<1x128xf32>
    %5 = vector.broadcast %4 : vector<1x128xf32> to vector<16x128xf32>
    %6 = arith.addf %3, %5 : vector<16x128xf32>
    %cst_5 = arith.constant 0.000000e+00 : f32
    %7 = vector.broadcast %cst_5 : f32 to vector<16x128xf32>
    %8 = arith.maximumf %6, %7 : vector<16x128xf32>
    %9 = arith.truncf %8 : vector<16x128xf32> to vector<16x128xbf16>
    %c0_6 = arith.constant 0 : index
    %c0_7 = arith.constant 0 : index
    %10 = vector.load %arg5[%c0_6, %c0_7] : memref<128x128xbf16, #tpu.memory_space<vmem>>, vector<128x128xbf16>
    %cst_8 = arith.constant dense<0.000000e+00> : vector<16x128xf32>
    %11 = tpu.matmul %9, %10, %cst_8 {dimension_numbers = #tpu.dot_dimension_numbers<[1], [0], [0], [1], [0, 0, 1, 1], [], []>} : vector<16x128xbf16>, vector<128x128xbf16>, vector<16x128xf32> -> vector<16x128xf32>
    %c0_9 = arith.constant 0 : index
    %c0_10 = arith.constant 0 : index
    %12 = vector.load %arg6[%c0_9, %c0_10] : memref<1x128xf32, #tpu.memory_space<vmem>>, vector<1x128xf32>
    %13 = vector.broadcast %12 : vector<1x128xf32> to vector<16x128xf32>
    %14 = arith.addf %11, %13 : vector<16x128xf32>
    %15 = tpu.iota {dimensions = array<i32: 1>} : vector<16x128xi32>
    %c8_i32 = arith.constant 8 : i32
    %16 = vector.broadcast %c8_i32 : i32 to vector<16x128xi32>
    %17 = arith.cmpi slt, %15, %16 : vector<16x128xi32>
    %cst_11 = arith.constant -1.000000e+30 : f32
    %18 = vector.broadcast %cst_11 : f32 to vector<16x128xf32>
    %19 = arith.select %17, %14, %18 : vector<16x128xi1>, vector<16x128xf32>
    %cst_12 = arith.constant dense<0xFF800000> : vector<16xf32>
    %20 = vector.multi_reduction <maximumf>, %19, %cst_12 [1] : vector<16x128xf32> to vector<16xf32>
    %21 = vector.shape_cast %20 : vector<16xf32> to vector<16x1xf32>
    %22 = vector.broadcast %21 : vector<16x1xf32> to vector<16x128xf32>
    %23 = arith.subf %19, %22 : vector<16x128xf32>
    %24 = math.exp %23 : vector<16x128xf32>
    %cst_13 = arith.constant dense<0.000000e+00> : vector<16xf32>
    %25 = vector.multi_reduction <add>, %24, %cst_13 [1] : vector<16x128xf32> to vector<16xf32>
    %26 = vector.shape_cast %25 : vector<16xf32> to vector<16x1xf32>
    %27 = math.log %26 : vector<16x1xf32>
    %28 = arith.addf %21, %27 : vector<16x1xf32>
    %c1_i32_14 = arith.constant 1 : i32
    %29 = arith.subi %arg0, %c1_i32_14 : i32
    %30 = arith.select %0, %arg0, %29 : i32
    %c16_i32 = arith.constant 16 : i32
    %31 = arith.muli %30, %c16_i32 : i32
    %c2_i32 = arith.constant 2 : i32
    %c2_i32_15 = arith.constant 2 : i32
    %32 = arith.select %0, %c2_i32, %c2_i32_15 : i32
    %33 = tpu.iota {dimensions = array<i32: 0>} : vector<16x1xi32>
    %34 = arith.subi %32, %31 : i32
    %35 = vector.broadcast %34 : i32 to vector<16x1xi32>
    %36 = arith.cmpi slt, %33, %35 : vector<16x1xi32>
    %37 = arith.extui %36 : vector<16x1xi1> to vector<16x1xi32>
    %38 = arith.sitofp %37 : vector<16x1xi32> to vector<16x1xf32>
    %c0_16 = arith.constant 0 : index
    %c0_17 = arith.constant 0 : index
    %39 = vector.load %arg1[%c0_16, %c0_17] : memref<16x1xi32, #tpu.memory_space<vmem>>, vector<16x1xi32>
    %40 = vector.broadcast %39 : vector<16x1xi32> to vector<16x128xi32>
    %41 = arith.cmpi eq, %15, %40 : vector<16x128xi32>
    %cst_18 = arith.constant 0.000000e+00 : f32
    %42 = vector.broadcast %cst_18 : f32 to vector<16x128xf32>
    %43 = arith.select %41, %14, %42 : vector<16x128xi1>, vector<16x128xf32>
    %cst_19 = arith.constant dense<0.000000e+00> : vector<16xf32>
    %44 = vector.multi_reduction <add>, %43, %cst_19 [1] : vector<16x128xf32> to vector<16xf32>
    %45 = vector.shape_cast %44 : vector<16xf32> to vector<16x1xf32>
    %46 = arith.subf %28, %45 : vector<16x1xf32>
    %47 = vector.broadcast %21 : vector<16x1xf32> to vector<16x128xf32>
    %48 = arith.cmpf oeq, %19, %47 : vector<16x128xf32>
    %c128_i32 = arith.constant 128 : i32
    %49 = vector.broadcast %c128_i32 : i32 to vector<16x128xi32>
    %50 = arith.select %48, %15, %49 : vector<16x128xi1>, vector<16x128xi32>
    %cst_20 = arith.constant dense<2147483647> : vector<16xi32>
    %51 = vector.multi_reduction <minsi>, %50, %cst_20 [1] : vector<16x128xi32> to vector<16xi32>
    %52 = vector.shape_cast %51 : vector<16xi32> to vector<16x1xi32>
    %53 = arith.cmpi eq, %52, %39 : vector<16x1xi32>
    %54 = arith.extui %53 : vector<16x1xi1> to vector<16x1xi32>
    %55 = arith.sitofp %54 : vector<16x1xi32> to vector<16x1xf32>
    %cst_21 = arith.constant 0.000000e+00 : f32
    %56 = vector.broadcast %cst_21 : f32 to vector<16x128xf32>
    %57 = arith.select %17, %14, %56 : vector<16x128xi1>, vector<16x128xf32>
    %cst_22 = arith.constant dense<0.000000e+00> : vector<16xf32>
    %58 = vector.multi_reduction <add>, %57, %cst_22 [1] : vector<16x128xf32> to vector<16xf32>
    %59 = vector.shape_cast %58 : vector<16xf32> to vector<16x1xf32>
    %cst_23 = arith.constant 1.250000e-01 : f32
    %60 = vector.broadcast %cst_23 : f32 to vector<16x1xf32>
    %61 = arith.mulf %59, %60 : vector<16x1xf32>
    %62 = arith.subf %28, %61 : vector<16x1xf32>
    %63 = arith.extui %0 : i1 to i32
    %64 = arith.sitofp %63 : i32 to f32
    %65 = arith.mulf %38, %46 : vector<16x1xf32>
    %66 = vector.shape_cast %65 : vector<16x1xf32> to vector<1x16x1xf32>
    %cst_24 = arith.constant dense<0.000000e+00> : vector<1xf32>
    %67 = vector.multi_reduction <add>, %66, %cst_24 [1, 2] : vector<1x16x1xf32> to vector<1xf32>
    %68 = vector.shape_cast %67 : vector<1xf32> to vector<1x1x1xf32>
    %69 = vector.extract %68[0, 0, 0] : f32 from vector<1x1x1xf32>
    %70 = arith.mulf %69, %64 : f32
    %71 = arith.mulf %38, %55 : vector<16x1xf32>
    %72 = vector.shape_cast %71 : vector<16x1xf32> to vector<1x16x1xf32>
    %cst_25 = arith.constant dense<0.000000e+00> : vector<1xf32>
    %73 = vector.multi_reduction <add>, %72, %cst_25 [1, 2] : vector<1x16x1xf32> to vector<1xf32>
    %74 = vector.shape_cast %73 : vector<1xf32> to vector<1x1x1xf32>
    %75 = vector.extract %74[0, 0, 0] : f32 from vector<1x1x1xf32>
    %76 = arith.mulf %75, %64 : f32
    %77 = arith.mulf %38, %62 : vector<16x1xf32>
    %78 = vector.shape_cast %77 : vector<16x1xf32> to vector<1x16x1xf32>
    %cst_26 = arith.constant dense<0.000000e+00> : vector<1xf32>
    %79 = vector.multi_reduction <add>, %78, %cst_26 [1, 2] : vector<1x16x1xf32> to vector<1xf32>
    %80 = vector.shape_cast %79 : vector<1xf32> to vector<1x1x1xf32>
    %81 = vector.extract %80[0, 0, 0] : f32 from vector<1x1x1xf32>
    %cst_27 = arith.constant 1.000000e+00 : f32
    %82 = arith.subf %cst_27, %64 : f32
    %83 = arith.mulf %81, %82 : f32
    %c0_28 = arith.constant 0 : index
    %c0_29 = arith.constant 0 : index
    %84 = vector.load %arg7[%c0_28, %c0_29] : memref<16x128xf32, #tpu.memory_space<vmem>>, vector<16x128xf32>
    tpu.vector_store %arg7[%c0_28, %c0_29], %14 {strides = array<i32>} : memref<16x128xf32, #tpu.memory_space<vmem>>, vector<16x128xf32>,
    %85 = tpu.iota {dimensions = array<i32: 0>} : vector<8x128xi32>
    %86 = tpu.iota {dimensions = array<i32: 1>} : vector<8x128xi32>
    %c0_i32 = arith.constant 0 : i32
    %87 = vector.broadcast %c0_i32 : i32 to vector<8x128xi32>
    %88 = arith.cmpi eq, %85, %87 : vector<8x128xi32>
    %c0_i32_30 = arith.constant 0 : i32
    %89 = vector.broadcast %c0_i32_30 : i32 to vector<8x128xi32>
    %90 = arith.cmpi eq, %86, %89 : vector<8x128xi32>
    %91 = arith.andi %88, %90 : vector<8x128xi1>
    %c0_i32_31 = arith.constant 0 : i32
    %92 = vector.broadcast %c0_i32_31 : i32 to vector<8x128xi32>
    %93 = arith.cmpi eq, %85, %92 : vector<8x128xi32>
    %c1_i32_32 = arith.constant 1 : i32
    %94 = vector.broadcast %c1_i32_32 : i32 to vector<8x128xi32>
    %95 = arith.cmpi eq, %86, %94 : vector<8x128xi32>
    %96 = arith.andi %93, %95 : vector<8x128xi1>
    %c0_i32_33 = arith.constant 0 : i32
    %97 = vector.broadcast %c0_i32_33 : i32 to vector<8x128xi32>
    %98 = arith.cmpi eq, %85, %97 : vector<8x128xi32>
    %c2_i32_34 = arith.constant 2 : i32
    %99 = vector.broadcast %c2_i32_34 : i32 to vector<8x128xi32>
    %100 = arith.cmpi eq, %86, %99 : vector<8x128xi32>
    %101 = arith.andi %98, %100 : vector<8x128xi1>
    %cst_35 = arith.constant 0.000000e+00 : f32
    %102 = vector.broadcast %83 : f32 to vector<8x128xf32>
    %103 = vector.broadcast %cst_35 : f32 to vector<8x128xf32>
    %104 = arith.select %101, %102, %103 : vector<8x128xi1>, vector<8x128xf32>
    %105 = vector.broadcast %76 : f32 to vector<8x128xf32>
    %106 = arith.select %96, %105, %104 : vector<8x128xi1>, vector<8x128xf32>
    %107 = vector.broadcast %70 : f32 to vector<8x128xf32>
    %108 = arith.select %91, %107, %106 : vector<8x128xi1>, vector<8x128xf32>
    %c0_36 = arith.constant 0 : index
    %c0_37 = arith.constant 0 : index
    %109 = vector.load %arg8[%c0_36, %c0_37] : memref<8x128xf32, #tpu.memory_space<vmem>>, vector<8x128xf32>
    tpu.vector_store %arg8[%c0_36, %c0_37], %108 {strides = array<i32>} : memref<8x128xf32, #tpu.memory_space<vmem>>, vector<8x128xf32>,
    return
  }
  func.func @transform_0(%arg0: i32) -> (i32, i32) {
    %c0_i32 = arith.constant 0 : i32
    %c0_i32_0 = arith.constant 0 : i32
    return %arg0, %c0_i32 : i32, i32
  }
  func.func @transform_1(%arg0: i32) -> (i32, i32) {
    %c0_i32 = arith.constant 0 : i32
    %c0_i32_0 = arith.constant 0 : i32
    return %arg0, %c0_i32 : i32, i32
  }
  func.func @transform_2(%arg0: i32) -> (i32, i32) {
    %c0_i32 = arith.constant 0 : i32
    %c0_i32_0 = arith.constant 0 : i32
    %c0_i32_1 = arith.constant 0 : i32
    return %c0_i32, %c0_i32_0 : i32, i32
  }
  func.func @transform_3(%arg0: i32) -> (i32, i32) {
    %c0_i32 = arith.constant 0 : i32
    %c0_i32_0 = arith.constant 0 : i32
    %c0_i32_1 = arith.constant 0 : i32
    return %c0_i32, %c0_i32_0 : i32, i32
  }
  func.func @transform_4(%arg0: i32) -> (i32, i32) {
    %c0_i32 = arith.constant 0 : i32
    %c0_i32_0 = arith.constant 0 : i32
    %c0_i32_1 = arith.constant 0 : i32
    return %c0_i32, %c0_i32_0 : i32, i32
  }
  func.func @transform_5(%arg0: i32) -> (i32, i32) {
    %c0_i32 = arith.constant 0 : i32
    %c0_i32_0 = arith.constant 0 : i32
    %c0_i32_1 = arith.constant 0 : i32
    return %c0_i32, %c0_i32_0 : i32, i32
  }
  func.func @transform_6(%arg0: i32) -> (i32, i32) {
    %c0_i32 = arith.constant 0 : i32
    %c0_i32_0 = arith.constant 0 : i32
    return %arg0, %c0_i32 : i32, i32
  }
  func.func @transform_7(%arg0: i32) -> (i32, i32) {
    %c0_i32 = arith.constant 0 : i32
    %c0_i32_0 = arith.constant 0 : i32
    return %arg0, %c0_i32 : i32, i32
  }
}

</mosaic_0001>

<llo_original>
// kernel: tpu_custom_call.1
$region0: #{tpu_custom_call.1}
  #allocation0 [shape = 'u32[]', space=smem, size = 0x4, offset = 0x4, fixed_abs, tag = 'smem constant byte address 0x4 - core index']
  #allocation1 [shape = 'u32[144,128]{1,0:T(1,128)}', space=vmem, size = 0x12000, scoped, tag = 'internal scratch']
  %s0 = inlined_call_operand.vmem [shape: s32[32,1], index: 0, kind: input, shape index: {}]
  %s1 = inlined_call_operand.hbm [shape: bf16[32,1024], index: 1, kind: input, shape index: {}]
  %s2 = inlined_call_operand.hbm [shape: bf16[1024,128], index: 2, kind: input, shape index: {}]
  %s3 = inlined_call_operand.vmem [shape: f32[1,128], index: 3, kind: input, shape index: {}]
  %s4 = inlined_call_operand.hbm [shape: bf16[128,128], index: 4, kind: input, shape index: {}]
  %s5 = inlined_call_operand.vmem [shape: f32[1,128], index: 5, kind: input, shape index: {}]
  %s6 = inlined_call_operand.hbm [shape: f32[32,128], index: 6, kind: output, shape index: {0}]
  %s7 = inlined_call_operand.hbm [shape: f32[16,128], index: 7, kind: output, shape index: {1}]
  %8 = xla_tuple %s6, %s7
  %s9 = sld [smem:[#allocation0]]
  $region77: #{tpu_custom_call.1} parent=0
    _
  %s11 = ssub.s32 1, %s9
  %s12 = scalar_select 0, %s11, %s9
  $region1: #{tpu_custom_call.1} parent=0
    #allocation2 [shape = 'u8[65536]{0}', space=vmem, size = 0x10000, scoped, tag = 'input window, operand 1']
    #allocation3 [shape = 's32[2]{0}', space=sflag, size = 0x8, scoped, tag = 'scoped memory for tpu_custom_call.1']
    #allocation4 [shape = 's32[2]{0}', space=sflag, size = 0x8, scoped, tag = 'scoped memory for tpu_custom_call.1']
    #allocation5 [shape = 'u8[262144]{0}', space=vmem, size = 0x40000, scoped, tag = 'input window, operand 2, single buffered']
    #allocation6 [shape = 's32[1]{0}', space=sflag, size = 0x4, scoped, tag = 'scoped memory for tpu_custom_call.1']
    #allocation7 [shape = 'u8[32768]{0}', space=vmem, size = 0x8000, scoped, tag = 'input window, operand 4, single buffered']
    #allocation8 [shape = 'u8[16384]{0}', space=vmem, size = 0x4000, scoped, tag = 'output window, operand 0']
    #allocation9 [shape = 'u8[8192]{0}', space=vmem, size = 0x2000, scoped, tag = 'output window, operand 1']
    #allocation10 [shape = 's32[2]{0}', space=sflag, size = 0x8, scoped, tag = 'scoped memory for tpu_custom_call.1']
    %13 = vsyncpa [#allocation3], 0
    %s14 = scalar_lea.sflag [#allocation3], 1
    %15 = vsyncpa %s14, 0
    %16 = vsyncpa [#allocation6], 0
    %17 = vsyncpa [#allocation4], 0
    %s18 = scalar_lea.sflag [#allocation4], 1
    %19 = vsyncpa %s18, 0
    %20 = vsyncpa [#allocation10], 0
    %s21 = scalar_lea.sflag [#allocation10], 1
    %22 = vsyncpa %s21, 0
    loop: start=0, step=1, limit=4
    $region2: #{tpu_custom_call.1} parent=1 // loop_pre_header
      _
    $region3: #{tpu_custom_call.1} parent=1 // loop_header
      %s24 = sphi 0, %s28
      %p25 = scmp.ge.s32.totalorder %s24, 4
      %s34 = sphi 0, %s36
      %s37 = sphi 0, %s34
      %s38 = sphi 0, %s37
      %s54 = sphi 0, %s38
      %s60 = sphi 0, %s62
      %s63 = sphi 0, %s60
      %s64 = sphi 0, %s63
      %s80 = sphi 0, %s64
      %s84 = sphi 0, %s84
      %s86 = sphi 0, %s84
      %s87 = sphi 0, %s86
      %s101 = sphi 0, %s87
      %s105 = sphi 0, %s105
      %s107 = sphi 0, %s105
      %s108 = sphi 0, %s107
      %s122 = sphi 0, %s108
      %s126 = sphi 0, %s126
      %s128 = sphi 0, %s126
      %s129 = sphi 0, %s128
      %s143 = sphi 0, %s129
      %s147 = sphi 0, %s147
      %s149 = sphi 0, %s147
      %s150 = sphi 0, %s149
      %s164 = sphi 0, %s150
      %s170 = sphi 0, %s172
      %s173 = sphi 0, %s170
      %s174 = sphi 0, %s173
      %s190 = sphi 0, %s174
      %s196 = sphi 0, %s198
      %s199 = sphi 0, %s196
      %s200 = sphi 0, %s199
      %s216 = sphi 0, %s200
    $region4: #{tpu_custom_call.1} parent=1 // loop_header_branch
      %27 = sbr.rel (%p25) target = $region8
    $region5: #{tpu_custom_call.1} parent=1 // loop_body
      %s29 = ssub.s32 %s24, 1
      %s30 = ssub.s32 %s24, 2
      %s31 = sadd.s32 %s24, 1
      %s32 = ssub.s32 %s24, %s31
      %p33 = scmp.eq.s32.totalorder %s32, 0
      %s35 = sadd.s32 %s34, 1
      %s36 = scalar_select %p33, %s34, %s35
      %p39 = pneg %p33
      %p40 = scmp.eq.s32.totalorder %s24, 1
      %p41 = por %p39, %p40
      %p42 = scmp.ne.s32.totalorder %s34, %s37
      %p43 = scmp.eq.s32.totalorder %s24, 0
      %p44 = por %p42, %p43
      %p45 = scmp.ne.s32.totalorder %s34, %s37
      %p46 = scmp.eq.s32.totalorder %s29, 1
      %p47 = por %p45, %p46
      %p48 = scmp.ne.s32.totalorder %s37, %s38
      %p49 = scmp.eq.s32.totalorder %s29, 0
      %p50 = por %p48, %p49
      %p51 = scmp.ne.s32.totalorder %s37, %s38
      %p52 = scmp.eq.s32.totalorder %s30, 1
      %p53 = por %p51, %p52
      %p55 = scmp.ne.s32.totalorder %s38, %s54
      %p56 = scmp.eq.s32.totalorder %s30, 0
      %p57 = por %p55, %p56
      %s58 = ssub.s32 %s24, %s31
      %p59 = scmp.eq.s32.totalorder %s58, 0
      %s61 = sadd.s32 %s60, 1
      %s62 = scalar_select %p59, %s60, %s61
      %p65 = pneg %p59
      %p66 = scmp.eq.s32.totalorder %s24, 1
      %p67 = por %p65, %p66
      %p68 = scmp.ne.s32.totalorder %s60, %s63
      %p69 = scmp.eq.s32.totalorder %s24, 0
      %p70 = por %p68, %p69
      %p71 = scmp.ne.s32.totalorder %s60, %s63
      %p72 = scmp.eq.s32.totalorder %s29, 1
      %p73 = por %p71, %p72
      %p74 = scmp.ne.s32.totalorder %s63, %s64
      %p75 = scmp.eq.s32.totalorder %s29, 0
      %p76 = por %p74, %p75
      %p77 = scmp.ne.s32.totalorder %s63, %s64
      %p78 = scmp.eq.s32.totalorder %s30, 1
      %p79 = por %p77, %p78
      %p81 = scmp.ne.s32.totalorder %s64, %s80
      %p82 = scmp.eq.s32.totalorder %s30, 0
      %p83 = por %p81, %p82
      %s85 = sadd.s32 %s84, 1
      %p88 = scmp.eq.s32.totalorder %s24, 1
      %p89 = scmp.ne.s32.totalorder %s84, %s86
      %p90 = scmp.eq.s32.totalorder %s24, 0
      %p91 = por %p89, %p90
      %p92 = scmp.ne.s32.totalorder %s84, %s86
      %p93 = scmp.eq.s32.totalorder %s29, 1
      %p94 = por %p92, %p93
      %p95 = scmp.ne.s32.totalorder %s86, %s87
      %p96 = scmp.eq.s32.totalorder %s29, 0
      %p97 = por %p95, %p96
      %p98 = scmp.ne.s32.totalorder %s86, %s87
      %p99 = scmp.eq.s32.totalorder %s30, 1
      %p100 = por %p98, %p99
      %p102 = scmp.ne.s32.totalorder %s87, %s101
      %p103 = scmp.eq.s32.totalorder %s30, 0
      %p104 = por %p102, %p103
      %s106 = sadd.s32 %s105, 1
      %p109 = scmp.eq.s32.totalorder %s24, 1
      %p110 = scmp.ne.s32.totalorder %s105, %s107
      %p111 = scmp.eq.s32.totalorder %s24, 0
      %p112 = por %p110, %p111
      %p113 = scmp.ne.s32.totalorder %s105, %s107
      %p114 = scmp.eq.s32.totalorder %s29, 1
      %p115 = por %p113, %p114
      %p116 = scmp.ne.s32.totalorder %s107, %s108
      %p117 = scmp.eq.s32.totalorder %s29, 0
      %p118 = por %p116, %p117
      %p119 = scmp.ne.s32.totalorder %s107, %s108
      %p120 = scmp.eq.s32.totalorder %s30, 1
      %p121 = por %p119, %p120
      %p123 = scmp.ne.s32.totalorder %s108, %s122
      %p124 = scmp.eq.s32.totalorder %s30, 0
      %p125 = por %p123, %p124
      %s127 = sadd.s32 %s126, 1
      %p130 = scmp.eq.s32.totalorder %s24, 1
      %p131 = scmp.ne.s32.totalorder %s126, %s128
      %p132 = scmp.eq.s32.totalorder %s24, 0
      %p133 = por %p131, %p132
      %p134 = scmp.ne.s32.totalorder %s126, %s128
      %p135 = scmp.eq.s32.totalorder %s29, 1
      %p136 = por %p134, %p135
      %p137 = scmp.ne.s32.totalorder %s128, %s129
      %p138 = scmp.eq.s32.totalorder %s29, 0
      %p139 = por %p137, %p138
      %p140 = scmp.ne.s32.totalorder %s128, %s129
      %p141 = scmp.eq.s32.totalorder %s30, 1
      %p142 = por %p140, %p141
      %p144 = scmp.ne.s32.totalorder %s129, %s143
      %p145 = scmp.eq.s32.totalorder %s30, 0
      %p146 = por %p144, %p145
      %s148 = sadd.s32 %s147, 1
      %p151 = scmp.eq.s32.totalorder %s24, 1
      %p152 = scmp.ne.s32.totalorder %s147, %s149
      %p153 = scmp.eq.s32.totalorder %s24, 0
      %p154 = por %p152, %p153
      %p155 = scmp.ne.s32.totalorder %s147, %s149
      %p156 = scmp.eq.s32.totalorder %s29, 1
      %p157 = por %p155, %p156
      %p158 = scmp.ne.s32.totalorder %s149, %s150
      %p159 = scmp.eq.s32.totalorder %s29, 0
      %p160 = por %p158, %p159
      %p161 = scmp.ne.s32.totalorder %s149, %s150
      %p162 = scmp.eq.s32.totalorder %s30, 1
      %p163 = por %p161, %p162
      %p165 = scmp.ne.s32.totalorder %s150, %s164
      %p166 = scmp.eq.s32.totalorder %s30, 0
      %p167 = por %p165, %p166
      %s168 = ssub.s32 %s24, %s31
      %p169 = scmp.eq.s32.totalorder %s168, 0
      %s171 = sadd.s32 %s170, 1
      %s172 = scalar_select %p169, %s170, %s171
      %p175 = pneg %p169
      %p176 = scmp.eq.s32.totalorder %s24, 1
      %p177 = por %p175, %p176
      %p178 = scmp.ne.s32.totalorder %s170, %s173
      %p179 = scmp.eq.s32.totalorder %s24, 0
      %p180 = por %p178, %p179
      %p181 = scmp.ne.s32.totalorder %s170, %s173
      %p182 = scmp.eq.s32.totalorder %s29, 1
      %p183 = por %p181, %p182
      %p184 = scmp.ne.s32.totalorder %s173, %s174
      %p185 = scmp.eq.s32.totalorder %s29, 0
      %p186 = por %p184, %p185
      %p187 = scmp.ne.s32.totalorder %s173, %s174
      %p188 = scmp.eq.s32.totalorder %s30, 1
      %p189 = por %p187, %p188
      %p191 = scmp.ne.s32.totalorder %s174, %s190
      %p192 = scmp.eq.s32.totalorder %s30, 0
      %p193 = por %p191, %p192
      %s194 = ssub.s32 %s24, %s31
      %p195 = scmp.eq.s32.totalorder %s194, 0
      %s197 = sadd.s32 %s196, 1
      %s198 = scalar_select %p195, %s196, %s197
      %p201 = pneg %p195
      %p202 = scmp.eq.s32.totalorder %s24, 1
      %p203 = por %p201, %p202
      %p204 = scmp.ne.s32.totalorder %s196, %s199
      %p205 = scmp.eq.s32.totalorder %s24, 0
      %p206 = por %p204, %p205
      %p207 = scmp.ne.s32.totalorder %s196, %s199
      %p208 = scmp.eq.s32.totalorder %s29, 1
      %p209 = por %p207, %p208
      %p210 = scmp.ne.s32.totalorder %s199, %s200
      %p211 = scmp.eq.s32.totalorder %s29, 0
      %p212 = por %p210, %p211
      %p213 = scmp.ne.s32.totalorder %s199, %s200
      %p214 = scmp.eq.s32.totalorder %s30, 1
      %p215 = por %p213, %p214
      %p217 = scmp.ne.s32.totalorder %s200, %s216
      %p218 = scmp.eq.s32.totalorder %s30, 0
      %p219 = por %p217, %p218
      %p220 = scmp.le.s32.totalorder 1, %s24
      %p221 = scmp.lt.s32.totalorder %s24, 3
      %p222 = pnand %p220, %p221
      %p223 = pneg %p222
      // Predicated region
      $region9: #{tpu_custom_call.1} parent=5 // pred_check
        _
      $region10: #{tpu_custom_call.1} parent=5 // pred_check_branch
        %225 = sbr.rel (%p222) target = $region12
      $region11: #{tpu_custom_call.1} parent=5 // pred_region
        %s226 = ssub.s32 %s24, 1
        // Predicated region
        $region13: #{tpu_custom_call.1} parent=11 // pred_check
          %p227 = pneg %p97
        $region14: #{tpu_custom_call.1} parent=11 // pred_check_branch
          %229 = sbr.rel (%p227) target = $region16
        $region15: #{tpu_custom_call.1} parent=11 // pred_region
          %s231 = ssub.s32 8192, 8192
          %232 = vsyncadd [#allocation6], %s231
          %s233 = sshll.u32 [#allocation5], 4
          %s234 = int_to_ptr.vmem [resolvable:$true] %s233
          %239 = dma.hbm_to_vmem [thread:$0]  %s2, 8192, %s234, [#allocation6], 64, 64, 4
        $region16: #{tpu_custom_call.1} parent=11 // pred_fallthru
          _
        // Predicated region
        $region17: #{tpu_custom_call.1} parent=11 // pred_check
          %p240 = pneg %p118
        $region18: #{tpu_custom_call.1} parent=11 // pred_check_branch
          %242 = sbr.rel (%p240) target = $region20
        $region19: #{tpu_custom_call.1} parent=11 // pred_region
          _
        $region20: #{tpu_custom_call.1} parent=11 // pred_fallthru
          _
        // Predicated region
        $region21: #{tpu_custom_call.1} parent=11 // pred_check
          %p243 = pneg %p139
        $region22: #{tpu_custom_call.1} parent=11 // pred_check_branch
          %245 = sbr.rel (%p243) target = $region24
        $region23: #{tpu_custom_call.1} parent=11 // pred_region
          %s247 = ssub.s32 1024, 1024
          %248 = vsyncadd [#allocation6], %s247
          %s249 = sshll.u32 [#allocation7], 4
          %s250 = int_to_ptr.vmem [resolvable:$true] %s249
          %255 = dma.hbm_to_vmem [thread:$0]  %s4, 1024, %s250, [#allocation6], 64, 64, 4
        $region24: #{tpu_custom_call.1} parent=11 // pred_fallthru
          _
        // Predicated region
        $region25: #{tpu_custom_call.1} parent=11 // pred_check
          %p256 = pneg %p160
        $region26: #{tpu_custom_call.1} parent=11 // pred_check_branch
          %258 = sbr.rel (%p256) target = $region28
        $region27: #{tpu_custom_call.1} parent=11 // pred_region
          _
        $region28: #{tpu_custom_call.1} parent=11 // pred_fallthru
          _
      $region12: #{tpu_custom_call.1} parent=5 // pred_fallthru
        _
      %p259 = scmp.lt.s32.totalorder %s24, 2
      // Predicated region
      $region29: #{tpu_custom_call.1} parent=5 // pred_check
        %p260 = pneg %p259
      $region30: #{tpu_custom_call.1} parent=5 // pred_check_branch
        %262 = sbr.rel (%p260) target = $region32
      $region31: #{tpu_custom_call.1} parent=5 // pred_region
        // Predicated region
        $region33: #{tpu_custom_call.1} parent=31 // pred_check
          %p263 = pneg %p44
        $region34: #{tpu_custom_call.1} parent=31 // pred_check_branch
          %265 = sbr.rel (%p263) target = $region36
        $region35: #{tpu_custom_call.1} parent=31 // pred_region
          %s266 = smul.u32 2, %s24
          %p267 = scmp.lt.s32.totalorder %s266, 3
          %s268 = scalar_select %p267, %s266, 3
          %s269 = smul.addr %s268, 8
          %s270 = scalar_lea.vmem %s0, %s269
          %s271 = smul.u32 2, %s24
        $region36: #{tpu_custom_call.1} parent=31 // pred_fallthru
          _
        // Predicated region
        $region37: #{tpu_custom_call.1} parent=31 // pred_check
          %p272 = pneg %p70
        $region38: #{tpu_custom_call.1} parent=31 // pred_check_branch
          %274 = sbr.rel (%p272) target = $region40
        $region39: #{tpu_custom_call.1} parent=31 // pred_region
          %s275 = sand.u32 %s60, 1
          %s276 = scalar_lea.sflag [#allocation3], %s275
          %s277 = sand.u32 %s60, 1
          %s278 = smul.addr %s277, 64
          %s279 = scalar_lea.vmem [#allocation2], %s278
          %s280 = smul.u32 2, %s24
          %s282 = ssub.s32 1024, 1024
          %283 = vsyncadd %s276, %s282
          %s284 = smul.addr %s280, 8
          %s285 = smul.addr %s284, 64
          %s286 = scalar_lea.hbm %s1, %s285
          %s287 = sshll.u32 %s279, 4
          %s288 = int_to_ptr.vmem [resolvable:$true] %s287
          %293 = dma.hbm_to_vmem [thread:$0]  %s286, 1024, %s288, %s276, 512, 512, 32
        $region40: #{tpu_custom_call.1} parent=31 // pred_fallthru
          _
      $region32: #{tpu_custom_call.1} parent=5 // pred_fallthru
        _
      %p294 = scmp.le.s32.totalorder 1, %s24
      %p295 = scmp.lt.s32.totalorder %s24, 3
      %p296 = pnand %p294, %p295
      %p297 = pneg %p296
      // Predicated region
      $region41: #{tpu_custom_call.1} parent=5 // pred_check
        _
      $region42: #{tpu_custom_call.1} parent=5 // pred_check_branch
        %299 = sbr.rel (%p296) target = $region44
      $region43: #{tpu_custom_call.1} parent=5 // pred_region
        %s300 = ssub.s32 %s24, 1
        %s301 = sand.u32 %s63, 1
        %s302 = scalar_lea.sflag [#allocation3], %s301
        %s303 = sand.u32 %s63, 1
        %s304 = smul.addr %s303, 64
        %s305 = scalar_lea.vmem [#allocation2], %s304
        // Predicated region
        $region45: #{tpu_custom_call.1} parent=43 // pred_check
          %p306 = pneg %p76
        $region46: #{tpu_custom_call.1} parent=43 // pred_check_branch
          %308 = sbr.rel (%p306) target = $region48
        $region47: #{tpu_custom_call.1} parent=43 // pred_region
          %309 = dma.done %s302, 1024
        $region48: #{tpu_custom_call.1} parent=43 // pred_fallthru
          _
        // Predicated region
        $region49: #{tpu_custom_call.1} parent=43 // pred_check
          %p310 = pneg %p97
        $region50: #{tpu_custom_call.1} parent=43 // pred_check_branch
          %312 = sbr.rel (%p310) target = $region52
        $region51: #{tpu_custom_call.1} parent=43 // pred_region
          %313 = dma.done [#allocation6], 8192
        $region52: #{tpu_custom_call.1} parent=43 // pred_fallthru
          _
        // Predicated region
        $region53: #{tpu_custom_call.1} parent=43 // pred_check
          %p314 = pneg %p139
        $region54: #{tpu_custom_call.1} parent=43 // pred_check_branch
          %316 = sbr.rel (%p314) target = $region56
        $region55: #{tpu_custom_call.1} parent=43 // pred_region
          %317 = dma.done [#allocation6], 1024
        $region56: #{tpu_custom_call.1} parent=43 // pred_fallthru
          _
        %s318 = smul.u32 2, %s29
        %p319 = scmp.lt.s32.totalorder %s318, 3
        %s320 = scalar_select %p319, %s318, 3
        %s321 = smul.addr %s320, 8
        %s322 = scalar_lea.vmem %s0, %s321
        %p323 = pneg %p50
        %p324 = pneg %p47
        %s325 = sand.u32 %s63, 1
        %s326 = scalar_lea.sflag [#allocation3], %s325
        %s327 = sand.u32 %s63, 1
        %s328 = smul.addr %s327, 64
        %s329 = scalar_lea.vmem [#allocation2], %s328
        %p330 = pneg %p76
        %p331 = pneg %p73
        %p332 = pneg %p97
        %p333 = pneg %p94
        %p334 = pneg %p118
        %p335 = pneg %p115
        %p336 = pneg %p139
        %p337 = pneg %p136
        %p338 = pneg %p160
        %p339 = pneg %p157
        %p340 = pneg %p186
        %p341 = pneg %p183
        %s342 = sand.u32 %s173, 1
        %s343 = scalar_lea.sflag [#allocation4], %s342
        %s344 = sand.u32 %s173, 1
        %s345 = smul.addr %s344, 16
        %s346 = scalar_lea.vmem [#allocation8], %s345
        %p347 = pneg %p212
        %p348 = pneg %p209
        %s349 = sand.u32 %s199, 1
        %s350 = scalar_lea.sflag [#allocation10], %s349
        %s351 = sand.u32 %s199, 1
        %s352 = smul.addr %s351, 8
        %s353 = scalar_lea.vmem [#allocation9], %s352
        %s354 = smul.u32 2, %s29
        %p355 = scmp.lt.s32.totalorder %s354, 3
        %s356 = scalar_select %p355, %s354, 3
        %s357 = smul.addr %s356, 8
        %s358 = scalar_lea.vmem %s0, %s357
        %s359 = smul.u32 2, %s29
        %s360 = smul.u32 2, %s29
        %s361 = smul.u32 2, %s29
        %p363 = scmp.lt.s32.totalorder %s29, 1
        %v364 = vld [vmem:[%s305] sm:$0xff]
        %v365 = vld [vmem:[%s305 + $0x8] sm:$0xff]
        %v366 = vld [vmem:[%s305 + $0x10] sm:$0xff]
        %v367 = vld [vmem:[%s305 + $0x18] sm:$0xff]
        %v368 = vld [vmem:[%s305 + $0x20] sm:$0xff]
        %v369 = vld [vmem:[%s305 + $0x28] sm:$0xff]
        %v370 = vld [vmem:[%s305 + $0x30] sm:$0xff]
        %v371 = vld [vmem:[%s305 + $0x38] sm:$0xff]
        %v372 = vld [vmem:[#allocation5] sm:$0xf]
        %v373 = vld [vmem:[#allocation5 + $0x4] sm:$0xf]
        %v374 = vld [vmem:[#allocation5 + $0x8] sm:$0xf]
        %v375 = vld [vmem:[#allocation5 + $0xc] sm:$0xf]
        %v376 = vld [vmem:[#allocation5 + $0x10] sm:$0xf]
        %v377 = vld [vmem:[#allocation5 + $0x14] sm:$0xf]
        %v378 = vld [vmem:[#allocation5 + $0x18] sm:$0xf]
        %v379 = vld [vmem:[#allocation5 + $0x1c] sm:$0xf]
        %v380 = vld [vmem:[#allocation5 + $0x20] sm:$0xf]
        %v381 = vld [vmem:[#allocation5 + $0x24] sm:$0xf]
        %v382 = vld [vmem:[#allocation5 + $0x28] sm:$0xf]
        %v383 = vld [vmem:[#allocation5 + $0x2c] sm:$0xf]
        %v384 = vld [vmem:[#allocation5 + $0x30] sm:$0xf]
        %v385 = vld [vmem:[#allocation5 + $0x34] sm:$0xf]
        %v386 = vld [vmem:[#allocation5 + $0x38] sm:$0xf]
        %v387 = vld [vmem:[#allocation5 + $0x3c] sm:$0xf]
        %v388 = vld [vmem:[#allocation5 + $0x40] sm:$0xf]
        %v389 = vld [vmem:[#allocation5 + $0x44] sm:$0xf]
        %v390 = vld [vmem:[#allocation5 + $0x48] sm:$0xf]
        %v391 = vld [vmem:[#allocation5 + $0x4c] sm:$0xf]
        %v392 = vld [vmem:[#allocation5 + $0x50] sm:$0xf]
        %v393 = vld [vmem:[#allocation5 + $0x54] sm:$0xf]
        %v394 = vld [vmem:[#allocation5 + $0x58] sm:$0xf]
        %v395 = vld [vmem:[#allocation5 + $0x5c] sm:$0xf]
        %v396 = vld [vmem:[#allocation5 + $0x60] sm:$0xf]
        %v397 = vld [vmem:[#allocation5 + $0x64] sm:$0xf]
        %v398 = vld [vmem:[#allocation5 + $0x68] sm:$0xf]
        %v399 = vld [vmem:[#allocation5 + $0x6c] sm:$0xf]
        %v400 = vld [vmem:[#allocation5 + $0x70] sm:$0xf]
        %v401 = vld [vmem:[#allocation5 + $0x74] sm:$0xf]
        %v402 = vld [vmem:[#allocation5 + $0x78] sm:$0xf]
        %v403 = vld [vmem:[#allocation5 + $0x7c] sm:$0xf]
        %v404 = vld [vmem:[#allocation5 + $0x80] sm:$0xf]
        %v405 = vld [vmem:[#allocation5 + $0x84] sm:$0xf]
        %v406 = vld [vmem:[#allocation5 + $0x88] sm:$0xf]
        %v407 = vld [vmem:[#allocation5 + $0x8c] sm:$0xf]
        %v408 = vld [vmem:[#allocation5 + $0x90] sm:$0xf]
        %v409 = vld [vmem:[#allocation5 + $0x94] sm:$0xf]
        %v410 = vld [vmem:[#allocation5 + $0x98] sm:$0xf]
        %v411 = vld [vmem:[#allocation5 + $0x9c] sm:$0xf]
        %v412 = vld [vmem:[#allocation5 + $0xa0] sm:$0xf]
        %v413 = vld [vmem:[#allocation5 + $0xa4] sm:$0xf]
        %v414 = vld [vmem:[#allocation5 + $0xa8] sm:$0xf]
        %v415 = vld [vmem:[#allocation5 + $0xac] sm:$0xf]
        %v416 = vld [vmem:[#allocation5 + $0xb0] sm:$0xf]
        %v417 = vld [vmem:[#allocation5 + $0xb4] sm:$0xf]
        %v418 = vld [vmem:[#allocation5 + $0xb8] sm:$0xf]
        %v419 = vld [vmem:[#allocation5 + $0xbc] sm:$0xf]
        %v420 = vld [vmem:[#allocation5 + $0xc0] sm:$0xf]
        %v421 = vld [vmem:[#allocation5 + $0xc4] sm:$0xf]
        %v422 = vld [vmem:[#allocation5 + $0xc8] sm:$0xf]
        %v423 = vld [vmem:[#allocation5 + $0xcc] sm:$0xf]
        %v424 = vld [vmem:[#allocation5 + $0xd0] sm:$0xf]
        %v425 = vld [vmem:[#allocation5 + $0xd4] sm:$0xf]
        %v426 = vld [vmem:[#allocation5 + $0xd8] sm:$0xf]
        %v427 = vld [vmem:[#allocation5 + $0xdc] sm:$0xf]
        %v428 = vld [vmem:[#allocation5 + $0xe0] sm:$0xf]
        %v429 = vld [vmem:[#allocation5 + $0xe4] sm:$0xf]
        %v430 = vld [vmem:[#allocation5 + $0xe8] sm:$0xf]
        %v431 = vld [vmem:[#allocation5 + $0xec] sm:$0xf]
        %v432 = vld [vmem:[#allocation5 + $0xf0] sm:$0xf]
        %v433 = vld [vmem:[#allocation5 + $0xf4] sm:$0xf]
        %v434 = vld [vmem:[#allocation5 + $0xf8] sm:$0xf]
        %v435 = vld [vmem:[#allocation5 + $0xfc] sm:$0xf]
        %v436 = vld [vmem:[#allocation5 + $0x100] sm:$0xf]
        %v437 = vld [vmem:[#allocation5 + $0x104] sm:$0xf]
        %v438 = vld [vmem:[#allocation5 + $0x108] sm:$0xf]
        %v439 = vld [vmem:[#allocation5 + $0x10c] sm:$0xf]
        %v440 = vld [vmem:[#allocation5 + $0x110] sm:$0xf]
        %v441 = vld [vmem:[#allocation5 + $0x114] sm:$0xf]
        %v442 = vld [vmem:[#allocation5 + $0x118] sm:$0xf]
        %v443 = vld [vmem:[#allocation5 + $0x11c] sm:$0xf]
        %v444 = vld [vmem:[#allocation5 + $0x120] sm:$0xf]
        %v445 = vld [vmem:[#allocation5 + $0x124] sm:$0xf]
        %v446 = vld [vmem:[#allocation5 + $0x128] sm:$0xf]
        %v447 = vld [vmem:[#allocation5 + $0x12c] sm:$0xf]
        %v448 = vld [vmem:[#allocation5 + $0x130] sm:$0xf]
        %v449 = vld [vmem:[#allocation5 + $0x134] sm:$0xf]
        %v450 = vld [vmem:[#allocation5 + $0x138] sm:$0xf]
        %v451 = vld [vmem:[#allocation5 + $0x13c] sm:$0xf]
        %v452 = vld [vmem:[#allocation5 + $0x140] sm:$0xf]
        %v453 = vld [vmem:[#allocation5 + $0x144] sm:$0xf]
        %v454 = vld [vmem:[#allocation5 + $0x148] sm:$0xf]
        %v455 = vld [vmem:[#allocation5 + $0x14c] sm:$0xf]
        %v456 = vld [vmem:[#allocation5 + $0x150] sm:$0xf]
        %v457 = vld [vmem:[#allocation5 + $0x154] sm:$0xf]
        %v458 = vld [vmem:[#allocation5 + $0x158] sm:$0xf]
        %v459 = vld [vmem:[#allocation5 + $0x15c] sm:$0xf]
        %v460 = vld [vmem:[#allocation5 + $0x160] sm:$0xf]
        %v461 = vld [vmem:[#allocation5 + $0x164] sm:$0xf]
        %v462 = vld [vmem:[#allocation5 + $0x168] sm:$0xf]
        %v463 = vld [vmem:[#allocation5 + $0x16c] sm:$0xf]
        %v464 = vld [vmem:[#allocation5 + $0x170] sm:$0xf]
        %v465 = vld [vmem:[#allocation5 + $0x174] sm:$0xf]
        %v466 = vld [vmem:[#allocation5 + $0x178] sm:$0xf]
        %v467 = vld [vmem:[#allocation5 + $0x17c] sm:$0xf]
        %v468 = vld [vmem:[#allocation5 + $0x180] sm:$0xf]
        %v469 = vld [vmem:[#allocation5 + $0x184] sm:$0xf]
        %v470 = vld [vmem:[#allocation5 + $0x188] sm:$0xf]
        %v471 = vld [vmem:[#allocation5 + $0x18c] sm:$0xf]
        %v472 = vld [vmem:[#allocation5 + $0x190] sm:$0xf]
        %v473 = vld [vmem:[#allocation5 + $0x194] sm:$0xf]
        %v474 = vld [vmem:[#allocation5 + $0x198] sm:$0xf]
        %v475 = vld [vmem:[#allocation5 + $0x19c] sm:$0xf]
        %v476 = vld [vmem:[#allocation5 + $0x1a0] sm:$0xf]
        %v477 = vld [vmem:[#allocation5 + $0x1a4] sm:$0xf]
        %v478 = vld [vmem:[#allocation5 + $0x1a8] sm:$0xf]
        %v479 = vld [vmem:[#allocation5 + $0x1ac] sm:$0xf]
        %v480 = vld [vmem:[#allocation5 + $0x1b0] sm:$0xf]
        %v481 = vld [vmem:[#allocation5 + $0x1b4] sm:$0xf]
        %v482 = vld [vmem:[#allocation5 + $0x1b8] sm:$0xf]
        %v483 = vld [vmem:[#allocation5 + $0x1bc] sm:$0xf]
        %v484 = vld [vmem:[#allocation5 + $0x1c0] sm:$0xf]
        %v485 = vld [vmem:[#allocation5 + $0x1c4] sm:$0xf]
        %v486 = vld [vmem:[#allocation5 + $0x1c8] sm:$0xf]
        %v487 = vld [vmem:[#allocation5 + $0x1cc] sm:$0xf]
        %v488 = vld [vmem:[#allocation5 + $0x1d0] sm:$0xf]
        %v489 = vld [vmem:[#allocation5 + $0x1d4] sm:$0xf]
        %v490 = vld [vmem:[#allocation5 + $0x1d8] sm:$0xf]
        %v491 = vld [vmem:[#allocation5 + $0x1dc] sm:$0xf]
        %v492 = vld [vmem:[#allocation5 + $0x1e0] sm:$0xf]
        %v493 = vld [vmem:[#allocation5 + $0x1e4] sm:$0xf]
        %v494 = vld [vmem:[#allocation5 + $0x1e8] sm:$0xf]
        %v495 = vld [vmem:[#allocation5 + $0x1ec] sm:$0xf]
        %v496 = vld [vmem:[#allocation5 + $0x1f0] sm:$0xf]
        %v497 = vld [vmem:[#allocation5 + $0x1f4] sm:$0xf]
        %v498 = vld [vmem:[#allocation5 + $0x1f8] sm:$0xf]
        %v499 = vld [vmem:[#allocation5 + $0x1fc] sm:$0xf]
        %v500 = vld [vmem:[%s3] sm:$0x1]
        %v502 = vlaneseq
        %v503 = vshrl.u32 %v502, 7
        %v504 = vsub.s32 0, %v503
        %v505 = vrot.slane %v500, %v504
        %v515 = vunpack.c.l.b16 %v364
        %v516 = vunpack.c.h.b16 %v364
        %v517 = vunpack.c.l.b16 %v365
        %v518 = vunpack.c.h.b16 %v365
        %v519 = vunpack.c.l.b16 %v366
        %v520 = vunpack.c.h.b16 %v366
        %v521 = vunpack.c.l.b16 %v367
        %v522 = vunpack.c.h.b16 %v367
        %v523 = vunpack.c.l.b16 %v368
        %v524 = vunpack.c.h.b16 %v368
        %v525 = vunpack.c.l.b16 %v369
        %v526 = vunpack.c.h.b16 %v369
        %v527 = vunpack.c.l.b16 %v370
        %v528 = vunpack.c.h.b16 %v370
        %v529 = vunpack.c.l.b16 %v371
        %v530 = vunpack.c.h.b16 %v371
        %v531 = vpack.c.b16 %v523, %v515
        %v532 = vpack.c.b16 %v524, %v516
        %v533 = vpack.c.b16 %v525, %v517
        %v534 = vpack.c.b16 %v526, %v518
        %v535 = vpack.c.b16 %v527, %v519
        %v536 = vpack.c.b16 %v528, %v520
        %v537 = vpack.c.b16 %v529, %v521
        %v538 = vpack.c.b16 %v530, %v522
        %v675 = vunpack.c.l.b16 %v372
        %v676 = vunpack.c.l.b16 %v373
        %v677 = vunpack.c.l.b16 %v374
        %v678 = vunpack.c.l.b16 %v375
        %v679 = vunpack.c.l.b16 %v376
        %v680 = vunpack.c.l.b16 %v377
        %v681 = vunpack.c.l.b16 %v378
        %v682 = vunpack.c.l.b16 %v379
        %v683 = vunpack.c.l.b16 %v380
        %v684 = vunpack.c.l.b16 %v381
        %v685 = vunpack.c.l.b16 %v382
        %v686 = vunpack.c.l.b16 %v383
        %v687 = vunpack.c.l.b16 %v384
        %v688 = vunpack.c.l.b16 %v385
        %v689 = vunpack.c.l.b16 %v386
        %v690 = vunpack.c.l.b16 %v387
        %v691 = vunpack.c.l.b16 %v388
        %v692 = vunpack.c.l.b16 %v389
        %v693 = vunpack.c.l.b16 %v390
        %v694 = vunpack.c.l.b16 %v391
        %v695 = vunpack.c.l.b16 %v392
        %v696 = vunpack.c.l.b16 %v393
        %v697 = vunpack.c.l.b16 %v394
        %v698 = vunpack.c.l.b16 %v395
        %v699 = vunpack.c.l.b16 %v396
        %v700 = vunpack.c.l.b16 %v397
        %v701 = vunpack.c.l.b16 %v398
        %v702 = vunpack.c.l.b16 %v399
        %v703 = vunpack.c.l.b16 %v400
        %v704 = vunpack.c.l.b16 %v401
        %v705 = vunpack.c.l.b16 %v402
        %v706 = vunpack.c.l.b16 %v403
        %v707 = vunpack.c.l.b16 %v404
        %v708 = vunpack.c.l.b16 %v405
        %v709 = vunpack.c.l.b16 %v406
        %v710 = vunpack.c.l.b16 %v407
        %v711 = vunpack.c.l.b16 %v408
        %v712 = vunpack.c.l.b16 %v409
        %v713 = vunpack.c.l.b16 %v410
        %v714 = vunpack.c.l.b16 %v411
        %v715 = vunpack.c.l.b16 %v412
        %v716 = vunpack.c.l.b16 %v413
        %v717 = vunpack.c.l.b16 %v414
        %v718 = vunpack.c.l.b16 %v415
        %v719 = vunpack.c.l.b16 %v416
        %v720 = vunpack.c.l.b16 %v417
        %v721 = vunpack.c.l.b16 %v418
        %v722 = vunpack.c.l.b16 %v419
        %v723 = vunpack.c.l.b16 %v420
        %v724 = vunpack.c.l.b16 %v421
        %v725 = vunpack.c.l.b16 %v422
        %v726 = vunpack.c.l.b16 %v423
        %v727 = vunpack.c.l.b16 %v424
        %v728 = vunpack.c.l.b16 %v425
        %v729 = vunpack.c.l.b16 %v426
        %v730 = vunpack.c.l.b16 %v427
        %v731 = vunpack.c.l.b16 %v428
        %v732 = vunpack.c.l.b16 %v429
        %v733 = vunpack.c.l.b16 %v430
        %v734 = vunpack.c.l.b16 %v431
        %v735 = vunpack.c.l.b16 %v432
        %v736 = vunpack.c.l.b16 %v433
        %v737 = vunpack.c.l.b16 %v434
        %v738 = vunpack.c.l.b16 %v435
        %v739 = vunpack.c.l.b16 %v436
        %v740 = vunpack.c.l.b16 %v437
        %v741 = vunpack.c.l.b16 %v438
        %v742 = vunpack.c.l.b16 %v439
        %v743 = vunpack.c.l.b16 %v440
        %v744 = vunpack.c.l.b16 %v441
        %v745 = vunpack.c.l.b16 %v442
        %v746 = vunpack.c.l.b16 %v443
        %v747 = vunpack.c.l.b16 %v444
        %v748 = vunpack.c.l.b16 %v445
        %v749 = vunpack.c.l.b16 %v446
        %v750 = vunpack.c.l.b16 %v447
        %v751 = vunpack.c.l.b16 %v448
        %v752 = vunpack.c.l.b16 %v449
        %v753 = vunpack.c.l.b16 %v450
        %v754 = vunpack.c.l.b16 %v451
        %v755 = vunpack.c.l.b16 %v452
        %v756 = vunpack.c.l.b16 %v453
        %v757 = vunpack.c.l.b16 %v454
        %v758 = vunpack.c.l.b16 %v455
        %v759 = vunpack.c.l.b16 %v456
        %v760 = vunpack.c.l.b16 %v457
        %v761 = vunpack.c.l.b16 %v458
        %v762 = vunpack.c.l.b16 %v459
        %v763 = vunpack.c.l.b16 %v460
        %v764 = vunpack.c.l.b16 %v461
        %v765 = vunpack.c.l.b16 %v462
        %v766 = vunpack.c.l.b16 %v463
        %v767 = vunpack.c.l.b16 %v464
        %v768 = vunpack.c.l.b16 %v465
        %v769 = vunpack.c.l.b16 %v466
        %v770 = vunpack.c.l.b16 %v467
        %v771 = vunpack.c.l.b16 %v468
        %v772 = vunpack.c.l.b16 %v469
        %v773 = vunpack.c.l.b16 %v470
        %v774 = vunpack.c.l.b16 %v471
        %v775 = vunpack.c.l.b16 %v472
        %v776 = vunpack.c.l.b16 %v473
        %v777 = vunpack.c.l.b16 %v474
        %v778 = vunpack.c.l.b16 %v475
        %v779 = vunpack.c.l.b16 %v476
        %v780 = vunpack.c.l.b16 %v477
        %v781 = vunpack.c.l.b16 %v478
        %v782 = vunpack.c.l.b16 %v479
        %v783 = vunpack.c.l.b16 %v480
        %v784 = vunpack.c.l.b16 %v481
        %v785 = vunpack.c.l.b16 %v482
        %v786 = vunpack.c.l.b16 %v483
        %v787 = vunpack.c.l.b16 %v484
        %v788 = vunpack.c.l.b16 %v485
        %v789 = vunpack.c.l.b16 %v486
        %v790 = vunpack.c.l.b16 %v487
        %v791 = vunpack.c.l.b16 %v488
        %v792 = vunpack.c.l.b16 %v489
        %v793 = vunpack.c.l.b16 %v490
        %v794 = vunpack.c.l.b16 %v491
        %v795 = vunpack.c.l.b16 %v492
        %v796 = vunpack.c.l.b16 %v493
        %v797 = vunpack.c.l.b16 %v494
        %v798 = vunpack.c.l.b16 %v495
        %v799 = vunpack.c.l.b16 %v496
        %v800 = vunpack.c.l.b16 %v497
        %v801 = vunpack.c.l.b16 %v498
        %v802 = vunpack.c.l.b16 %v499
        %v803 = vpack.c.b16 %v676, %v675
        %v804 = vpack.c.b16 %v678, %v677
        %v805 = vpack.c.b16 %v680, %v679
        %v806 = vpack.c.b16 %v682, %v681
        %v807 = vpack.c.b16 %v684, %v683
        %v808 = vpack.c.b16 %v686, %v685
        %v809 = vpack.c.b16 %v688, %v687
        %v810 = vpack.c.b16 %v690, %v689
        %v811 = vpack.c.b16 %v692, %v691
        %v812 = vpack.c.b16 %v694, %v693
        %v813 = vpack.c.b16 %v696, %v695
        %v814 = vpack.c.b16 %v698, %v697
        %v815 = vpack.c.b16 %v700, %v699
        %v816 = vpack.c.b16 %v702, %v701
        %v817 = vpack.c.b16 %v704, %v703
        %v818 = vpack.c.b16 %v706, %v705
        %v819 = vpack.c.b16 %v708, %v707
        %v820 = vpack.c.b16 %v710, %v709
        %v821 = vpack.c.b16 %v712, %v711
        %v822 = vpack.c.b16 %v714, %v713
        %v823 = vpack.c.b16 %v716, %v715
        %v824 = vpack.c.b16 %v718, %v717
        %v825 = vpack.c.b16 %v720, %v719
        %v826 = vpack.c.b16 %v722, %v721
        %v827 = vpack.c.b16 %v724, %v723
        %v828 = vpack.c.b16 %v726, %v725
        %v829 = vpack.c.b16 %v728, %v727
        %v830 = vpack.c.b16 %v730, %v729
        %v831 = vpack.c.b16 %v732, %v731
        %v832 = vpack.c.b16 %v734, %v733
        %v833 = vpack.c.b16 %v736, %v735
        %v834 = vpack.c.b16 %v738, %v737
        %v835 = vpack.c.b16 %v740, %v739
        %v836 = vpack.c.b16 %v742, %v741
        %v837 = vpack.c.b16 %v744, %v743
        %v838 = vpack.c.b16 %v746, %v745
        %v839 = vpack.c.b16 %v748, %v747
        %v840 = vpack.c.b16 %v750, %v749
        %v841 = vpack.c.b16 %v752, %v751
        %v842 = vpack.c.b16 %v754, %v753
        %v843 = vpack.c.b16 %v756, %v755
        %v844 = vpack.c.b16 %v758, %v757
        %v845 = vpack.c.b16 %v760, %v759
        %v846 = vpack.c.b16 %v762, %v761
        %v847 = vpack.c.b16 %v764, %v763
        %v848 = vpack.c.b16 %v766, %v765
        %v849 = vpack.c.b16 %v768, %v767
        %v850 = vpack.c.b16 %v770, %v769
        %v851 = vpack.c.b16 %v772, %v771
        %v852 = vpack.c.b16 %v774, %v773
        %v853 = vpack.c.b16 %v776, %v775
        %v854 = vpack.c.b16 %v778, %v777
        %v855 = vpack.c.b16 %v780, %v779
        %v856 = vpack.c.b16 %v782, %v781
        %v857 = vpack.c.b16 %v784, %v783
        %v858 = vpack.c.b16 %v786, %v785
        %v859 = vpack.c.b16 %v788, %v787
        %v860 = vpack.c.b16 %v790, %v789
        %v861 = vpack.c.b16 %v792, %v791
        %v862 = vpack.c.b16 %v794, %v793
        %v863 = vpack.c.b16 %v796, %v795
        %v864 = vpack.c.b16 %v798, %v797
        %v865 = vpack.c.b16 %v800, %v799
        %v866 = vpack.c.b16 %v802, %v801
        %931 = vmatprep.subr.bf16.mxu0 0
        %932 = vmatpush1.bf16.msra.mxu0 %v803
        %933 = vmatprep.subr.bf16.mxu0 0
        %934 = vmatpush1.bf16.msra.mxu0 %v804
        %935 = vmatprep.subr.bf16.mxu0 0
        %936 = vmatpush1.bf16.msra.mxu0 %v805
        %937 = vmatprep.subr.bf16.mxu0 0
        %938 = vmatpush1.bf16.msra.mxu0 %v806
        %939 = vmatprep.subr.bf16.mxu0 0
        %940 = vmatpush1.bf16.msra.mxu0 %v807
        %941 = vmatprep.subr.bf16.mxu0 0
        %942 = vmatpush1.bf16.msra.mxu0 %v808
        %943 = vmatprep.subr.bf16.mxu0 0
        %944 = vmatpush1.bf16.msra.mxu0 %v809
        %945 = vmatprep.subr.bf16.mxu0 0
        %946 = vmatpush1.bf16.msra.mxu0 %v810
        %947 = vmatprep.subr.bf16.mxu0 0
        %948 = vmatpush1.bf16.msra.mxu0 %v811
        %949 = vmatprep.subr.bf16.mxu0 0
        %950 = vmatpush1.bf16.msra.mxu0 %v812
        %951 = vmatprep.subr.bf16.mxu0 0
        %952 = vmatpush1.bf16.msra.mxu0 %v813
        %953 = vmatprep.subr.bf16.mxu0 0
        %954 = vmatpush1.bf16.msra.mxu0 %v814
        %955 = vmatprep.subr.bf16.mxu0 0
        %956 = vmatpush1.bf16.msra.mxu0 %v815
        %957 = vmatprep.subr.bf16.mxu0 0
        %958 = vmatpush1.bf16.msra.mxu0 %v816
        %959 = vmatprep.subr.bf16.mxu0 0
        %960 = vmatpush1.bf16.msra.mxu0 %v817
        %961 = vmatprep.subr.bf16.mxu0 0
        %962 = vmatpush1.bf16.msra.mxu0 %v818
        %963 = vmatprep.mubr.bf16.mxu0 %v532
        %964 = vmatmul.mubr.bf16.gmra.mrb[0].mxu0 %v531
        %v965 = vpop.f32.mrb[0].mxu0
        %v966 = vadd.f32 %v505, %v965
        %v967 = vpop.f32.mrb[0].mxu0
        %v968 = vpop.f32.mrb[0].mxu0
        %v969 = vadd.f32 %v505, %v968
        %v970 = vpop.f32.mrb[0].mxu0
        %971 = vdwg.mxu0
        %972 = vmatprep.subr.bf16.mxu0 0
        %973 = vmatpush1.bf16.msra.mxu0 %v819
        %974 = vmatprep.subr.bf16.mxu0 0
        %975 = vmatpush1.bf16.msra.mxu0 %v820
        %976 = vmatprep.subr.bf16.mxu0 0
        %977 = vmatpush1.bf16.msra.mxu0 %v821
        %978 = vmatprep.subr.bf16.mxu0 0
        %979 = vmatpush1.bf16.msra.mxu0 %v822
        %980 = vmatprep.subr.bf16.mxu0 0
        %981 = vmatpush1.bf16.msra.mxu0 %v823
        %982 = vmatprep.subr.bf16.mxu0 0
        %983 = vmatpush1.bf16.msra.mxu0 %v824
        %984 = vmatprep.subr.bf16.mxu0 0
        %985 = vmatpush1.bf16.msra.mxu0 %v825
        %986 = vmatprep.subr.bf16.mxu0 0
        %987 = vmatpush1.bf16.msra.mxu0 %v826
        %988 = vmatprep.subr.bf16.mxu0 0
        %989 = vmatpush1.bf16.msra.mxu0 %v827
        %990 = vmatprep.subr.bf16.mxu0 0
        %991 = vmatpush1.bf16.msra.mxu0 %v828
        %992 = vmatprep.subr.bf16.mxu0 0
        %993 = vmatpush1.bf16.msra.mxu0 %v829
        %994 = vmatprep.subr.bf16.mxu0 0
        %995 = vmatpush1.bf16.msra.mxu0 %v830
        %996 = vmatprep.subr.bf16.mxu0 0
        %997 = vmatpush1.bf16.msra.mxu0 %v831
        %998 = vmatprep.subr.bf16.mxu0 0
        %999 = vmatpush1.bf16.msra.mxu0 %v832
        %1000 = vmatprep.subr.bf16.mxu0 0
        %1001 = vmatpush1.bf16.msra.mxu0 %v833
        %1002 = vmatprep.subr.bf16.mxu0 0
        %1003 = vmatpush1.bf16.msra.mxu0 %v834
        %1004 = vmatprep.mubr.bf16.mxu0 %v534
        %1005 = vmatmul.mubr.bf16.gmra.mrb[0].mxu0 %v533
        %v1006 = vpop.f32.mrb[0].mxu0
        %v1007 = vadd.f32 %v966, %v1006
        %v1008 = vpop.f32.mrb[0].mxu0
        %v1009 = vpop.f32.mrb[0].mxu0
        %v1010 = vadd.f32 %v969, %v1009
        %v1011 = vpop.f32.mrb[0].mxu0
        %1012 = vdwg.mxu0
        %1013 = vmatprep.subr.bf16.mxu0 0
        %1014 = vmatpush1.bf16.msra.mxu0 %v835
        %1015 = vmatprep.subr.bf16.mxu0 0
        %1016 = vmatpush1.bf16.msra.mxu0 %v836
        %1017 = vmatprep.subr.bf16.mxu0 0
        %1018 = vmatpush1.bf16.msra.mxu0 %v837
        %1019 = vmatprep.subr.bf16.mxu0 0
        %1020 = vmatpush1.bf16.msra.mxu0 %v838
        %1021 = vmatprep.subr.bf16.mxu0 0
        %1022 = vmatpush1.bf16.msra.mxu0 %v839
        %1023 = vmatprep.subr.bf16.mxu0 0
        %1024 = vmatpush1.bf16.msra.mxu0 %v840
        %1025 = vmatprep.subr.bf16.mxu0 0
        %1026 = vmatpush1.bf16.msra.mxu0 %v841
        %1027 = vmatprep.subr.bf16.mxu0 0
        %1028 = vmatpush1.bf16.msra.mxu0 %v842
        %1029 = vmatprep.subr.bf16.mxu0 0
        %1030 = vmatpush1.bf16.msra.mxu0 %v843
        %1031 = vmatprep.subr.bf16.mxu0 0
        %1032 = vmatpush1.bf16.msra.mxu0 %v844
        %1033 = vmatprep.subr.bf16.mxu0 0
        %1034 = vmatpush1.bf16.msra.mxu0 %v845
        %1035 = vmatprep.subr.bf16.mxu0 0
        %1036 = vmatpush1.bf16.msra.mxu0 %v846
        %1037 = vmatprep.subr.bf16.mxu0 0
        %1038 = vmatpush1.bf16.msra.mxu0 %v847
        %1039 = vmatprep.subr.bf16.mxu0 0
        %1040 = vmatpush1.bf16.msra.mxu0 %v848
        %1041 = vmatprep.subr.bf16.mxu0 0
        %1042 = vmatpush1.bf16.msra.mxu0 %v849
        %1043 = vmatprep.subr.bf16.mxu0 0
        %1044 = vmatpush1.bf16.msra.mxu0 %v850
        %1045 = vmatprep.mubr.bf16.mxu0 %v536
        %1046 = vmatmul.mubr.bf16.gmra.mrb[0].mxu0 %v535
        %v1047 = vpop.f32.mrb[0].mxu0
        %v1048 = vadd.f32 %v1007, %v1047
        %v1049 = vpop.f32.mrb[0].mxu0
        %v1050 = vpop.f32.mrb[0].mxu0
        %v1051 = vadd.f32 %v1010, %v1050
        %v1052 = vpop.f32.mrb[0].mxu0
        %1053 = vdwg.mxu0
        %1054 = vmatprep.subr.bf16.mxu0 0
        %1055 = vmatpush1.bf16.msra.mxu0 %v851
        %1056 = vmatprep.subr.bf16.mxu0 0
        %1057 = vmatpush1.bf16.msra.mxu0 %v852
        %1058 = vmatprep.subr.bf16.mxu0 0
        %1059 = vmatpush1.bf16.msra.mxu0 %v853
        %1060 = vmatprep.subr.bf16.mxu0 0
        %1061 = vmatpush1.bf16.msra.mxu0 %v854
        %1062 = vmatprep.subr.bf16.mxu0 0
        %1063 = vmatpush1.bf16.msra.mxu0 %v855
        %1064 = vmatprep.subr.bf16.mxu0 0
        %1065 = vmatpush1.bf16.msra.mxu0 %v856
        %1066 = vmatprep.subr.bf16.mxu0 0
        %1067 = vmatpush1.bf16.msra.mxu0 %v857
        %1068 = vmatprep.subr.bf16.mxu0 0
        %1069 = vmatpush1.bf16.msra.mxu0 %v858
        %1070 = vmatprep.subr.bf16.mxu0 0
        %1071 = vmatpush1.bf16.msra.mxu0 %v859
        %1072 = vmatprep.subr.bf16.mxu0 0
        %1073 = vmatpush1.bf16.msra.mxu0 %v860
        %1074 = vmatprep.subr.bf16.mxu0 0
        %1075 = vmatpush1.bf16.msra.mxu0 %v861
        %1076 = vmatprep.subr.bf16.mxu0 0
        %1077 = vmatpush1.bf16.msra.mxu0 %v862
        %1078 = vmatprep.subr.bf16.mxu0 0
        %1079 = vmatpush1.bf16.msra.mxu0 %v863
        %1080 = vmatprep.subr.bf16.mxu0 0
        %1081 = vmatpush1.bf16.msra.mxu0 %v864
        %1082 = vmatprep.subr.bf16.mxu0 0
        %1083 = vmatpush1.bf16.msra.mxu0 %v865
        %1084 = vmatprep.subr.bf16.mxu0 0
        %1085 = vmatpush1.bf16.msra.mxu0 %v866
        %1086 = vmatprep.mubr.bf16.mxu0 %v538
        %1087 = vmatmul.mubr.bf16.gmra.mrb[0].mxu0 %v537
        %v1088 = vpop.f32.mrb[0].mxu0
        %v1089 = vadd.f32 %v1048, %v1088
        %v1090 = vpop.f32.mrb[0].mxu0
        %v1091 = vpop.f32.mrb[0].mxu0
        %v1092 = vadd.f32 %v1051, %v1091
        %v1093 = vpop.f32.mrb[0].mxu0
        %1094 = vdwg.mxu0
        %v1095 = vmax.f32 %v1089, 0.0
        %v1096 = vmax.f32 %v1092, 0.0
        %v1097 = vpack.c.bf16 %v1096, %v1095
        %v1098 = vld [vmem:[#allocation7] sm:$0xf]
        %v1099 = vld [vmem:[#allocation7 + $0x4] sm:$0xf]
        %v1100 = vld [vmem:[#allocation7 + $0x8] sm:$0xf]
        %v1101 = vld [vmem:[#allocation7 + $0xc] sm:$0xf]
        %v1102 = vld [vmem:[#allocation7 + $0x10] sm:$0xf]
        %v1103 = vld [vmem:[#allocation7 + $0x14] sm:$0xf]
        %v1104 = vld [vmem:[#allocation7 + $0x18] sm:$0xf]
        %v1105 = vld [vmem:[#allocation7 + $0x1c] sm:$0xf]
        %v1106 = vld [vmem:[#allocation7 + $0x20] sm:$0xf]
        %v1107 = vld [vmem:[#allocation7 + $0x24] sm:$0xf]
        %v1108 = vld [vmem:[#allocation7 + $0x28] sm:$0xf]
        %v1109 = vld [vmem:[#allocation7 + $0x2c] sm:$0xf]
        %v1110 = vld [vmem:[#allocation7 + $0x30] sm:$0xf]
        %v1111 = vld [vmem:[#allocation7 + $0x34] sm:$0xf]
        %v1112 = vld [vmem:[#allocation7 + $0x38] sm:$0xf]
        %v1113 = vld [vmem:[#allocation7 + $0x3c] sm:$0xf]
        %v1114 = vld [vmem:[%s5] sm:$0x1]
        %v1116 = vlaneseq
        %v1117 = vshrl.u32 %v1116, 7
        %v1118 = vsub.s32 0, %v1117
        %v1119 = vrot.slane %v1114, %v1118
        %v1137 = vunpack.c.l.b16 %v1098
        %v1138 = vunpack.c.l.b16 %v1099
        %v1139 = vunpack.c.l.b16 %v1100
        %v1140 = vunpack.c.l.b16 %v1101
        %v1141 = vunpack.c.l.b16 %v1102
        %v1142 = vunpack.c.l.b16 %v1103
        %v1143 = vunpack.c.l.b16 %v1104
        %v1144 = vunpack.c.l.b16 %v1105
        %v1145 = vunpack.c.l.b16 %v1106
        %v1146 = vunpack.c.l.b16 %v1107
        %v1147 = vunpack.c.l.b16 %v1108
        %v1148 = vunpack.c.l.b16 %v1109
        %v1149 = vunpack.c.l.b16 %v1110
        %v1150 = vunpack.c.l.b16 %v1111
        %v1151 = vunpack.c.l.b16 %v1112
        %v1152 = vunpack.c.l.b16 %v1113
        %v1153 = vpack.c.b16 %v1138, %v1137
        %v1154 = vpack.c.b16 %v1140, %v1139
        %v1155 = vpack.c.b16 %v1142, %v1141
        %v1156 = vpack.c.b16 %v1144, %v1143
        %v1157 = vpack.c.b16 %v1146, %v1145
        %v1158 = vpack.c.b16 %v1148, %v1147
        %v1159 = vpack.c.b16 %v1150, %v1149
        %v1160 = vpack.c.b16 %v1152, %v1151
        %1169 = vmatprep.subr.bf16.mxu0 0
        %1170 = vmatpush1.bf16.msra.mxu0 %v1153
        %1171 = vmatprep.subr.bf16.mxu0 0
        %1172 = vmatpush1.bf16.msra.mxu0 %v1154
        %1173 = vmatprep.subr.bf16.mxu0 0
        %1174 = vmatpush1.bf16.msra.mxu0 %v1155
        %1175 = vmatprep.subr.bf16.mxu0 0
        %1176 = vmatpush1.bf16.msra.mxu0 %v1156
        %1177 = vmatprep.subr.bf16.mxu0 0
        %1178 = vmatpush1.bf16.msra.mxu0 %v1157
        %1179 = vmatprep.subr.bf16.mxu0 0
        %1180 = vmatpush1.bf16.msra.mxu0 %v1158
        %1181 = vmatprep.subr.bf16.mxu0 0
        %1182 = vmatpush1.bf16.msra.mxu0 %v1159
        %1183 = vmatprep.subr.bf16.mxu0 0
        %1184 = vmatpush1.bf16.msra.mxu0 %v1160
        %1185 = vmatprep.subr.bf16.mxu0 0
        %1186 = vmatpush1.bf16.msra.mxu0 0
        %1187 = vmatprep.subr.bf16.mxu0 0
        %1188 = vmatpush1.bf16.msra.mxu0 0
        %1189 = vmatprep.subr.bf16.mxu0 0
        %1190 = vmatpush1.bf16.msra.mxu0 0
        %1191 = vmatprep.subr.bf16.mxu0 0
        %1192 = vmatpush1.bf16.msra.mxu0 0
        %1193 = vmatprep.subr.bf16.mxu0 0
        %1194 = vmatpush1.bf16.msra.mxu0 0
        %1195 = vmatprep.subr.bf16.mxu0 0
        %1196 = vmatpush1.bf16.msra.mxu0 0
        %1197 = vmatprep.subr.bf16.mxu0 0
        %1198 = vmatpush1.bf16.msra.mxu0 0
        %1199 = vmatprep.subr.bf16.mxu0 0
        %1200 = vmatpush1.bf16.msra.mxu0 0
        %1201 = vmatprep.mubr.bf16.mxu0 0
        %1202 = vmatmul.mubr.bf16.gmra.mrb[0].mxu0 %v1097
        %v1203 = vpop.f32.mrb[0].mxu0
        %v1204 = vadd.f32 %v1119, %v1203
        %v1205 = vpop.f32.mrb[0].mxu0
        %v1206 = vpop.f32.mrb[0].mxu0
        %v1207 = vadd.f32 %v1119, %v1206
        %v1208 = vpop.f32.mrb[0].mxu0
        %1209 = vdwg.mxu0
        %v1210 = vlaneseq
        %v1211 = vand.u32 %v1210, 127
        %vm1212 = vcmp.lt.s32.totalorder %v1211, 8
        %v1213 = vsel %vm1212, %v1204, -1e+30
        %v1214 = vsel %vm1212, %v1207, -1e+30
        %1215 = vmax.xlane.f32.xlu0 %v1213
        %v1216 = vpop.xlane.xlu0 %1215
        %1217 = vmax.xlane.f32.xlu0 %v1214
        %v1218 = vpop.xlane.xlu0 %1217
        %v1219 = vsub.f32 %v1213, %v1216
        %v1220 = vsub.f32 %v1214, %v1218
        %v1221 = vmul.f32 %v1219, 1.442695
        %v1222 = vpow.pop %v1221
        %v1223 = vmul.f32 %v1220, 1.442695
        %v1224 = vpow.pop %v1223
        %1225 = vadd.xlane.f32.xlu0 %v1222
        %v1226 = vpop.xlane.xlu0 %1225
        %1227 = vadd.xlane.f32.xlu0 %v1224
        %v1228 = vpop.xlane.xlu0 %1227
        %v1229 = vlog2.pop %v1226
        %v1230 = vmul.f32 %v1229, 0.6931472
        %v1231 = vlog2.pop %v1228
        %v1232 = vmul.f32 %v1231, 0.6931472
        %v1233 = vadd.f32 %v1216, %v1230
        %v1234 = vadd.f32 %v1218, %v1232
        %s1235 = ssub.s32 %s29, 1
        %s1236 = scalar_select %p363, %s29, %s1235
        %s1237 = smul.u32 %s1236, 16
        %v1238 = vlaneseq
        %v1239 = vshrl.u32 %v1238, 7
        %v1240 = vadd.s32 %v1239, 8
        %s1241 = ssub.s32 2, %s1237
        %v1242 = vstv %s1241
        %vm1243 = vcmp.lt.s32.totalorder %v1239, %v1242
        %vm1244 = vcmp.lt.s32.totalorder %v1240, %v1242
        %v1245 = vsel %vm1243, 1, 0
        %v1246 = vsel %vm1244, 1, 0
        %v1247 = vcvt.s32.f32 %v1245
        %v1248 = vcvt.s32.f32 %v1246
        %v1249 = vld [vmem:[%s358] sm:$0xff]
        %v1250 = vld [vmem:[%s358 + $0x8] sm:$0xff]
        %1251 = vset.pattern.permute.xlu0 0
        %1252 = vperm.xlu0 %1251, %v1249
        %v1253 = vpop.permute.xlu0 %1252
        %1254 = vset.pattern.permute.xlu0 0
        %1255 = vperm.xlu0 %1254, %v1250
        %v1256 = vpop.permute.xlu0 %1255
        %vm1257 = vcmp.eq.s32.totalorder %v1211, %v1253
        %vm1258 = vcmp.eq.s32.totalorder %v1211, %v1256
        %v1259 = vsel %vm1257, %v1204, 0.0
        %v1260 = vsel %vm1258, %v1207, 0.0
        %1261 = vadd.xlane.f32.xlu0 %v1259
        %v1262 = vpop.xlane.xlu0 %1261
        %1263 = vadd.xlane.f32.xlu0 %v1260
        %v1264 = vpop.xlane.xlu0 %1263
        %v1265 = vsub.f32 %v1233, %v1262
        %v1266 = vsub.f32 %v1234, %v1264
        %vm1267 = vcmp.eq.f32.partialorder %v1213, %v1216
        %vm1268 = vcmp.eq.f32.partialorder %v1214, %v1218
        %v1269 = vsel %vm1267, %v1211, 128
        %v1270 = vsel %vm1268, %v1211, 128
        %v1271 = vand.u32 %v1269, 65535
        %v1272 = vshra.s32 %v1269, 16
        %v1273 = vcvt.s32.f32 %v1271
        %v1274 = vcvt.s32.f32 %v1272
        %1275 = vmin.xlane.f32.xlu0 %v1274
        %v1276 = vpop.xlane.xlu0 %1275
        %vm1277 = vcmp.eq.f32.partialorder %v1274, %v1276
        %v1278 = vsel %vm1277, %v1273, inf
        %1279 = vmin.xlane.f32.xlu0 %v1278
        %v1280 = vpop.xlane.xlu0 %1279
        %v1281 = vcvt.f32.s32 %v1280
        %v1282 = vcvt.f32.s32 %v1276
        %v1283 = vshll.u32 %v1282, 16
        %v1284 = vadd.s32 %v1283, %v1281
        %v1285 = vand.u32 %v1270, 65535
        %v1286 = vshra.s32 %v1270, 16
        %v1287 = vcvt.s32.f32 %v1285
        %v1288 = vcvt.s32.f32 %v1286
        %1289 = vmin.xlane.f32.xlu0 %v1288
        %v1290 = vpop.xlane.xlu0 %1289
        %vm1291 = vcmp.eq.f32.partialorder %v1288, %v1290
        %v1292 = vsel %vm1291, %v1287, inf
        %1293 = vmin.xlane.f32.xlu0 %v1292
        %v1294 = vpop.xlane.xlu0 %1293
        %v1295 = vcvt.f32.s32 %v1294
        %v1296 = vcvt.f32.s32 %v1290
        %v1297 = vshll.u32 %v1296, 16
        %v1298 = vadd.s32 %v1297, %v1295
        %vm1299 = vcmp.eq.s32.totalorder %v1284, %v1249
        %vm1300 = vcmp.eq.s32.totalorder %v1298, %v1250
        %v1301 = vsel %vm1299, 1, 0
        %v1302 = vsel %vm1300, 1, 0
        %v1303 = vcvt.s32.f32 %v1301
        %v1304 = vcvt.s32.f32 %v1302
        %v1305 = vsel %vm1212, %v1204, 0.0
        %v1306 = vsel %vm1212, %v1207, 0.0
        %1307 = vadd.xlane.f32.xlu0 %v1305
        %v1308 = vpop.xlane.xlu0 %1307
        %1309 = vadd.xlane.f32.xlu0 %v1306
        %v1310 = vpop.xlane.xlu0 %1309
        %v1311 = vmul.f32 %v1308, 0.125
        %v1312 = vmul.f32 %v1310, 0.125
        %v1313 = vsub.f32 %v1233, %v1311
        %v1314 = vsub.f32 %v1234, %v1312
        %s1315 = scalar_select %p363, 1, 0
        %s1316 = scvt.s32.f32 %s1315
        %v1317 = vmul.f32 %v1247, %v1265
        %v1318 = vmul.f32 %v1248, %v1266
        %vm1319 = vcmask 7168
        %v1320 = vsel %vm1319, %v1317, 0.0
        %v1321 = vsel %vm1319, %v1318, 0.0
        %v1322 = vadd.f32 %v1320, %v1321
        %1323 = vadd.xlane.f32.xlu0 %v1322
        %v1324 = vpop.xlane.xlu0 %1323
        %v1325 = vrot.slane %v1324, 4
        %v1326 = vadd.f32 %v1324, %v1325
        %v1327 = vrot.slane %v1326, 2
        %v1328 = vadd.f32 %v1326, %v1327
        %v1329 = vrot.slane %v1328, 1
        %v1330 = vadd.f32 %v1328, %v1329
        %s1331 = vtos %v1330
        %s1332 = smul.f32 %s1331, %s1316
        %v1333 = vmul.f32 %v1247, %v1303
        %v1334 = vmul.f32 %v1248, %v1304
        %v1335 = vsel %vm1319, %v1333, 0.0
        %v1336 = vsel %vm1319, %v1334, 0.0
        %v1337 = vadd.f32 %v1335, %v1336
        %1338 = vadd.xlane.f32.xlu0 %v1337
        %v1339 = vpop.xlane.xlu0 %1338
        %v1340 = vrot.slane %v1339, 4
        %v1341 = vadd.f32 %v1339, %v1340
        %v1342 = vrot.slane %v1341, 2
        %v1343 = vadd.f32 %v1341, %v1342
        %v1344 = vrot.slane %v1343, 1
        %v1345 = vadd.f32 %v1343, %v1344
        %s1346 = vtos %v1345
        %s1347 = smul.f32 %s1346, %s1316
        %v1348 = vmul.f32 %v1247, %v1313
        %v1349 = vmul.f32 %v1248, %v1314
        %v1350 = vsel %vm1319, %v1348, 0.0
        %v1351 = vsel %vm1319, %v1349, 0.0
        %v1352 = vadd.f32 %v1350, %v1351
        %1353 = vadd.xlane.f32.xlu0 %v1352
        %v1354 = vpop.xlane.xlu0 %1353
        %v1355 = vrot.slane %v1354, 4
        %v1356 = vadd.f32 %v1354, %v1355
        %v1357 = vrot.slane %v1356, 2
        %v1358 = vadd.f32 %v1356, %v1357
        %v1359 = vrot.slane %v1358, 1
        %v1360 = vadd.f32 %v1358, %v1359
        %s1361 = vtos %v1360
        %s1362 = ssub.f32 1.0, %s1316
        %s1363 = smul.f32 %s1361, %s1362
        %1364 = vst [vmem:[%s346] sm:$0xff] %v1204
        %1365 = vst [vmem:[%s346 + $0x8] sm:$0xff] %v1207
        %vm1366 = vcmp.eq.s32.totalorder %v1239, 0
        %vm1367 = vcmp.eq.s32.totalorder %v1211, 0
        %vm1368 = vmand %vm1366, %vm1367
        %vm1369 = vcmp.eq.s32.totalorder %v1211, 1
        %vm1370 = vmand %vm1366, %vm1369
        %vm1371 = vcmp.eq.s32.totalorder %v1211, 2
        %vm1372 = vmand %vm1366, %vm1371
        %v1373 = vstv %s1363
        %v1374 = vsel %vm1372, %v1373, 0.0
        %v1375 = vstv %s1347
        %v1376 = vsel %vm1370, %v1375, %v1374
        %v1377 = vstv %s1332
        %v1378 = vsel %vm1368, %v1377, %v1376
        %1379 = vst [vmem:[%s353] sm:$0xff] %v1378
        %s1380 = sand.u32 %s173, 1
        %s1381 = scalar_lea.sflag [#allocation4], %s1380
        %s1382 = sand.u32 %s173, 1
        %s1383 = smul.addr %s1382, 16
        %s1384 = scalar_lea.vmem [#allocation8], %s1383
        %s1385 = sand.u32 %s199, 1
        %s1386 = scalar_lea.sflag [#allocation10], %s1385
        %s1387 = sand.u32 %s199, 1
        %s1388 = smul.addr %s1387, 8
        %s1389 = scalar_lea.vmem [#allocation9], %s1388
        // Predicated region
        $region57: #{tpu_custom_call.1} parent=43 // pred_check
          %p1390 = pneg %p183
        $region58: #{tpu_custom_call.1} parent=43 // pred_check_branch
          %1392 = sbr.rel (%p1390) target = $region60
        $region59: #{tpu_custom_call.1} parent=43 // pred_region
          %s1393 = smul.u32 2, %s29
          %s1395 = ssub.s32 256, 256
          %1396 = vsyncadd %s1381, %s1395
          %s1397 = smul.addr %s1393, 128
          %s1398 = scalar_lea.hbm %s6, %s1397
          %s1399 = sshll.u32 %s1384, 4
          %s1400 = int_to_ptr.vmem [resolvable:$true] %s1399
          %1405 = dma.vmem_to_hbm [thread:$0]  %s1400, 256, %s1398, %s1381, 128, 128, 8
        $region60: #{tpu_custom_call.1} parent=43 // pred_fallthru
          _
        // Predicated region
        $region61: #{tpu_custom_call.1} parent=43 // pred_check
          %p1406 = pneg %p209
        $region62: #{tpu_custom_call.1} parent=43 // pred_check_branch
          %1408 = sbr.rel (%p1406) target = $region64
        $region63: #{tpu_custom_call.1} parent=43 // pred_region
          %s1410 = ssub.s32 128, 128
          %1411 = vsyncadd %s1386, %s1410
          %s1412 = smul.addr %s29, 128
          %s1413 = scalar_lea.hbm %s7, %s1412
          %s1415 = sshll.u32 %s1389, 4
          %s1416 = int_to_ptr.vmem [resolvable:$true] %s1415
          %1418 = dma.vmem_to_hbm [thread:$0]  %s1416, 128, %s1413, %s1386
        $region64: #{tpu_custom_call.1} parent=43 // pred_fallthru
          _
      $region44: #{tpu_custom_call.1} parent=5 // pred_fallthru
        _
      %p1419 = scmp.le.s32.totalorder 2, %s24
      // Predicated region
      $region65: #{tpu_custom_call.1} parent=5 // pred_check
        %p1420 = pneg %p1419
      $region66: #{tpu_custom_call.1} parent=5 // pred_check_branch
        %1422 = sbr.rel (%p1420) target = $region68
      $region67: #{tpu_custom_call.1} parent=5 // pred_region
        %s1423 = ssub.s32 %s24, 2
        // Predicated region
        $region69: #{tpu_custom_call.1} parent=67 // pred_check
          %p1424 = pneg %p189
        $region70: #{tpu_custom_call.1} parent=67 // pred_check_branch
          %1426 = sbr.rel (%p1424) target = $region72
        $region71: #{tpu_custom_call.1} parent=67 // pred_region
          %s1427 = sand.u32 %s174, 1
          %s1428 = scalar_lea.sflag [#allocation4], %s1427
          %s1429 = sand.u32 %s174, 1
          %s1430 = smul.addr %s1429, 16
          %s1431 = scalar_lea.vmem [#allocation8], %s1430
          %1432 = dma.done %s1428, 256
        $region72: #{tpu_custom_call.1} parent=67 // pred_fallthru
          _
        // Predicated region
        $region73: #{tpu_custom_call.1} parent=67 // pred_check
          %p1433 = pneg %p215
        $region74: #{tpu_custom_call.1} parent=67 // pred_check_branch
          %1435 = sbr.rel (%p1433) target = $region76
        $region75: #{tpu_custom_call.1} parent=67 // pred_region
          %s1436 = sand.u32 %s200, 1
          %s1437 = scalar_lea.sflag [#allocation10], %s1436
          %s1438 = sand.u32 %s200, 1
          %s1439 = smul.addr %s1438, 8
          %s1440 = scalar_lea.vmem [#allocation9], %s1439
          %1441 = dma.done %s1437, 128
        $region76: #{tpu_custom_call.1} parent=67 // pred_fallthru
          _
      $region68: #{tpu_custom_call.1} parent=5 // pred_fallthru
        _
    $region6: #{tpu_custom_call.1} parent=1 // loop_footer
      %s28 = sadd.s32 1, %s24
    $region7: #{tpu_custom_call.1} parent=1 // loop_footer_branch
      %23 = sbr.rel target = $region3
    $region8: #{tpu_custom_call.1} parent=1 // loop_exit
      _
    %1442 = vsyncpa [#allocation3], 1
    %s1443 = scalar_lea.sflag [#allocation3], 1
    %1444 = vsyncpa %s1443, 1
    %1445 = vsyncpa [#allocation6], 1
    %1446 = vsyncpa [#allocation4], 1
    %s1447 = scalar_lea.sflag [#allocation4], 1
    %1448 = vsyncpa %s1447, 1
    %1449 = vsyncpa [#allocation10], 1
    %s1450 = scalar_lea.sflag [#allocation10], 1
    %1451 = vsyncpa %s1450, 1

// kernel: tpu_custom_call.1
$region0: #{tpu_custom_call.1}
  #allocation0 [shape = 'u32[]', space=smem, size = 0x4, offset = 0x4, fixed_abs, tag = 'smem constant byte address 0x4 - core index']
  #allocation1 [shape = 'u32[144,128]{1,0:T(1,128)}', space=vmem, size = 0x12000, scoped, tag = 'internal scratch']
  %s0 = inlined_call_operand.vmem [shape: s32[32,1], index: 0, kind: input, shape index: {}]
  %s1 = inlined_call_operand.hbm [shape: bf16[32,1024], index: 1, kind: input, shape index: {}]
  %s2 = inlined_call_operand.hbm [shape: bf16[1024,128], index: 2, kind: input, shape index: {}]
  %s3 = inlined_call_operand.vmem [shape: f32[1,128], index: 3, kind: input, shape index: {}]
  %s4 = inlined_call_operand.hbm [shape: bf16[128,128], index: 4, kind: input, shape index: {}]
  %s5 = inlined_call_operand.vmem [shape: f32[1,128], index: 5, kind: input, shape index: {}]
  %s6 = inlined_call_operand.hbm [shape: f32[32,128], index: 6, kind: output, shape index: {0}]
  %s7 = inlined_call_operand.hbm [shape: f32[16,128], index: 7, kind: output, shape index: {1}]
  %8 = xla_tuple %s6, %s7
  %s9 = sld [smem:[#allocation0]]
  $region77: #{tpu_custom_call.1} parent=0
    _
  %s11 = ssub.s32 1, %s9
  %s12 = scalar_select 0, %s11, %s9
  $region1: #{tpu_custom_call.1} parent=0
    #allocation2 [shape = 'u8[65536]{0}', space=vmem, size = 0x10000, scoped, tag = 'input window, operand 1']
    #allocation3 [shape = 's32[2]{0}', space=sflag, size = 0x8, scoped, tag = 'scoped memory for tpu_custom_call.1']
    #allocation4 [shape = 's32[2]{0}', space=sflag, size = 0x8, scoped, tag = 'scoped memory for tpu_custom_call.1']
    #allocation5 [shape = 'u8[262144]{0}', space=vmem, size = 0x40000, scoped, tag = 'input window, operand 2, single buffered']
    #allocation6 [shape = 's32[1]{0}', space=sflag, size = 0x4, scoped, tag = 'scoped memory for tpu_custom_call.1']
    #allocation7 [shape = 'u8[32768]{0}', space=vmem, size = 0x8000, scoped, tag = 'input window, operand 4, single buffered']
    #allocation8 [shape = 'u8[16384]{0}', space=vmem, size = 0x4000, scoped, tag = 'output window, operand 0']
    #allocation9 [shape = 'u8[8192]{0}', space=vmem, size = 0x2000, scoped, tag = 'output window, operand 1']
    #allocation10 [shape = 's32[2]{0}', space=sflag, size = 0x8, scoped, tag = 'scoped memory for tpu_custom_call.1']
    %13 = vsyncpa [#allocation3], 0
    %s14 = scalar_lea.sflag [#allocation3], 1
    %15 = vsyncpa %s14, 0
    %16 = vsyncpa [#allocation6], 0
    %17 = vsyncpa [#allocation4], 0
    %s18 = scalar_lea.sflag [#allocation4], 1
    %19 = vsyncpa %s18, 0
    %20 = vsyncpa [#allocation10], 0
    %s21 = scalar_lea.sflag [#allocation10], 1
    %22 = vsyncpa %s21, 0
    loop: start=0, step=1, limit=4
    $region2: #{tpu_custom_call.1} parent=1 // loop_pre_header
      _
    $region3: #{tpu_custom_call.1} parent=1 // loop_header
      %s24 = sphi 0, %s28
      %p25 = scmp.ge.s32.totalorder %s24, 4
      %s34 = sphi 0, %s36
      %s37 = sphi 0, %s34
      %s38 = sphi 0, %s37
      %s54 = sphi 0, %s38
      %s60 = sphi 0, %s62
      %s63 = sphi 0, %s60
      %s64 = sphi 0, %s63
      %s80 = sphi 0, %s64
      %s84 = sphi 0, %s84
      %s86 = sphi 0, %s84
      %s87 = sphi 0, %s86
      %s101 = sphi 0, %s87
      %s105 = sphi 0, %s105
      %s107 = sphi 0, %s105
      %s108 = sphi 0, %s107
      %s122 = sphi 0, %s108
      %s126 = sphi 0, %s126
      %s128 = sphi 0, %s126
      %s129 = sphi 0, %s128
      %s143 = sphi 0, %s129
      %s147 = sphi 0, %s147
      %s149 = sphi 0, %s147
      %s150 = sphi 0, %s149
      %s164 = sphi 0, %s150
      %s170 = sphi 0, %s172
      %s173 = sphi 0, %s170
      %s174 = sphi 0, %s173
      %s190 = sphi 0, %s174
      %s196 = sphi 0, %s198
      %s199 = sphi 0, %s196
      %s200 = sphi 0, %s199
      %s216 = sphi 0, %s200
    $region4: #{tpu_custom_call.1} parent=1 // loop_header_branch
      %27 = sbr.rel (%p25) target = $region8
    $region5: #{tpu_custom_call.1} parent=1 // loop_body
      %s29 = ssub.s32 %s24, 1
      %s30 = ssub.s32 %s24, 2
      %s31 = sadd.s32 %s24, 1
      %s32 = ssub.s32 %s24, %s31
      %p33 = scmp.eq.s32.totalorder %s32, 0
      %s35 = sadd.s32 %s34, 1
      %s36 = scalar_select %p33, %s34, %s35
      %p39 = pneg %p33
      %p40 = scmp.eq.s32.totalorder %s24, 1
      %p41 = por %p39, %p40
      %p42 = scmp.ne.s32.totalorder %s34, %s37
      %p43 = scmp.eq.s32.totalorder %s24, 0
      %p44 = por %p42, %p43
      %p45 = scmp.ne.s32.totalorder %s34, %s37
      %p46 = scmp.eq.s32.totalorder %s29, 1
      %p47 = por %p45, %p46
      %p48 = scmp.ne.s32.totalorder %s37, %s38
      %p49 = scmp.eq.s32.totalorder %s29, 0
      %p50 = por %p48, %p49
      %p51 = scmp.ne.s32.totalorder %s37, %s38
      %p52 = scmp.eq.s32.totalorder %s30, 1
      %p53 = por %p51, %p52
      %p55 = scmp.ne.s32.totalorder %s38, %s54
      %p56 = scmp.eq.s32.totalorder %s30, 0
      %p57 = por %p55, %p56
      %s58 = ssub.s32 %s24, %s31
      %p59 = scmp.eq.s32.totalorder %s58, 0
      %s61 = sadd.s32 %s60, 1
      %s62 = scalar_select %p59, %s60, %s61
      %p65 = pneg %p59
      %p66 = scmp.eq.s32.totalorder %s24, 1
      %p67 = por %p65, %p66
      %p68 = scmp.ne.s32.totalorder %s60, %s63
      %p69 = scmp.eq.s32.totalorder %s24, 0
      %p70 = por %p68, %p69
      %p71 = scmp.ne.s32.totalorder %s60, %s63
      %p72 = scmp.eq.s32.totalorder %s29, 1
      %p73 = por %p71, %p72
      %p74 = scmp.ne.s32.totalorder %s63, %s64
      %p75 = scmp.eq.s32.totalorder %s29, 0
      %p76 = por %p74, %p75
      %p77 = scmp.ne.s32.totalorder %s63, %s64
      %p78 = scmp.eq.s32.totalorder %s30, 1
      %p79 = por %p77, %p78
      %p81 = scmp.ne.s32.totalorder %s64, %s80
      %p82 = scmp.eq.s32.totalorder %s30, 0
      %p83 = por %p81, %p82
      %s85 = sadd.s32 %s84, 1
      %p88 = scmp.eq.s32.totalorder %s24, 1
      %p89 = scmp.ne.s32.totalorder %s84, %s86
      %p90 = scmp.eq.s32.totalorder %s24, 0
      %p91 = por %p89, %p90
      %p92 = scmp.ne.s32.totalorder %s84, %s86
      %p93 = scmp.eq.s32.totalorder %s29, 1
      %p94 = por %p92, %p93
      %p95 = scmp.ne.s32.totalorder %s86, %s87
      %p96 = scmp.eq.s32.totalorder %s29, 0
      %p97 = por %p95, %p96
      %p98 = scmp.ne.s32.totalorder %s86, %s87
      %p99 = scmp.eq.s32.totalorder %s30, 1
      %p100 = por %p98, %p99
      %p102 = scmp.ne.s32.totalorder %s87, %s101
      %p103 = scmp.eq.s32.totalorder %s30, 0
      %p104 = por %p102, %p103
      %s106 = sadd.s32 %s105, 1
      %p109 = scmp.eq.s32.totalorder %s24, 1
      %p110 = scmp.ne.s32.totalorder %s105, %s107
      %p111 = scmp.eq.s32.totalorder %s24, 0
      %p112 = por %p110, %p111
      %p113 = scmp.ne.s32.totalorder %s105, %s107
      %p114 = scmp.eq.s32.totalorder %s29, 1
      %p115 = por %p113, %p114
      %p116 = scmp.ne.s32.totalorder %s107, %s108
      %p117 = scmp.eq.s32.totalorder %s29, 0
      %p118 = por %p116, %p117
      %p119 = scmp.ne.s32.totalorder %s107, %s108
      %p120 = scmp.eq.s32.totalorder %s30, 1
      %p121 = por %p119, %p120
      %p123 = scmp.ne.s32.totalorder %s108, %s122
      %p124 = scmp.eq.s32.totalorder %s30, 0
      %p125 = por %p123, %p124
      %s127 = sadd.s32 %s126, 1
      %p130 = scmp.eq.s32.totalorder %s24, 1
      %p131 = scmp.ne.s32.totalorder %s126, %s128
      %p132 = scmp.eq.s32.totalorder %s24, 0
      %p133 = por %p131, %p132
      %p134 = scmp.ne.s32.totalorder %s126, %s128
      %p135 = scmp.eq.s32.totalorder %s29, 1
      %p136 = por %p134, %p135
      %p137 = scmp.ne.s32.totalorder %s128, %s129
      %p138 = scmp.eq.s32.totalorder %s29, 0
      %p139 = por %p137, %p138
      %p140 = scmp.ne.s32.totalorder %s128, %s129
      %p141 = scmp.eq.s32.totalorder %s30, 1
      %p142 = por %p140, %p141
      %p144 = scmp.ne.s32.totalorder %s129, %s143
      %p145 = scmp.eq.s32.totalorder %s30, 0
      %p146 = por %p144, %p145
      %s148 = sadd.s32 %s147, 1
      %p151 = scmp.eq.s32.totalorder %s24, 1
      %p152 = scmp.ne.s32.totalorder %s147, %s149
      %p153 = scmp.eq.s32.totalorder %s24, 0
      %p154 = por %p152, %p153
      %p155 = scmp.ne.s32.totalorder %s147, %s149
      %p156 = scmp.eq.s32.totalorder %s29, 1
      %p157 = por %p155, %p156
      %p158 = scmp.ne.s32.totalorder %s149, %s150
      %p159 = scmp.eq.s32.totalorder %s29, 0
      %p160 = por %p158, %p159
      %p161 = scmp.ne.s32.totalorder %s149, %s150
      %p162 = scmp.eq.s32.totalorder %s30, 1
      %p163 = por %p161, %p162
      %p165 = scmp.ne.s32.totalorder %s150, %s164
      %p166 = scmp.eq.s32.totalorder %s30, 0
      %p167 = por %p165, %p166
      %s168 = ssub.s32 %s24, %s31
      %p169 = scmp.eq.s32.totalorder %s168, 0
      %s171 = sadd.s32 %s170, 1
      %s172 = scalar_select %p169, %s170, %s171
      %p175 = pneg %p169
      %p176 = scmp.eq.s32.totalorder %s24, 1
      %p177 = por %p175, %p176
      %p178 = scmp.ne.s32.totalorder %s170, %s173
      %p179 = scmp.eq.s32.totalorder %s24, 0
      %p180 = por %p178, %p179
      %p181 = scmp.ne.s32.totalorder %s170, %s173
      %p182 = scmp.eq.s32.totalorder %s29, 1
      %p183 = por %p181, %p182
      %p184 = scmp.ne.s32.totalorder %s173, %s174
      %p185 = scmp.eq.s32.totalorder %s29, 0
      %p186 = por %p184, %p185
      %p187 = scmp.ne.s32.totalorder %s173, %s174
      %p188 = scmp.eq.s32.totalorder %s30, 1
      %p189 = por %p187, %p188
      %p191 = scmp.ne.s32.totalorder %s174, %s190
      %p192 = scmp.eq.s32.totalorder %s30, 0
      %p193 = por %p191, %p192
      %s194 = ssub.s32 %s24, %s31
      %p195 = scmp.eq.s32.totalorder %s194, 0
      %s197 = sadd.s32 %s196, 1
      %s198 = scalar_select %p195, %s196, %s197
      %p201 = pneg %p195
      %p202 = scmp.eq.s32.totalorder %s24, 1
      %p203 = por %p201, %p202
      %p204 = scmp.ne.s32.totalorder %s196, %s199
      %p205 = scmp.eq.s32.totalorder %s24, 0
      %p206 = por %p204, %p205
      %p207 = scmp.ne.s32.totalorder %s196, %s199
      %p208 = scmp.eq.s32.totalorder %s29, 1
      %p209 = por %p207, %p208
      %p210 = scmp.ne.s32.totalorder %s199, %s200
      %p211 = scmp.eq.s32.totalorder %s29, 0
      %p212 = por %p210, %p211
      %p213 = scmp.ne.s32.totalorder %s199, %s200
      %p214 = scmp.eq.s32.totalorder %s30, 1
      %p215 = por %p213, %p214
      %p217 = scmp.ne.s32.totalorder %s200, %s216
      %p218 = scmp.eq.s32.totalorder %s30, 0
      %p219 = por %p217, %p218
      %p220 = scmp.le.s32.totalorder 1, %s24
      %p221 = scmp.lt.s32.totalorder %s24, 3
      %p222 = pnand %p220, %p221
      %p223 = pneg %p222
      // Predicated region
      $region9: #{tpu_custom_call.1} parent=5 // pred_check
        _
      $region10: #{tpu_custom_call.1} parent=5 // pred_check_branch
        %225 = sbr.rel (%p222) target = $region12
      $region11: #{tpu_custom_call.1} parent=5 // pred_region
        %s226 = ssub.s32 %s24, 1
        // Predicated region
        $region13: #{tpu_custom_call.1} parent=11 // pred_check
          %p227 = pneg %p97
        $region14: #{tpu_custom_call.1} parent=11 // pred_check_branch
          %229 = sbr.rel (%p227) target = $region16
        $region15: #{tpu_custom_call.1} parent=11 // pred_region
          %s231 = ssub.s32 8192, 8192
          %232 = vsyncadd [#allocation6], %s231
          %s233 = sshll.u32 [#allocation5], 4
          %s234 = int_to_ptr.vmem [resolvable:$true] %s233
          %239 = dma.hbm_to_vmem [thread:$0]  %s2, 8192, %s234, [#allocation6], 64, 64, 4
        $region16: #{tpu_custom_call.1} parent=11 // pred_fallthru
          _
        // Predicated region
        $region17: #{tpu_custom_call.1} parent=11 // pred_check
          %p240 = pneg %p118
        $region18: #{tpu_custom_call.1} parent=11 // pred_check_branch
          %242 = sbr.rel (%p240) target = $region20
        $region19: #{tpu_custom_call.1} parent=11 // pred_region
          _
        $region20: #{tpu_custom_call.1} parent=11 // pred_fallthru
          _
        // Predicated region
        $region21: #{tpu_custom_call.1} parent=11 // pred_check
          %p243 = pneg %p139
        $region22: #{tpu_custom_call.1} parent=11 // pred_check_branch
          %245 = sbr.rel (%p243) target = $region24
        $region23: #{tpu_custom_call.1} parent=11 // pred_region
          %s247 = ssub.s32 1024, 1024
          %248 = vsyncadd [#allocation6], %s247
          %s249 = sshll.u32 [#allocation7], 4
          %s250 = int_to_ptr.vmem [resolvable:$true] %s249
          %255 = dma.hbm_to_vmem [thread:$0]  %s4, 1024, %s250, [#allocation6], 64, 64, 4
        $region24: #{tpu_custom_call.1} parent=11 // pred_fallthru
          _
        // Predicated region
        $region25: #{tpu_custom_call.1} parent=11 // pred_check
          %p256 = pneg %p160
        $region26: #{tpu_custom_call.1} parent=11 // pred_check_branch
          %258 = sbr.rel (%p256) target = $region28
        $region27: #{tpu_custom_call.1} parent=11 // pred_region
          _
        $region28: #{tpu_custom_call.1} parent=11 // pred_fallthru
          _
      $region12: #{tpu_custom_call.1} parent=5 // pred_fallthru
        _
      %p259 = scmp.lt.s32.totalorder %s24, 2
      // Predicated region
      $region29: #{tpu_custom_call.1} parent=5 // pred_check
        %p260 = pneg %p259
      $region30: #{tpu_custom_call.1} parent=5 // pred_check_branch
        %262 = sbr.rel (%p260) target = $region32
      $region31: #{tpu_custom_call.1} parent=5 // pred_region
        // Predicated region
        $region33: #{tpu_custom_call.1} parent=31 // pred_check
          %p263 = pneg %p44
        $region34: #{tpu_custom_call.1} parent=31 // pred_check_branch
          %265 = sbr.rel (%p263) target = $region36
        $region35: #{tpu_custom_call.1} parent=31 // pred_region
          %s266 = smul.u32 2, %s24
          %p267 = scmp.lt.s32.totalorder %s266, 3
          %s268 = scalar_select %p267, %s266, 3
          %s269 = smul.addr %s268, 8
          %s270 = scalar_lea.vmem %s0, %s269
          %s271 = smul.u32 2, %s24
        $region36: #{tpu_custom_call.1} parent=31 // pred_fallthru
          _
        // Predicated region
        $region37: #{tpu_custom_call.1} parent=31 // pred_check
          %p272 = pneg %p70
        $region38: #{tpu_custom_call.1} parent=31 // pred_check_branch
          %274 = sbr.rel (%p272) target = $region40
        $region39: #{tpu_custom_call.1} parent=31 // pred_region
          %s275 = sand.u32 %s60, 1
          %s276 = scalar_lea.sflag [#allocation3], %s275
          %s277 = sand.u32 %s60, 1
          %s278 = smul.addr %s277, 64
          %s279 = scalar_lea.vmem [#allocation2], %s278
          %s280 = smul.u32 2, %s24
          %s282 = ssub.s32 1024, 1024
          %283 = vsyncadd %s276, %s282
          %s284 = smul.addr %s280, 8
          %s285 = smul.addr %s284, 64
          %s286 = scalar_lea.hbm %s1, %s285
          %s287 = sshll.u32 %s279, 4
          %s288 = int_to_ptr.vmem [resolvable:$true] %s287
          %293 = dma.hbm_to_vmem [thread:$0]  %s286, 1024, %s288, %s276, 512, 512, 32
        $region40: #{tpu_custom_call.1} parent=31 // pred_fallthru
          _
      $region32: #{tpu_custom_call.1} parent=5 // pred_fallthru
        _
      %p294 = scmp.le.s32.totalorder 1, %s24
      %p295 = scmp.lt.s32.totalorder %s24, 3
      %p296 = pnand %p294, %p295
      %p297 = pneg %p296
      // Predicated region
      $region41: #{tpu_custom_call.1} parent=5 // pred_check
        _
      $region42: #{tpu_custom_call.1} parent=5 // pred_check_branch
        %299 = sbr.rel (%p296) target = $region44
      $region43: #{tpu_custom_call.1} parent=5 // pred_region
        %s300 = ssub.s32 %s24, 1
        %s301 = sand.u32 %s63, 1
        %s302 = scalar_lea.sflag [#allocation3], %s301
        %s303 = sand.u32 %s63, 1
        %s304 = smul.addr %s303, 64
        %s305 = scalar_lea.vmem [#allocation2], %s304
        // Predicated region
        $region45: #{tpu_custom_call.1} parent=43 // pred_check
          %p306 = pneg %p76
        $region46: #{tpu_custom_call.1} parent=43 // pred_check_branch
          %308 = sbr.rel (%p306) target = $region48
        $region47: #{tpu_custom_call.1} parent=43 // pred_region
          %309 = dma.done %s302, 1024
        $region48: #{tpu_custom_call.1} parent=43 // pred_fallthru
          _
        // Predicated region
        $region49: #{tpu_custom_call.1} parent=43 // pred_check
          %p310 = pneg %p97
        $region50: #{tpu_custom_call.1} parent=43 // pred_check_branch
          %312 = sbr.rel (%p310) target = $region52
        $region51: #{tpu_custom_call.1} parent=43 // pred_region
          %313 = dma.done [#allocation6], 8192
        $region52: #{tpu_custom_call.1} parent=43 // pred_fallthru
          _
        // Predicated region
        $region53: #{tpu_custom_call.1} parent=43 // pred_check
          %p314 = pneg %p139
        $region54: #{tpu_custom_call.1} parent=43 // pred_check_branch
          %316 = sbr.rel (%p314) target = $region56
        $region55: #{tpu_custom_call.1} parent=43 // pred_region
          %317 = dma.done [#allocation6], 1024
        $region56: #{tpu_custom_call.1} parent=43 // pred_fallthru
          _
        %s318 = smul.u32 2, %s29
        %p319 = scmp.lt.s32.totalorder %s318, 3
        %s320 = scalar_select %p319, %s318, 3
        %s321 = smul.addr %s320, 8
        %s322 = scalar_lea.vmem %s0, %s321
        %p323 = pneg %p50
        %p324 = pneg %p47
        %s325 = sand.u32 %s63, 1
        %s326 = scalar_lea.sflag [#allocation3], %s325
        %s327 = sand.u32 %s63, 1
        %s328 = smul.addr %s327, 64
        %s329 = scalar_lea.vmem [#allocation2], %s328
        %p330 = pneg %p76
        %p331 = pneg %p73
        %p332 = pneg %p97
        %p333 = pneg %p94
        %p334 = pneg %p118
        %p335 = pneg %p115
        %p336 = pneg %p139
        %p337 = pneg %p136
        %p338 = pneg %p160
        %p339 = pneg %p157
        %p340 = pneg %p186
        %p341 = pneg %p183
        %s342 = sand.u32 %s173, 1
        %s343 = scalar_lea.sflag [#allocation4], %s342
        %s344 = sand.u32 %s173, 1
        %s345 = smul.addr %s344, 16
        %s346 = scalar_lea.vmem [#allocation8], %s345
        %p347 = pneg %p212
        %p348 = pneg %p209
        %s349 = sand.u32 %s199, 1
        %s350 = scalar_lea.sflag [#allocation10], %s349
        %s351 = sand.u32 %s199, 1
        %s352 = smul.addr %s351, 8
        %s353 = scalar_lea.vmem [#allocation9], %s352
        %s354 = smul.u32 2, %s29
        %p355 = scmp.lt.s32.totalorder %s354, 3
        %s356 = scalar_select %p355, %s354, 3
        %s357 = smul.addr %s356, 8
        %s358 = scalar_lea.vmem %s0, %s357
        %s359 = smul.u32 2, %s29
        %s360 = smul.u32 2, %s29
        %s361 = smul.u32 2, %s29
        %p363 = scmp.lt.s32.totalorder %s29, 1
        %v364 = vld [vmem:[%s305] sm:$0xff]
        %v365 = vld [vmem:[%s305 + $0x8] sm:$0xff]
        %v366 = vld [vmem:[%s305 + $0x10] sm:$0xff]
        %v367 = vld [vmem:[%s305 + $0x18] sm:$0xff]
        %v368 = vld [vmem:[%s305 + $0x20] sm:$0xff]
        %v369 = vld [vmem:[%s305 + $0x28] sm:$0xff]
        %v370 = vld [vmem:[%s305 + $0x30] sm:$0xff]
        %v371 = vld [vmem:[%s305 + $0x38] sm:$0xff]
        %v372 = vld [vmem:[#allocation5] sm:$0xf]
        %v373 = vld [vmem:[#allocation5 + $0x4] sm:$0xf]
        %v374 = vld [vmem:[#allocation5 + $0x8] sm:$0xf]
        %v375 = vld [vmem:[#allocation5 + $0xc] sm:$0xf]
        %v376 = vld [vmem:[#allocation5 + $0x10] sm:$0xf]
        %v377 = vld [vmem:[#allocation5 + $0x14] sm:$0xf]
        %v378 = vld [vmem:[#allocation5 + $0x18] sm:$0xf]
        %v379 = vld [vmem:[#allocation5 + $0x1c] sm:$0xf]
        %v380 = vld [vmem:[#allocation5 + $0x20] sm:$0xf]
        %v381 = vld [vmem:[#allocation5 + $0x24] sm:$0xf]
        %v382 = vld [vmem:[#allocation5 + $0x28] sm:$0xf]
        %v383 = vld [vmem:[#allocation5 + $0x2c] sm:$0xf]
        %v384 = vld [vmem:[#allocation5 + $0x30] sm:$0xf]
        %v385 = vld [vmem:[#allocation5 + $0x34] sm:$0xf]
        %v386 = vld [vmem:[#allocation5 + $0x38] sm:$0xf]
        %v387 = vld [vmem:[#allocation5 + $0x3c] sm:$0xf]
        %v388 = vld [vmem:[#allocation5 + $0x40] sm:$0xf]
        %v389 = vld [vmem:[#allocation5 + $0x44] sm:$0xf]
        %v390 = vld [vmem:[#allocation5 + $0x48] sm:$0xf]
        %v391 = vld [vmem:[#allocation5 + $0x4c] sm:$0xf]
        %v392 = vld [vmem:[#allocation5 + $0x50] sm:$0xf]
        %v393 = vld [vmem:[#allocation5 + $0x54] sm:$0xf]
        %v394 = vld [vmem:[#allocation5 + $0x58] sm:$0xf]
        %v395 = vld [vmem:[#allocation5 + $0x5c] sm:$0xf]
        %v396 = vld [vmem:[#allocation5 + $0x60] sm:$0xf]
        %v397 = vld [vmem:[#allocation5 + $0x64] sm:$0xf]
        %v398 = vld [vmem:[#allocation5 + $0x68] sm:$0xf]
        %v399 = vld [vmem:[#allocation5 + $0x6c] sm:$0xf]
        %v400 = vld [vmem:[#allocation5 + $0x70] sm:$0xf]
        %v401 = vld [vmem:[#allocation5 + $0x74] sm:$0xf]
        %v402 = vld [vmem:[#allocation5 + $0x78] sm:$0xf]
        %v403 = vld [vmem:[#allocation5 + $0x7c] sm:$0xf]
        %v404 = vld [vmem:[#allocation5 + $0x80] sm:$0xf]
        %v405 = vld [vmem:[#allocation5 + $0x84] sm:$0xf]
        %v406 = vld [vmem:[#allocation5 + $0x88] sm:$0xf]
        %v407 = vld [vmem:[#allocation5 + $0x8c] sm:$0xf]
        %v408 = vld [vmem:[#allocation5 + $0x90] sm:$0xf]
        %v409 = vld [vmem:[#allocation5 + $0x94] sm:$0xf]
        %v410 = vld [vmem:[#allocation5 + $0x98] sm:$0xf]
        %v411 = vld [vmem:[#allocation5 + $0x9c] sm:$0xf]
        %v412 = vld [vmem:[#allocation5 + $0xa0] sm:$0xf]
        %v413 = vld [vmem:[#allocation5 + $0xa4] sm:$0xf]
        %v414 = vld [vmem:[#allocation5 + $0xa8] sm:$0xf]
        %v415 = vld [vmem:[#allocation5 + $0xac] sm:$0xf]
        %v416 = vld [vmem:[#allocation5 + $0xb0] sm:$0xf]
        %v417 = vld [vmem:[#allocation5 + $0xb4] sm:$0xf]
        %v418 = vld [vmem:[#allocation5 + $0xb8] sm:$0xf]
        %v419 = vld [vmem:[#allocation5 + $0xbc] sm:$0xf]
        %v420 = vld [vmem:[#allocation5 + $0xc0] sm:$0xf]
        %v421 = vld [vmem:[#allocation5 + $0xc4] sm:$0xf]
        %v422 = vld [vmem:[#allocation5 + $0xc8] sm:$0xf]
        %v423 = vld [vmem:[#allocation5 + $0xcc] sm:$0xf]
        %v424 = vld [vmem:[#allocation5 + $0xd0] sm:$0xf]
        %v425 = vld [vmem:[#allocation5 + $0xd4] sm:$0xf]
        %v426 = vld [vmem:[#allocation5 + $0xd8] sm:$0xf]
        %v427 = vld [vmem:[#allocation5 + $0xdc] sm:$0xf]
        %v428 = vld [vmem:[#allocation5 + $0xe0] sm:$0xf]
        %v429 = vld [vmem:[#allocation5 + $0xe4] sm:$0xf]
        %v430 = vld [vmem:[#allocation5 + $0xe8] sm:$0xf]
        %v431 = vld [vmem:[#allocation5 + $0xec] sm:$0xf]
        %v432 = vld [vmem:[#allocation5 + $0xf0] sm:$0xf]
        %v433 = vld [vmem:[#allocation5 + $0xf4] sm:$0xf]
        %v434 = vld [vmem:[#allocation5 + $0xf8] sm:$0xf]
        %v435 = vld [vmem:[#allocation5 + $0xfc] sm:$0xf]
        %v436 = vld [vmem:[#allocation5 + $0x100] sm:$0xf]
        %v437 = vld [vmem:[#allocation5 + $0x104] sm:$0xf]
        %v438 = vld [vmem:[#allocation5 + $0x108] sm:$0xf]
        %v439 = vld [vmem:[#allocation5 + $0x10c] sm:$0xf]
        %v440 = vld [vmem:[#allocation5 + $0x110] sm:$0xf]
        %v441 = vld [vmem:[#allocation5 + $0x114] sm:$0xf]
        %v442 = vld [vmem:[#allocation5 + $0x118] sm:$0xf]
        %v443 = vld [vmem:[#allocation5 + $0x11c] sm:$0xf]
        %v444 = vld [vmem:[#allocation5 + $0x120] sm:$0xf]
        %v445 = vld [vmem:[#allocation5 + $0x124] sm:$0xf]
        %v446 = vld [vmem:[#allocation5 + $0x128] sm:$0xf]
        %v447 = vld [vmem:[#allocation5 + $0x12c] sm:$0xf]
        %v448 = vld [vmem:[#allocation5 + $0x130] sm:$0xf]
        %v449 = vld [vmem:[#allocation5 + $0x134] sm:$0xf]
        %v450 = vld [vmem:[#allocation5 + $0x138] sm:$0xf]
        %v451 = vld [vmem:[#allocation5 + $0x13c] sm:$0xf]
        %v452 = vld [vmem:[#allocation5 + $0x140] sm:$0xf]
        %v453 = vld [vmem:[#allocation5 + $0x144] sm:$0xf]
        %v454 = vld [vmem:[#allocation5 + $0x148] sm:$0xf]
        %v455 = vld [vmem:[#allocation5 + $0x14c] sm:$0xf]
        %v456 = vld [vmem:[#allocation5 + $0x150] sm:$0xf]
        %v457 = vld [vmem:[#allocation5 + $0x154] sm:$0xf]
        %v458 = vld [vmem:[#allocation5 + $0x158] sm:$0xf]
        %v459 = vld [vmem:[#allocation5 + $0x15c] sm:$0xf]
        %v460 = vld [vmem:[#allocation5 + $0x160] sm:$0xf]
        %v461 = vld [vmem:[#allocation5 + $0x164] sm:$0xf]
        %v462 = vld [vmem:[#allocation5 + $0x168] sm:$0xf]
        %v463 = vld [vmem:[#allocation5 + $0x16c] sm:$0xf]
        %v464 = vld [vmem:[#allocation5 + $0x170] sm:$0xf]
        %v465 = vld [vmem:[#allocation5 + $0x174] sm:$0xf]
        %v466 = vld [vmem:[#allocation5 + $0x178] sm:$0xf]
        %v467 = vld [vmem:[#allocation5 + $0x17c] sm:$0xf]
        %v468 = vld [vmem:[#allocation5 + $0x180] sm:$0xf]
        %v469 = vld [vmem:[#allocation5 + $0x184] sm:$0xf]
        %v470 = vld [vmem:[#allocation5 + $0x188] sm:$0xf]
        %v471 = vld [vmem:[#allocation5 + $0x18c] sm:$0xf]
        %v472 = vld [vmem:[#allocation5 + $0x190] sm:$0xf]
        %v473 = vld [vmem:[#allocation5 + $0x194] sm:$0xf]
        %v474 = vld [vmem:[#allocation5 + $0x198] sm:$0xf]
        %v475 = vld [vmem:[#allocation5 + $0x19c] sm:$0xf]
        %v476 = vld [vmem:[#allocation5 + $0x1a0] sm:$0xf]
        %v477 = vld [vmem:[#allocation5 + $0x1a4] sm:$0xf]
        %v478 = vld [vmem:[#allocation5 + $0x1a8] sm:$0xf]
        %v479 = vld [vmem:[#allocation5 + $0x1ac] sm:$0xf]
        %v480 = vld [vmem:[#allocation5 + $0x1b0] sm:$0xf]
        %v481 = vld [vmem:[#allocation5 + $0x1b4] sm:$0xf]
        %v482 = vld [vmem:[#allocation5 + $0x1b8] sm:$0xf]
        %v483 = vld [vmem:[#allocation5 + $0x1bc] sm:$0xf]
        %v484 = vld [vmem:[#allocation5 + $0x1c0] sm:$0xf]
        %v485 = vld [vmem:[#allocation5 + $0x1c4] sm:$0xf]
        %v486 = vld [vmem:[#allocation5 + $0x1c8] sm:$0xf]
        %v487 = vld [vmem:[#allocation5 + $0x1cc] sm:$0xf]
        %v488 = vld [vmem:[#allocation5 + $0x1d0] sm:$0xf]
        %v489 = vld [vmem:[#allocation5 + $0x1d4] sm:$0xf]
        %v490 = vld [vmem:[#allocation5 + $0x1d8] sm:$0xf]
        %v491 = vld [vmem:[#allocation5 + $0x1dc] sm:$0xf]
        %v492 = vld [vmem:[#allocation5 + $0x1e0] sm:$0xf]
        %v493 = vld [vmem:[#allocation5 + $0x1e4] sm:$0xf]
        %v494 = vld [vmem:[#allocation5 + $0x1e8] sm:$0xf]
        %v495 = vld [vmem:[#allocation5 + $0x1ec] sm:$0xf]
        %v496 = vld [vmem:[#allocation5 + $0x1f0] sm:$0xf]
        %v497 = vld [vmem:[#allocation5 + $0x1f4] sm:$0xf]
        %v498 = vld [vmem:[#allocation5 + $0x1f8] sm:$0xf]
        %v499 = vld [vmem:[#allocation5 + $0x1fc] sm:$0xf]
        %v500 = vld [vmem:[%s3] sm:$0x1]
        %v502 = vlaneseq
        %v503 = vshrl.u32 %v502, 7
        %v504 = vsub.s32 0, %v503
        %v505 = vrot.slane %v500, %v504
        %v515 = vunpack.c.l.b16 %v364
        %v516 = vunpack.c.h.b16 %v364
        %v517 = vunpack.c.l.b16 %v365
        %v518 = vunpack.c.h.b16 %v365
        %v519 = vunpack.c.l.b16 %v366
        %v520 = vunpack.c.h.b16 %v366
        %v521 = vunpack.c.l.b16 %v367
        %v522 = vunpack.c.h.b16 %v367
        %v523 = vunpack.c.l.b16 %v368
        %v524 = vunpack.c.h.b16 %v368
        %v525 = vunpack.c.l.b16 %v369
        %v526 = vunpack.c.h.b16 %v369
        %v527 = vunpack.c.l.b16 %v370
        %v528 = vunpack.c.h.b16 %v370
        %v529 = vunpack.c.l.b16 %v371
        %v530 = vunpack.c.h.b16 %v371
        %v531 = vpack.c.b16 %v523, %v515
        %v532 = vpack.c.b16 %v524, %v516
        %v533 = vpack.c.b16 %v525, %v517
        %v534 = vpack.c.b16 %v526, %v518
        %v535 = vpack.c.b16 %v527, %v519
        %v536 = vpack.c.b16 %v528, %v520
        %v537 = vpack.c.b16 %v529, %v521
        %v538 = vpack.c.b16 %v530, %v522
        %v675 = vunpack.c.l.b16 %v372
        %v676 = vunpack.c.l.b16 %v373
        %v677 = vunpack.c.l.b16 %v374
        %v678 = vunpack.c.l.b16 %v375
        %v679 = vunpack.c.l.b16 %v376
        %v680 = vunpack.c.l.b16 %v377
        %v681 = vunpack.c.l.b16 %v378
        %v682 = vunpack.c.l.b16 %v379
        %v683 = vunpack.c.l.b16 %v380
        %v684 = vunpack.c.l.b16 %v381
        %v685 = vunpack.c.l.b16 %v382
        %v686 = vunpack.c.l.b16 %v383
        %v687 = vunpack.c.l.b16 %v384
        %v688 = vunpack.c.l.b16 %v385
        %v689 = vunpack.c.l.b16 %v386
        %v690 = vunpack.c.l.b16 %v387
        %v691 = vunpack.c.l.b16 %v388
        %v692 = vunpack.c.l.b16 %v389
        %v693 = vunpack.c.l.b16 %v390
        %v694 = vunpack.c.l.b16 %v391
        %v695 = vunpack.c.l.b16 %v392
        %v696 = vunpack.c.l.b16 %v393
        %v697 = vunpack.c.l.b16 %v394
        %v698 = vunpack.c.l.b16 %v395
        %v699 = vunpack.c.l.b16 %v396
        %v700 = vunpack.c.l.b16 %v397
        %v701 = vunpack.c.l.b16 %v398
        %v702 = vunpack.c.l.b16 %v399
        %v703 = vunpack.c.l.b16 %v400
        %v704 = vunpack.c.l.b16 %v401
        %v705 = vunpack.c.l.b16 %v402
        %v706 = vunpack.c.l.b16 %v403
        %v707 = vunpack.c.l.b16 %v404
        %v708 = vunpack.c.l.b16 %v405
        %v709 = vunpack.c.l.b16 %v406
        %v710 = vunpack.c.l.b16 %v407
        %v711 = vunpack.c.l.b16 %v408
        %v712 = vunpack.c.l.b16 %v409
        %v713 = vunpack.c.l.b16 %v410
        %v714 = vunpack.c.l.b16 %v411
        %v715 = vunpack.c.l.b16 %v412
        %v716 = vunpack.c.l.b16 %v413
        %v717 = vunpack.c.l.b16 %v414
        %v718 = vunpack.c.l.b16 %v415
        %v719 = vunpack.c.l.b16 %v416
        %v720 = vunpack.c.l.b16 %v417
        %v721 = vunpack.c.l.b16 %v418
        %v722 = vunpack.c.l.b16 %v419
        %v723 = vunpack.c.l.b16 %v420
        %v724 = vunpack.c.l.b16 %v421
        %v725 = vunpack.c.l.b16 %v422
        %v726 = vunpack.c.l.b16 %v423
        %v727 = vunpack.c.l.b16 %v424
        %v728 = vunpack.c.l.b16 %v425
        %v729 = vunpack.c.l.b16 %v426
        %v730 = vunpack.c.l.b16 %v427
        %v731 = vunpack.c.l.b16 %v428
        %v732 = vunpack.c.l.b16 %v429
        %v733 = vunpack.c.l.b16 %v430
        %v734 = vunpack.c.l.b16 %v431
        %v735 = vunpack.c.l.b16 %v432
        %v736 = vunpack.c.l.b16 %v433
        %v737 = vunpack.c.l.b16 %v434
        %v738 = vunpack.c.l.b16 %v435
        %v739 = vunpack.c.l.b16 %v436
        %v740 = vunpack.c.l.b16 %v437
        %v741 = vunpack.c.l.b16 %v438
        %v742 = vunpack.c.l.b16 %v439
        %v743 = vunpack.c.l.b16 %v440
        %v744 = vunpack.c.l.b16 %v441
        %v745 = vunpack.c.l.b16 %v442
        %v746 = vunpack.c.l.b16 %v443
        %v747 = vunpack.c.l.b16 %v444
        %v748 = vunpack.c.l.b16 %v445
        %v749 = vunpack.c.l.b16 %v446
        %v750 = vunpack.c.l.b16 %v447
        %v751 = vunpack.c.l.b16 %v448
        %v752 = vunpack.c.l.b16 %v449
        %v753 = vunpack.c.l.b16 %v450
        %v754 = vunpack.c.l.b16 %v451
        %v755 = vunpack.c.l.b16 %v452
        %v756 = vunpack.c.l.b16 %v453
        %v757 = vunpack.c.l.b16 %v454
        %v758 = vunpack.c.l.b16 %v455
        %v759 = vunpack.c.l.b16 %v456
        %v760 = vunpack.c.l.b16 %v457
        %v761 = vunpack.c.l.b16 %v458
        %v762 = vunpack.c.l.b16 %v459
        %v763 = vunpack.c.l.b16 %v460
        %v764 = vunpack.c.l.b16 %v461
        %v765 = vunpack.c.l.b16 %v462
        %v766 = vunpack.c.l.b16 %v463
        %v767 = vunpack.c.l.b16 %v464
        %v768 = vunpack.c.l.b16 %v465
        %v769 = vunpack.c.l.b16 %v466
        %v770 = vunpack.c.l.b16 %v467
        %v771 = vunpack.c.l.b16 %v468
        %v772 = vunpack.c.l.b16 %v469
        %v773 = vunpack.c.l.b16 %v470
        %v774 = vunpack.c.l.b16 %v471
        %v775 = vunpack.c.l.b16 %v472
        %v776 = vunpack.c.l.b16 %v473
        %v777 = vunpack.c.l.b16 %v474
        %v778 = vunpack.c.l.b16 %v475
        %v779 = vunpack.c.l.b16 %v476
        %v780 = vunpack.c.l.b16 %v477
        %v781 = vunpack.c.l.b16 %v478
        %v782 = vunpack.c.l.b16 %v479
        %v783 = vunpack.c.l.b16 %v480
        %v784 = vunpack.c.l.b16 %v481
        %v785 = vunpack.c.l.b16 %v482
        %v786 = vunpack.c.l.b16 %v483
        %v787 = vunpack.c.l.b16 %v484
        %v788 = vunpack.c.l.b16 %v485
        %v789 = vunpack.c.l.b16 %v486
        %v790 = vunpack.c.l.b16 %v487
        %v791 = vunpack.c.l.b16 %v488
        %v792 = vunpack.c.l.b16 %v489
        %v793 = vunpack.c.l.b16 %v490
        %v794 = vunpack.c.l.b16 %v491
        %v795 = vunpack.c.l.b16 %v492
        %v796 = vunpack.c.l.b16 %v493
        %v797 = vunpack.c.l.b16 %v494
        %v798 = vunpack.c.l.b16 %v495
        %v799 = vunpack.c.l.b16 %v496
        %v800 = vunpack.c.l.b16 %v497
        %v801 = vunpack.c.l.b16 %v498
        %v802 = vunpack.c.l.b16 %v499
        %v803 = vpack.c.b16 %v676, %v675
        %v804 = vpack.c.b16 %v678, %v677
        %v805 = vpack.c.b16 %v680, %v679
        %v806 = vpack.c.b16 %v682, %v681
        %v807 = vpack.c.b16 %v684, %v683
        %v808 = vpack.c.b16 %v686, %v685
        %v809 = vpack.c.b16 %v688, %v687
        %v810 = vpack.c.b16 %v690, %v689
        %v811 = vpack.c.b16 %v692, %v691
        %v812 = vpack.c.b16 %v694, %v693
        %v813 = vpack.c.b16 %v696, %v695
        %v814 = vpack.c.b16 %v698, %v697
        %v815 = vpack.c.b16 %v700, %v699
        %v816 = vpack.c.b16 %v702, %v701
        %v817 = vpack.c.b16 %v704, %v703
        %v818 = vpack.c.b16 %v706, %v705
        %v819 = vpack.c.b16 %v708, %v707
        %v820 = vpack.c.b16 %v710, %v709
        %v821 = vpack.c.b16 %v712, %v711
        %v822 = vpack.c.b16 %v714, %v713
        %v823 = vpack.c.b16 %v716, %v715
        %v824 = vpack.c.b16 %v718, %v717
        %v825 = vpack.c.b16 %v720, %v719
        %v826 = vpack.c.b16 %v722, %v721
        %v827 = vpack.c.b16 %v724, %v723
        %v828 = vpack.c.b16 %v726, %v725
        %v829 = vpack.c.b16 %v728, %v727
        %v830 = vpack.c.b16 %v730, %v729
        %v831 = vpack.c.b16 %v732, %v731
        %v832 = vpack.c.b16 %v734, %v733
        %v833 = vpack.c.b16 %v736, %v735
        %v834 = vpack.c.b16 %v738, %v737
        %v835 = vpack.c.b16 %v740, %v739
        %v836 = vpack.c.b16 %v742, %v741
        %v837 = vpack.c.b16 %v744, %v743
        %v838 = vpack.c.b16 %v746, %v745
        %v839 = vpack.c.b16 %v748, %v747
        %v840 = vpack.c.b16 %v750, %v749
        %v841 = vpack.c.b16 %v752, %v751
        %v842 = vpack.c.b16 %v754, %v753
        %v843 = vpack.c.b16 %v756, %v755
        %v844 = vpack.c.b16 %v758, %v757
        %v845 = vpack.c.b16 %v760, %v759
        %v846 = vpack.c.b16 %v762, %v761
        %v847 = vpack.c.b16 %v764, %v763
        %v848 = vpack.c.b16 %v766, %v765
        %v849 = vpack.c.b16 %v768, %v767
        %v850 = vpack.c.b16 %v770, %v769
        %v851 = vpack.c.b16 %v772, %v771
        %v852 = vpack.c.b16 %v774, %v773
        %v853 = vpack.c.b16 %v776, %v775
        %v854 = vpack.c.b16 %v778, %v777
        %v855 = vpack.c.b16 %v780, %v779
        %v856 = vpack.c.b16 %v782, %v781
        %v857 = vpack.c.b16 %v784, %v783
        %v858 = vpack.c.b16 %v786, %v785
        %v859 = vpack.c.b16 %v788, %v787
        %v860 = vpack.c.b16 %v790, %v789
        %v861 = vpack.c.b16 %v792, %v791
        %v862 = vpack.c.b16 %v794, %v793
        %v863 = vpack.c.b16 %v796, %v795
        %v864 = vpack.c.b16 %v798, %v797
        %v865 = vpack.c.b16 %v800, %v799
        %v866 = vpack.c.b16 %v802, %v801
        %931 = vmatprep.subr.bf16.mxu0 0
        %932 = vmatpush1.bf16.msra.mxu0 %v803
        %933 = vmatprep.subr.bf16.mxu0 0
        %934 = vmatpush1.bf16.msra.mxu0 %v804
        %935 = vmatprep.subr.bf16.mxu0 0
        %936 = vmatpush1.bf16.msra.mxu0 %v805
        %937 = vmatprep.subr.bf16.mxu0 0
        %938 = vmatpush1.bf16.msra.mxu0 %v806
        %939 = vmatprep.subr.bf16.mxu0 0
        %940 = vmatpush1.bf16.msra.mxu0 %v807
        %941 = vmatprep.subr.bf16.mxu0 0
        %942 = vmatpush1.bf16.msra.mxu0 %v808
        %943 = vmatprep.subr.bf16.mxu0 0
        %944 = vmatpush1.bf16.msra.mxu0 %v809
        %945 = vmatprep.subr.bf16.mxu0 0
        %946 = vmatpush1.bf16.msra.mxu0 %v810
        %947 = vmatprep.subr.bf16.mxu0 0
        %948 = vmatpush1.bf16.msra.mxu0 %v811
        %949 = vmatprep.subr.bf16.mxu0 0
        %950 = vmatpush1.bf16.msra.mxu0 %v812
        %951 = vmatprep.subr.bf16.mxu0 0
        %952 = vmatpush1.bf16.msra.mxu0 %v813
        %953 = vmatprep.subr.bf16.mxu0 0
        %954 = vmatpush1.bf16.msra.mxu0 %v814
        %955 = vmatprep.subr.bf16.mxu0 0
        %956 = vmatpush1.bf16.msra.mxu0 %v815
        %957 = vmatprep.subr.bf16.mxu0 0
        %958 = vmatpush1.bf16.msra.mxu0 %v816
        %959 = vmatprep.subr.bf16.mxu0 0
        %960 = vmatpush1.bf16.msra.mxu0 %v817
        %961 = vmatprep.subr.bf16.mxu0 0
        %962 = vmatpush1.bf16.msra.mxu0 %v818
        %963 = vmatprep.mubr.bf16.mxu0 %v532
        %964 = vmatmul.mubr.bf16.gmra.mrb[0].mxu0 %v531
        %v965 = vpop.f32.mrb[0].mxu0
        %v966 = vadd.f32 %v505, %v965
        %v967 = vpop.f32.mrb[0].mxu0
        %v968 = vpop.f32.mrb[0].mxu0
        %v969 = vadd.f32 %v505, %v968
        %v970 = vpop.f32.mrb[0].mxu0
        %971 = vdwg.mxu0
        %972 = vmatprep.subr.bf16.mxu0 0
        %973 = vmatpush1.bf16.msra.mxu0 %v819
        %974 = vmatprep.subr.bf16.mxu0 0
        %975 = vmatpush1.bf16.msra.mxu0 %v820
        %976 = vmatprep.subr.bf16.mxu0 0
        %977 = vmatpush1.bf16.msra.mxu0 %v821
        %978 = vmatprep.subr.bf16.mxu0 0
        %979 = vmatpush1.bf16.msra.mxu0 %v822
        %980 = vmatprep.subr.bf16.mxu0 0
        %981 = vmatpush1.bf16.msra.mxu0 %v823
        %982 = vmatprep.subr.bf16.mxu0 0
        %983 = vmatpush1.bf16.msra.mxu0 %v824
        %984 = vmatprep.subr.bf16.mxu0 0
        %985 = vmatpush1.bf16.msra.mxu0 %v825
        %986 = vmatprep.subr.bf16.mxu0 0
        %987 = vmatpush1.bf16.msra.mxu0 %v826
        %988 = vmatprep.subr.bf16.mxu0 0
        %989 = vmatpush1.bf16.msra.mxu0 %v827
        %990 = vmatprep.subr.bf16.mxu0 0
        %991 = vmatpush1.bf16.msra.mxu0 %v828
        %992 = vmatprep.subr.bf16.mxu0 0
        %993 = vmatpush1.bf16.msra.mxu0 %v829
        %994 = vmatprep.subr.bf16.mxu0 0
        %995 = vmatpush1.bf16.msra.mxu0 %v830
        %996 = vmatprep.subr.bf16.mxu0 0
        %997 = vmatpush1.bf16.msra.mxu0 %v831
        %998 = vmatprep.subr.bf16.mxu0 0
        %999 = vmatpush1.bf16.msra.mxu0 %v832
        %1000 = vmatprep.subr.bf16.mxu0 0
        %1001 = vmatpush1.bf16.msra.mxu0 %v833
        %1002 = vmatprep.subr.bf16.mxu0 0
        %1003 = vmatpush1.bf16.msra.mxu0 %v834
        %1004 = vmatprep.mubr.bf16.mxu0 %v534
        %1005 = vmatmul.mubr.bf16.gmra.mrb[0].mxu0 %v533
        %v1006 = vpop.f32.mrb[0].mxu0
        %v1007 = vadd.f32 %v966, %v1006
        %v1008 = vpop.f32.mrb[0].mxu0
        %v1009 = vpop.f32.mrb[0].mxu0
        %v1010 = vadd.f32 %v969, %v1009
        %v1011 = vpop.f32.mrb[0].mxu0
        %1012 = vdwg.mxu0
        %1013 = vmatprep.subr.bf16.mxu0 0
        %1014 = vmatpush1.bf16.msra.mxu0 %v835
        %1015 = vmatprep.subr.bf16.mxu0 0
        %1016 = vmatpush1.bf16.msra.mxu0 %v836
        %1017 = vmatprep.subr.bf16.mxu0 0
        %1018 = vmatpush1.bf16.msra.mxu0 %v837
        %1019 = vmatprep.subr.bf16.mxu0 0
        %1020 = vmatpush1.bf16.msra.mxu0 %v838
        %1021 = vmatprep.subr.bf16.mxu0 0
        %1022 = vmatpush1.bf16.msra.mxu0 %v839
        %1023 = vmatprep.subr.bf16.mxu0 0
        %1024 = vmatpush1.bf16.msra.mxu0 %v840
        %1025 = vmatprep.subr.bf16.mxu0 0
        %1026 = vmatpush1.bf16.msra.mxu0 %v841
        %1027 = vmatprep.subr.bf16.mxu0 0
        %1028 = vmatpush1.bf16.msra.mxu0 %v842
        %1029 = vmatprep.subr.bf16.mxu0 0
        %1030 = vmatpush1.bf16.msra.mxu0 %v843
        %1031 = vmatprep.subr.bf16.mxu0 0
        %1032 = vmatpush1.bf16.msra.mxu0 %v844
        %1033 = vmatprep.subr.bf16.mxu0 0
        %1034 = vmatpush1.bf16.msra.mxu0 %v845
        %1035 = vmatprep.subr.bf16.mxu0 0
        %1036 = vmatpush1.bf16.msra.mxu0 %v846
        %1037 = vmatprep.subr.bf16.mxu0 0
        %1038 = vmatpush1.bf16.msra.mxu0 %v847
        %1039 = vmatprep.subr.bf16.mxu0 0
        %1040 = vmatpush1.bf16.msra.mxu0 %v848
        %1041 = vmatprep.subr.bf16.mxu0 0
        %1042 = vmatpush1.bf16.msra.mxu0 %v849
        %1043 = vmatprep.subr.bf16.mxu0 0
        %1044 = vmatpush1.bf16.msra.mxu0 %v850
        %1045 = vmatprep.mubr.bf16.mxu0 %v536
        %1046 = vmatmul.mubr.bf16.gmra.mrb[0].mxu0 %v535
        %v1047 = vpop.f32.mrb[0].mxu0
        %v1048 = vadd.f32 %v1007, %v1047
        %v1049 = vpop.f32.mrb[0].mxu0
        %v1050 = vpop.f32.mrb[0].mxu0
        %v1051 = vadd.f32 %v1010, %v1050
        %v1052 = vpop.f32.mrb[0].mxu0
        %1053 = vdwg.mxu0
        %1054 = vmatprep.subr.bf16.mxu0 0
        %1055 = vmatpush1.bf16.msra.mxu0 %v851
        %1056 = vmatprep.subr.bf16.mxu0 0
        %1057 = vmatpush1.bf16.msra.mxu0 %v852
        %1058 = vmatprep.subr.bf16.mxu0 0
        %1059 = vmatpush1.bf16.msra.mxu0 %v853
        %1060 = vmatprep.subr.bf16.mxu0 0
        %1061 = vmatpush1.bf16.msra.mxu0 %v854
        %1062 = vmatprep.subr.bf16.mxu0 0
        %1063 = vmatpush1.bf16.msra.mxu0 %v855
        %1064 = vmatprep.subr.bf16.mxu0 0
        %1065 = vmatpush1.bf16.msra.mxu0 %v856
        %1066 = vmatprep.subr.bf16.mxu0 0
        %1067 = vmatpush1.bf16.msra.mxu0 %v857
        %1068 = vmatprep.subr.bf16.mxu0 0
        %1069 = vmatpush1.bf16.msra.mxu0 %v858
        %1070 = vmatprep.subr.bf16.mxu0 0
        %1071 = vmatpush1.bf16.msra.mxu0 %v859
        %1072 = vmatprep.subr.bf16.mxu0 0
        %1073 = vmatpush1.bf16.msra.mxu0 %v860
        %1074 = vmatprep.subr.bf16.mxu0 0
        %1075 = vmatpush1.bf16.msra.mxu0 %v861
        %1076 = vmatprep.subr.bf16.mxu0 0
        %1077 = vmatpush1.bf16.msra.mxu0 %v862
        %1078 = vmatprep.subr.bf16.mxu0 0
        %1079 = vmatpush1.bf16.msra.mxu0 %v863
        %1080 = vmatprep.subr.bf16.mxu0 0
        %1081 = vmatpush1.bf16.msra.mxu0 %v864
        %1082 = vmatprep.subr.bf16.mxu0 0
        %1083 = vmatpush1.bf16.msra.mxu0 %v865
        %1084 = vmatprep.subr.bf16.mxu0 0
        %1085 = vmatpush1.bf16.msra.mxu0 %v866
        %1086 = vmatprep.mubr.bf16.mxu0 %v538
        %1087 = vmatmul.mubr.bf16.gmra.mrb[0].mxu0 %v537
        %v1088 = vpop.f32.mrb[0].mxu0
        %v1089 = vadd.f32 %v1048, %v1088
        %v1090 = vpop.f32.mrb[0].mxu0
        %v1091 = vpop.f32.mrb[0].mxu0
        %v1092 = vadd.f32 %v1051, %v1091
        %v1093 = vpop.f32.mrb[0].mxu0
        %1094 = vdwg.mxu0
        %v1095 = vmax.f32 %v1089, 0.0
        %v1096 = vmax.f32 %v1092, 0.0
        %v1097 = vpack.c.bf16 %v1096, %v1095
        %v1098 = vld [vmem:[#allocation7] sm:$0xf]
        %v1099 = vld [vmem:[#allocation7 + $0x4] sm:$0xf]
        %v1100 = vld [vmem:[#allocation7 + $0x8] sm:$0xf]
        %v1101 = vld [vmem:[#allocation7 + $0xc] sm:$0xf]
        %v1102 = vld [vmem:[#allocation7 + $0x10] sm:$0xf]
        %v1103 = vld [vmem:[#allocation7 + $0x14] sm:$0xf]
        %v1104 = vld [vmem:[#allocation7 + $0x18] sm:$0xf]
        %v1105 = vld [vmem:[#allocation7 + $0x1c] sm:$0xf]
        %v1106 = vld [vmem:[#allocation7 + $0x20] sm:$0xf]
        %v1107 = vld [vmem:[#allocation7 + $0x24] sm:$0xf]
        %v1108 = vld [vmem:[#allocation7 + $0x28] sm:$0xf]
        %v1109 = vld [vmem:[#allocation7 + $0x2c] sm:$0xf]
        %v1110 = vld [vmem:[#allocation7 + $0x30] sm:$0xf]
        %v1111 = vld [vmem:[#allocation7 + $0x34] sm:$0xf]
        %v1112 = vld [vmem:[#allocation7 + $0x38] sm:$0xf]
        %v1113 = vld [vmem:[#allocation7 + $0x3c] sm:$0xf]
        %v1114 = vld [vmem:[%s5] sm:$0x1]
        %v1116 = vlaneseq
        %v1117 = vshrl.u32 %v1116, 7
        %v1118 = vsub.s32 0, %v1117
        %v1119 = vrot.slane %v1114, %v1118
        %v1137 = vunpack.c.l.b16 %v1098
        %v1138 = vunpack.c.l.b16 %v1099
        %v1139 = vunpack.c.l.b16 %v1100
        %v1140 = vunpack.c.l.b16 %v1101
        %v1141 = vunpack.c.l.b16 %v1102
        %v1142 = vunpack.c.l.b16 %v1103
        %v1143 = vunpack.c.l.b16 %v1104
        %v1144 = vunpack.c.l.b16 %v1105
        %v1145 = vunpack.c.l.b16 %v1106
        %v1146 = vunpack.c.l.b16 %v1107
        %v1147 = vunpack.c.l.b16 %v1108
        %v1148 = vunpack.c.l.b16 %v1109
        %v1149 = vunpack.c.l.b16 %v1110
        %v1150 = vunpack.c.l.b16 %v1111
        %v1151 = vunpack.c.l.b16 %v1112
        %v1152 = vunpack.c.l.b16 %v1113
        %v1153 = vpack.c.b16 %v1138, %v1137
        %v1154 = vpack.c.b16 %v1140, %v1139
        %v1155 = vpack.c.b16 %v1142, %v1141
        %v1156 = vpack.c.b16 %v1144, %v1143
        %v1157 = vpack.c.b16 %v1146, %v1145
        %v1158 = vpack.c.b16 %v1148, %v1147
        %v1159 = vpack.c.b16 %v1150, %v1149
        %v1160 = vpack.c.b16 %v1152, %v1151
        %1169 = vmatprep.subr.bf16.mxu0 0
        %1170 = vmatpush1.bf16.msra.mxu0 %v1153
        %1171 = vmatprep.subr.bf16.mxu0 0
        %1172 = vmatpush1.bf16.msra.mxu0 %v1154
        %1173 = vmatprep.subr.bf16.mxu0 0
        %1174 = vmatpush1.bf16.msra.mxu0 %v1155
        %1175 = vmatprep.subr.bf16.mxu0 0
        %1176 = vmatpush1.bf16.msra.mxu0 %v1156
        %1177 = vmatprep.subr.bf16.mxu0 0
        %1178 = vmatpush1.bf16.msra.mxu0 %v1157
        %1179 = vmatprep.subr.bf16.mxu0 0
        %1180 = vmatpush1.bf16.msra.mxu0 %v1158
        %1181 = vmatprep.subr.bf16.mxu0 0
        %1182 = vmatpush1.bf16.msra.mxu0 %v1159
        %1183 = vmatprep.subr.bf16.mxu0 0
        %1184 = vmatpush1.bf16.msra.mxu0 %v1160
        %1185 = vmatprep.subr.bf16.mxu0 0
        %1186 = vmatpush1.bf16.msra.mxu0 0
        %1187 = vmatprep.subr.bf16.mxu0 0
        %1188 = vmatpush1.bf16.msra.mxu0 0
        %1189 = vmatprep.subr.bf16.mxu0 0
        %1190 = vmatpush1.bf16.msra.mxu0 0
        %1191 = vmatprep.subr.bf16.mxu0 0
        %1192 = vmatpush1.bf16.msra.mxu0 0
        %1193 = vmatprep.subr.bf16.mxu0 0
        %1194 = vmatpush1.bf16.msra.mxu0 0
        %1195 = vmatprep.subr.bf16.mxu0 0
        %1196 = vmatpush1.bf16.msra.mxu0 0
        %1197 = vmatprep.subr.bf16.mxu0 0
        %1198 = vmatpush1.bf16.msra.mxu0 0
        %1199 = vmatprep.subr.bf16.mxu0 0
        %1200 = vmatpush1.bf16.msra.mxu0 0
        %1201 = vmatprep.mubr.bf16.mxu0 0
        %1202 = vmatmul.mubr.bf16.gmra.mrb[0].mxu0 %v1097
        %v1203 = vpop.f32.mrb[0].mxu0
        %v1204 = vadd.f32 %v1119, %v1203
        %v1205 = vpop.f32.mrb[0].mxu0
        %v1206 = vpop.f32.mrb[0].mxu0
        %v1207 = vadd.f32 %v1119, %v1206
        %v1208 = vpop.f32.mrb[0].mxu0
        %1209 = vdwg.mxu0
        %v1210 = vlaneseq
        %v1211 = vand.u32 %v1210, 127
        %vm1212 = vcmp.lt.s32.totalorder %v1211, 8
        %v1213 = vsel %vm1212, %v1204, -1e+30
        %v1214 = vsel %vm1212, %v1207, -1e+30
        %1215 = vmax.xlane.f32.xlu0 %v1213
        %v1216 = vpop.xlane.xlu0 %1215
        %1217 = vmax.xlane.f32.xlu0 %v1214
        %v1218 = vpop.xlane.xlu0 %1217
        %v1219 = vsub.f32 %v1213, %v1216
        %v1220 = vsub.f32 %v1214, %v1218
        %v1221 = vmul.f32 %v1219, 1.442695
        %v1222 = vpow.pop %v1221
        %v1223 = vmul.f32 %v1220, 1.442695
        %v1224 = vpow.pop %v1223
        %1225 = vadd.xlane.f32.xlu0 %v1222
        %v1226 = vpop.xlane.xlu0 %1225
        %1227 = vadd.xlane.f32.xlu0 %v1224
        %v1228 = vpop.xlane.xlu0 %1227
        %v1229 = vlog2.pop %v1226
        %v1230 = vmul.f32 %v1229, 0.6931472
        %v1231 = vlog2.pop %v1228
        %v1232 = vmul.f32 %v1231, 0.6931472
        %v1233 = vadd.f32 %v1216, %v1230
        %v1234 = vadd.f32 %v1218, %v1232
        %s1235 = ssub.s32 %s29, 1
        %s1236 = scalar_select %p363, %s29, %s1235
        %s1237 = smul.u32 %s1236, 16
        %v1238 = vlaneseq
        %v1239 = vshrl.u32 %v1238, 7
        %v1240 = vadd.s32 %v1239, 8
        %s1241 = ssub.s32 2, %s1237
        %v1242 = vstv %s1241
        %vm1243 = vcmp.lt.s32.totalorder %v1239, %v1242
        %vm1244 = vcmp.lt.s32.totalorder %v1240, %v1242
        %v1245 = vsel %vm1243, 1, 0
        %v1246 = vsel %vm1244, 1, 0
        %v1247 = vcvt.s32.f32 %v1245
        %v1248 = vcvt.s32.f32 %v1246
        %v1249 = vld [vmem:[%s358] sm:$0xff]
        %v1250 = vld [vmem:[%s358 + $0x8] sm:$0xff]
        %1251 = vset.pattern.permute.xlu0 0
        %1252 = vperm.xlu0 %1251, %v1249
        %v1253 = vpop.permute.xlu0 %1252
        %1254 = vset.pattern.permute.xlu0 0
        %1255 = vperm.xlu0 %1254, %v1250
        %v1256 = vpop.permute.xlu0 %1255
        %vm1257 = vcmp.eq.s32.totalorder %v1211, %v1253
        %vm1258 = vcmp.eq.s32.totalorder %v1211, %v1256
        %v1259 = vsel %vm1257, %v1204, 0.0
        %v1260 = vsel %vm1258, %v1207, 0.0
        %1261 = vadd.xlane.f32.xlu0 %v1259
        %v1262 = vpop.xlane.xlu0 %1261
        %1263 = vadd.xlane.f32.xlu0 %v1260
        %v1264 = vpop.xlane.xlu0 %1263
        %v1265 = vsub.f32 %v1233, %v1262
        %v1266 = vsub.f32 %v1234, %v1264
        %vm1267 = vcmp.eq.f32.partialorder %v1213, %v1216
        %vm1268 = vcmp.eq.f32.partialorder %v1214, %v1218
        %v1269 = vsel %vm1267, %v1211, 128
        %v1270 = vsel %vm1268, %v1211, 128
        %v1271 = vand.u32 %v1269, 65535
        %v1272 = vshra.s32 %v1269, 16
        %v1273 = vcvt.s32.f32 %v1271
        %v1274 = vcvt.s32.f32 %v1272
        %1275 = vmin.xlane.f32.xlu0 %v1274
        %v1276 = vpop.xlane.xlu0 %1275
        %vm1277 = vcmp.eq.f32.partialorder %v1274, %v1276
        %v1278 = vsel %vm1277, %v1273, inf
        %1279 = vmin.xlane.f32.xlu0 %v1278
        %v1280 = vpop.xlane.xlu0 %1279
        %v1281 = vcvt.f32.s32 %v1280
        %v1282 = vcvt.f32.s32 %v1276
        %v1283 = vshll.u32 %v1282, 16
        %v1284 = vadd.s32 %v1283, %v1281
        %v1285 = vand.u32 %v1270, 65535
        %v1286 = vshra.s32 %v1270, 16
        %v1287 = vcvt.s32.f32 %v1285
        %v1288 = vcvt.s32.f32 %v1286
        %1289 = vmin.xlane.f32.xlu0 %v1288
        %v1290 = vpop.xlane.xlu0 %1289
        %vm1291 = vcmp.eq.f32.partialorder %v1288, %v1290
        %v1292 = vsel %vm1291, %v1287, inf
        %1293 = vmin.xlane.f32.xlu0 %v1292
        %v1294 = vpop.xlane.xlu0 %1293
        %v1295 = vcvt.f32.s32 %v1294
        %v1296 = vcvt.f32.s32 %v1290
        %v1297 = vshll.u32 %v1296, 16
        %v1298 = vadd.s32 %v1297, %v1295
        %vm1299 = vcmp.eq.s32.totalorder %v1284, %v1249
        %vm1300 = vcmp.eq.s32.totalorder %v1298, %v1250
        %v1301 = vsel %vm1299, 1, 0
        %v1302 = vsel %vm1300, 1, 0
        %v1303 = vcvt.s32.f32 %v1301
        %v1304 = vcvt.s32.f32 %v1302
        %v1305 = vsel %vm1212, %v1204, 0.0
        %v1306 = vsel %vm1212, %v1207, 0.0
        %1307 = vadd.xlane.f32.xlu0 %v1305
        %v1308 = vpop.xlane.xlu0 %1307
        %1309 = vadd.xlane.f32.xlu0 %v1306
        %v1310 = vpop.xlane.xlu0 %1309
        %v1311 = vmul.f32 %v1308, 0.125
        %v1312 = vmul.f32 %v1310, 0.125
        %v1313 = vsub.f32 %v1233, %v1311
        %v1314 = vsub.f32 %v1234, %v1312
        %s1315 = scalar_select %p363, 1, 0
        %s1316 = scvt.s32.f32 %s1315
        %v1317 = vmul.f32 %v1247, %v1265
        %v1318 = vmul.f32 %v1248, %v1266
        %vm1319 = vcmask 7168
        %v1320 = vsel %vm1319, %v1317, 0.0
        %v1321 = vsel %vm1319, %v1318, 0.0
        %v1322 = vadd.f32 %v1320, %v1321
        %1323 = vadd.xlane.f32.xlu0 %v1322
        %v1324 = vpop.xlane.xlu0 %1323
        %v1325 = vrot.slane %v1324, 4
        %v1326 = vadd.f32 %v1324, %v1325
        %v1327 = vrot.slane %v1326, 2
        %v1328 = vadd.f32 %v1326, %v1327
        %v1329 = vrot.slane %v1328, 1
        %v1330 = vadd.f32 %v1328, %v1329
        %s1331 = vtos %v1330
        %s1332 = smul.f32 %s1331, %s1316
        %v1333 = vmul.f32 %v1247, %v1303
        %v1334 = vmul.f32 %v1248, %v1304
        %v1335 = vsel %vm1319, %v1333, 0.0
        %v1336 = vsel %vm1319, %v1334, 0.0
        %v1337 = vadd.f32 %v1335, %v1336
        %1338 = vadd.xlane.f32.xlu0 %v1337
        %v1339 = vpop.xlane.xlu0 %1338
        %v1340 = vrot.slane %v1339, 4
        %v1341 = vadd.f32 %v1339, %v1340
        %v1342 = vrot.slane %v1341, 2
        %v1343 = vadd.f32 %v1341, %v1342
        %v1344 = vrot.slane %v1343, 1
        %v1345 = vadd.f32 %v1343, %v1344
        %s1346 = vtos %v1345
        %s1347 = smul.f32 %s1346, %s1316
        %v1348 = vmul.f32 %v1247, %v1313
        %v1349 = vmul.f32 %v1248, %v1314
        %v1350 = vsel %vm1319, %v1348, 0.0
        %v1351 = vsel %vm1319, %v1349, 0.0
        %v1352 = vadd.f32 %v1350, %v1351
        %1353 = vadd.xlane.f32.xlu0 %v1352
        %v1354 = vpop.xlane.xlu0 %1353
        %v1355 = vrot.slane %v1354, 4
        %v1356 = vadd.f32 %v1354, %v1355
        %v1357 = vrot.slane %v1356, 2
        %v1358 = vadd.f32 %v1356, %v1357
        %v1359 = vrot.slane %v1358, 1
        %v1360 = vadd.f32 %v1358, %v1359
        %s1361 = vtos %v1360
        %s1362 = ssub.f32 1.0, %s1316
        %s1363 = smul.f32 %s1361, %s1362
        %1364 = vst [vmem:[%s346] sm:$0xff] %v1204
        %1365 = vst [vmem:[%s346 + $0x8] sm:$0xff] %v1207
        %vm1366 = vcmp.eq.s32.totalorder %v1239, 0
        %vm1367 = vcmp.eq.s32.totalorder %v1211, 0
        %vm1368 = vmand %vm1366, %vm1367
        %vm1369 = vcmp.eq.s32.totalorder %v1211, 1
        %vm1370 = vmand %vm1366, %vm1369
        %vm1371 = vcmp.eq.s32.totalorder %v1211, 2
        %vm1372 = vmand %vm1366, %vm1371
        %v1373 = vstv %s1363
        %v1374 = vsel %vm1372, %v1373, 0.0
        %v1375 = vstv %s1347
        %v1376 = vsel %vm1370, %v1375, %v1374
        %v1377 = vstv %s1332
        %v1378 = vsel %vm1368, %v1377, %v1376
        %1379 = vst [vmem:[%s353] sm:$0xff] %v1378
        %s1380 = sand.u32 %s173, 1
        %s1381 = scalar_lea.sflag [#allocation4], %s1380
        %s1382 = sand.u32 %s173, 1
        %s1383 = smul.addr %s1382, 16
        %s1384 = scalar_lea.vmem [#allocation8], %s1383
        %s1385 = sand.u32 %s199, 1
        %s1386 = scalar_lea.sflag [#allocation10], %s1385
        %s1387 = sand.u32 %s199, 1
        %s1388 = smul.addr %s1387, 8
        %s1389 = scalar_lea.vmem [#allocation9], %s1388
        // Predicated region
        $region57: #{tpu_custom_call.1} parent=43 // pred_check
          %p1390 = pneg %p183
        $region58: #{tpu_custom_call.1} parent=43 // pred_check_branch
          %1392 = sbr.rel (%p1390) target = $region60
        $region59: #{tpu_custom_call.1} parent=43 // pred_region
          %s1393 = smul.u32 2, %s29
          %s1395 = ssub.s32 256, 256
          %1396 = vsyncadd %s1381, %s1395
          %s1397 = smul.addr %s1393, 128
          %s1398 = scalar_lea.hbm %s6, %s1397
          %s1399 = sshll.u32 %s1384, 4
          %s1400 = int_to_ptr.vmem [resolvable:$true] %s1399
          %1405 = dma.vmem_to_hbm [thread:$0]  %s1400, 256, %s1398, %s1381, 128, 128, 8
        $region60: #{tpu_custom_call.1} parent=43 // pred_fallthru
          _
        // Predicated region
        $region61: #{tpu_custom_call.1} parent=43 // pred_check
          %p1406 = pneg %p209
        $region62: #{tpu_custom_call.1} parent=43 // pred_check_branch
          %1408 = sbr.rel (%p1406) target = $region64
        $region63: #{tpu_custom_call.1} parent=43 // pred_region
          %s1410 = ssub.s32 128, 128
          %1411 = vsyncadd %s1386, %s1410
          %s1412 = smul.addr %s29, 128
          %s1413 = scalar_lea.hbm %s7, %s1412
          %s1415 = sshll.u32 %s1389, 4
          %s1416 = int_to_ptr.vmem [resolvable:$true] %s1415
          %1418 = dma.vmem_to_hbm [thread:$0]  %s1416, 128, %s1413, %s1386
        $region64: #{tpu_custom_call.1} parent=43 // pred_fallthru
          _
      $region44: #{tpu_custom_call.1} parent=5 // pred_fallthru
        _
      %p1419 = scmp.le.s32.totalorder 2, %s24
      // Predicated region
      $region65: #{tpu_custom_call.1} parent=5 // pred_check
        %p1420 = pneg %p1419
      $region66: #{tpu_custom_call.1} parent=5 // pred_check_branch
        %1422 = sbr.rel (%p1420) target = $region68
      $region67: #{tpu_custom_call.1} parent=5 // pred_region
        %s1423 = ssub.s32 %s24, 2
        // Predicated region
        $region69: #{tpu_custom_call.1} parent=67 // pred_check
          %p1424 = pneg %p189
        $region70: #{tpu_custom_call.1} parent=67 // pred_check_branch
          %1426 = sbr.rel (%p1424) target = $region72
        $region71: #{tpu_custom_call.1} parent=67 // pred_region
          %s1427 = sand.u32 %s174, 1
          %s1428 = scalar_lea.sflag [#allocation4], %s1427
          %s1429 = sand.u32 %s174, 1
          %s1430 = smul.addr %s1429, 16
          %s1431 = scalar_lea.vmem [#allocation8], %s1430
          %1432 = dma.done %s1428, 256
        $region72: #{tpu_custom_call.1} parent=67 // pred_fallthru
          _
        // Predicated region
        $region73: #{tpu_custom_call.1} parent=67 // pred_check
          %p1433 = pneg %p215
        $region74: #{tpu_custom_call.1} parent=67 // pred_check_branch
          %1435 = sbr.rel (%p1433) target = $region76
        $region75: #{tpu_custom_call.1} parent=67 // pred_region
          %s1436 = sand.u32 %s200, 1
          %s1437 = scalar_lea.sflag [#allocation10], %s1436
          %s1438 = sand.u32 %s200, 1
          %s1439 = smul.addr %s1438, 8
          %s1440 = scalar_lea.vmem [#allocation9], %s1439
          %1441 = dma.done %s1437, 128
        $region76: #{tpu_custom_call.1} parent=67 // pred_fallthru
          _
      $region68: #{tpu_custom_call.1} parent=5 // pred_fallthru
        _
    $region6: #{tpu_custom_call.1} parent=1 // loop_footer
      %s28 = sadd.s32 1, %s24
    $region7: #{tpu_custom_call.1} parent=1 // loop_footer_branch
      %23 = sbr.rel target = $region3
    $region8: #{tpu_custom_call.1} parent=1 // loop_exit
      _
    %1442 = vsyncpa [#allocation3], 1
    %s1443 = scalar_lea.sflag [#allocation3], 1
    %1444 = vsyncpa %s1443, 1
    %1445 = vsyncpa [#allocation6], 1
    %1446 = vsyncpa [#allocation4], 1
    %s1447 = scalar_lea.sflag [#allocation4], 1
    %1448 = vsyncpa %s1447, 1
    %1449 = vsyncpa [#allocation10], 1
    %s1450 = scalar_lea.sflag [#allocation10], 1
    %1451 = vsyncpa %s1450, 1

</llo_original>
